<compile_context>
chip_gen: v5e
topology: v5e:2x2
jax: 0.10.0
libtpu: 0.0.40
codegen_flags: <defaults>
</compile_context>

<pallas_src>
import functools

import jax
import jax.numpy as jnp
import numpy as np
from jax.experimental import pallas as pl
from jax.experimental.pallas import tpu as pltpu

P_TILE_MAX = 512    # max rows of the patch matrix processed per grid step
CH = 128            # rows per conv-matmul/pool chunk inside one grid step
OUT_PAD = 128       # lane-dense padded width of the fc3 output


def _ceil_to(x, m):
    return ((x + m - 1) // m) * m


def _vmem_limit_bytes():
    # Size the scoped-VMEM request per generation (v7x has only 64 MiB/TC);
    # the kernel itself needs only a few MiB, so cap the request at 32 MiB.
    try:
        cap = pltpu.get_tpu_info().vmem_capacity_bytes
    except Exception:
        cap = 64 * 1024 * 1024
    return int(min(cap // 2, 32 * 1024 * 1024))


# --------------------------------------------------------------------------
# Fused kernel: conv (im2col matmul) + global max/min pool + fc1/fc2/fc3
# --------------------------------------------------------------------------
def fused_kernel(p_ref, cw_ref, cb_ref, w1_ref, b1_ref, w2_ref, b2_ref,
                 w3_ref, b3_ref, o_ref, acc_ref):
    # p_ref : (TB, TP, KKp) bf16    cw_ref: (KKp, C2) bf16  cb_ref: (1, C2) f32
    # w1_ref: (C2, n1) bf16         w2_ref: (n1, n2) bf16   w3_ref: (n2, 128) bf16
    # o_ref : (TB, 1, 128) f32      acc_ref: (TB, C2) f32 scratch (running max)
    k = pl.program_id(1)

    @pl.when(k == 0)
    def _init():
        acc_ref[...] = jnp.full(acc_ref.shape, -jnp.inf, dtype=acc_ref.dtype)

    TB, TP, _ = p_ref.shape
    C2 = acc_ref.shape[1]
    cw = cw_ref[...]

    # Chunked conv matmuls with the spatial max folded into each chunk, so the
    # f32 conv result never exceeds (CH, C2) = 64 KiB (no big VMEM round trip).
    # Columns [C2/2:] of cw carry -W, so their max is -min (PyTorch's
    # -maxpool(-h) trick); bias and sign are folded in at the epilogue.
    for b in range(TB):                        # static, unrolled
        local = jnp.full((1, C2), -jnp.inf, dtype=jnp.float32)
        for c in range(TP // CH):              # static, unrolled
            rows = p_ref[b, c * CH:(c + 1) * CH, :]              # (CH, KKp)
            conv = jnp.dot(rows, cw, preferred_element_type=jnp.float32)
            local = jnp.maximum(local, jnp.max(conv, axis=0, keepdims=True))
        acc_ref[b:b + 1, :] = jnp.maximum(acc_ref[b:b + 1, :], local)

    @pl.when(k == pl.num_programs(1) - 1)
    def _finalize():
        # feat = [maxpool + b | -(minpool + b) | zero padding]; the sign of the
        # second half is folded into w1, zero-padded channels hit zero w1 rows.
        feat = acc_ref[...] + cb_ref[...]                        # (TB, C2) f32
        h = jnp.dot(feat.astype(jnp.bfloat16), w1_ref[...],
                    preferred_element_type=jnp.float32) + b1_ref[...]
        h = jnp.maximum(h, 0.0)
        # TODO(synk): nn.Dropout is an inference-time identity; omitted.
        h = jnp.dot(h.astype(jnp.bfloat16), w2_ref[...],
                    preferred_element_type=jnp.float32) + b2_ref[...]
        h = jnp.maximum(h, 0.0)
        q = jnp.dot(h.astype(jnp.bfloat16), w3_ref[...],
                    preferred_element_type=jnp.float32) + b3_ref[...]
        o_ref[...] = q[:, None, :]                               # (TB, 1, 128)


def _const_spec(shape):
    zeros = (0,) * len(shape)
    return pl.BlockSpec(shape, lambda b, k, _z=zeros: _z)


def _fused_forward(patches, cw, cb, w1, b1, w2, b2, w3, b3, TB, TP):
    B_pad, P_pad, KKp = patches.shape
    C2 = cw.shape[1]
    n1 = w1.shape[1]
    n2 = w2.shape[1]
    grid = (B_pad // TB, P_pad // TP)

    return pl.pallas_call(
        fused_kernel,
        # Output carries a unit middle dim so its last-two block dims are
        # (1, 128) regardless of TB (keeps the (8,128) block rule satisfied
        # even for TB == 1).
        out_shape=jax.ShapeDtypeStruct((B_pad, 1, OUT_PAD), jnp.float32),
        grid=grid,
        in_specs=[
            pl.BlockSpec((TB, TP, KKp), lambda b, k: (b, k, 0)),
            _const_spec((KKp, C2)),
            _const_spec((1, C2)),
            _const_spec((C2, n1)),
            _const_spec((1, n1)),
            _const_spec((n1, n2)),
            _const_spec((1, n2)),
            _const_spec((n2, OUT_PAD)),
            _const_spec((1, OUT_PAD)),
        ],
        out_specs=pl.BlockSpec((TB, 1, OUT_PAD), lambda b, k: (b, 0, 0)),
        scratch_shapes=[pltpu.VMEM((TB, C2), jnp.float32)],
        compiler_params=pltpu.CompilerParams(
            dimension_semantics=("parallel", "arbitrary"),
            vmem_limit_bytes=_vmem_limit_bytes()),
    )(patches, cw, cb, w1, b1, w2, b2, w3, b3)


# --------------------------------------------------------------------------
# Glue: im2col, parameter packing, full forward
# --------------------------------------------------------------------------
def im2col(x, ker_size):
    # x: (B, 1, H, W) NCHW -> (B, Ho*Wo, ker_size*ker_size), same dtype as x
    B, _, H, W = x.shape
    Ho, Wo = H - ker_size + 1, W - ker_size + 1
    cols = []
    for di in range(ker_size):
        for dj in range(ker_size):
            cols.append(x[:, 0, di:di + Ho, dj:dj + Wo])
    patches = jnp.stack(cols, axis=-1)                 # (B, Ho, Wo, KK)
    return patches.reshape(B, Ho * Wo, ker_size * ker_size)


def init_params(key, ker_size=7, n_kers=50, n1_nodes=800, n2_nodes=800):
    ks = jax.random.split(key, 8)

    def uni(k, shape, fan_in):
        bound = 1.0 / np.sqrt(fan_in)
        return jax.random.uniform(k, shape, jnp.float32, -bound, bound)

    KK = ker_size * ker_size
    return dict(
        # conv weight stored as (KK, n_kers) == transpose of torch (n_kers,1,K,K)
        conv_w=uni(ks[0], (KK, n_kers), KK),
        conv_b=uni(ks[1], (n_kers,), KK),
        # linear weights stored as (in, out) == transpose of torch (out, in)
        w1=uni(ks[2], (2 * n_kers, n1_nodes), 2 * n_kers),
        b1=uni(ks[3], (n1_nodes,), 2 * n_kers),
        w2=uni(ks[4], (n1_nodes, n2_nodes), n1_nodes),
        b2=uni(ks[5], (n2_nodes,), n1_nodes),
        w3=uni(ks[6], (n2_nodes, 1), n2_nodes),
        b3=uni(ks[7], (1,), n2_nodes),
    )


@functools.partial(jax.jit, static_argnames=("ker_size",))
def cnniqanet_forward(x, params, ker_size=7):
    # x: (..., 1, H, W) -> view(-1, 1, H, W)
    x = x.reshape(-1, x.shape[-3], x.shape[-2], x.shape[-1])
    B = x.shape[0]
    KK = ker_size * ker_size
    n_kers = params["conv_w"].shape[1]
    n1 = params["w1"].shape[1]
    n2 = params["w2"].shape[1]

    # ---- pack parameters: lane-dense, [+W | -W] trick, bf16 MXU operands ----
    Cp = _ceil_to(n_kers, 64)          # half-width of the pooled feature
    C2 = 2 * Cp                        # 128 for n_kers=50 (lane-dense)
    KKp = _ceil_to(KK, 64)             # 64 for ker_size=7 (was 128)

    cw = jnp.zeros((KKp, C2), jnp.float32)
    cw = cw.at[:KK, :n_kers].set(params["conv_w"])
    cw = cw.at[:KK, Cp:Cp + n_kers].set(-params["conv_w"])
    cb = jnp.zeros((1, C2), jnp.float32)
    cb = cb.at[0, :n_kers].set(params["conv_b"])
    cb = cb.at[0, Cp:Cp + n_kers].set(-params["conv_b"])

    w1 = jnp.zeros((C2, n1), jnp.float32)
    w1 = w1.at[:n_kers].set(params["w1"][:n_kers])                    # max half
    w1 = w1.at[Cp:Cp + n_kers].set(-params["w1"][n_kers:2 * n_kers])  # min half
    b1 = params["b1"].reshape(1, n1)
    w2 = params["w2"]
    b2 = params["b2"].reshape(1, n2)
    w3 = jnp.zeros((n2, OUT_PAD), jnp.float32).at[:, :1].set(params["w3"])
    b3 = jnp.zeros((1, OUT_PAD), jnp.float32).at[0, 0].set(params["b3"][0])

    cw = cw.astype(jnp.bfloat16)
    w1 = w1.astype(jnp.bfloat16)
    w2 = w2.astype(jnp.bfloat16)
    w3 = w3.astype(jnp.bfloat16)

    # ---- bf16 im2col with K-pad fused into the same producer: the patch
    #      tensor is written to HBM exactly once, already in bf16 ----
    patches = im2col(x.astype(jnp.bfloat16), ker_size)      # (B, P, KK) bf16
    P = patches.shape[1]
    patches = jnp.pad(patches, ((0, 0), (0, 0), (0, KKp - KK)))   # zero-pad K

    # spatial tile: multiple of CH, <= P_TILE_MAX, minimizing edge padding
    TP = P_TILE_MAX
    P_pad = _ceil_to(P, TP)
    t = P_TILE_MAX - CH
    while t >= CH:
        pp = _ceil_to(P, t)
        if pp < P_pad:
            P_pad, TP = pp, t
        t -= CH
    if P_pad > P:                               # edge-replicate: max/min safe
        patches = jnp.pad(patches, ((0, 0), (0, P_pad - P), (0, 0)),
                          mode="edge")

    # batch tile: keep >= 2 'parallel' batch grid steps for B >= 2 (v7x cores)
    TB = min(8, max(1, B // 2))
    B_pad = _ceil_to(B, TB)
    if B_pad > B:
        patches = jnp.pad(patches, ((0, B_pad - B), (0, 0), (0, 0)))

    out = _fused_forward(patches, cw, cb, w1, b1, w2, b2, w3, b3, TB, TP)
    return out[:B, 0, :1]                                         # (B, 1)


def reference_forward(x, params, ker_size=7):
    # Pure-JAX reference matching the PyTorch module (emulates the kernel's
    # bf16-operand / f32-accumulation matmul precision for a tight check).
    x = x.reshape(-1, x.shape[-3], x.shape[-2], x.shape[-1])
    patches = im2col(x, ker_size)
    conv = jnp.einsum("bpk,kc->bpc",
                      patches.astype(jnp.bfloat16),
                      params["conv_w"].astype(jnp.bfloat16),
                      preferred_element_type=jnp.float32)
    conv = conv + params["conv_b"][None, None, :]
    h1 = jnp.max(conv, axis=1)                                     # max-pool
    h2 = jnp.min(conv, axis=1)                                     # -maxpool(-h)
    h = jnp.concatenate([h1, h2], axis=1)
    h = jnp.dot(h.astype(jnp.bfloat16), params["w1"].astype(jnp.bfloat16),
                preferred_element_type=jnp.float32) + params["b1"]
    h = jax.nn.relu(h)
    h = jnp.dot(h.astype(jnp.bfloat16), params["w2"].astype(jnp.bfloat16),
                preferred_element_type=jnp.float32) + params["b2"]
    h = jax.nn.relu(h)
    return jnp.dot(h.astype(jnp.bfloat16), params["w3"].astype(jnp.bfloat16),
                   preferred_element_type=jnp.float32) + params["b3"]


if __name__ == "__main__":
    key = jax.random.PRNGKey(0)
    k_x, k_p = jax.random.split(key)

    # small input consistent with the module: (B=2, C=1, H=32, W=32)
    x = jax.random.normal(k_x, (2, 1, 32, 32), dtype=jnp.float32)
    params = init_params(k_p)

    q = cnniqanet_forward(x, params)
    q = jax.block_until_ready(q)

    q_ref = reference_forward(x, params)
    np.testing.assert_allclose(np.asarray(q), np.asarray(q_ref),
                               rtol=2e-3, atol=2e-3)
    assert q.shape == (2, 1)

    print("KERNEL_OK")
</pallas_src>

<mosaic_0001>
module attributes {stable_mosaic.version = 11 : i64} {
  func.func @fused_kernel(%arg0: i32, %arg1: i32, %arg2: memref<1x384x64xbf16, #tpu.memory_space<vmem>>, %arg3: memref<64x128xbf16, #tpu.memory_space<vmem>>, %arg4: memref<1x128xf32, #tpu.memory_space<vmem>>, %arg5: memref<128x800xbf16, #tpu.memory_space<vmem>>, %arg6: memref<1x800xf32, #tpu.memory_space<vmem>>, %arg7: memref<800x800xbf16, #tpu.memory_space<vmem>>, %arg8: memref<1x800xf32, #tpu.memory_space<vmem>>, %arg9: memref<800x128xbf16, #tpu.memory_space<vmem>>, %arg10: memref<1x128xf32, #tpu.memory_space<vmem>>, %arg11: memref<1x1x128xf32, #tpu.memory_space<vmem>>, %arg12: memref<1x128xf32, #tpu.memory_space<vmem>>) attributes {dimension_semantics = [#tpu.dimension_semantics<parallel>, #tpu.dimension_semantics<arbitrary>], iteration_bounds = array<i64: 2, 2>, scalar_prefetch = 0 : i64, scratch_operands = 1 : i64, tpu.core_type = #tpu.core_type<tc>, window_params = [{transform_indices = @transform_0, window_bounds = array<i64: 1, 384, 64>}, {pipeline_mode = #tpu.pipeline_mode<synchronous>, transform_indices = @transform_1, window_bounds = array<i64: 64, 128>}, {pipeline_mode = #tpu.pipeline_mode<synchronous>, transform_indices = @transform_2, window_bounds = array<i64: 1, 128>}, {pipeline_mode = #tpu.pipeline_mode<synchronous>, transform_indices = @transform_3, window_bounds = array<i64: 128, 800>}, {pipeline_mode = #tpu.pipeline_mode<synchronous>, transform_indices = @transform_4, window_bounds = array<i64: 1, 800>}, {pipeline_mode = #tpu.pipeline_mode<synchronous>, transform_indices = @transform_5, window_bounds = array<i64: 800, 800>}, {pipeline_mode = #tpu.pipeline_mode<synchronous>, transform_indices = @transform_6, window_bounds = array<i64: 1, 800>}, {pipeline_mode = #tpu.pipeline_mode<synchronous>, transform_indices = @transform_7, window_bounds = array<i64: 800, 128>}, {pipeline_mode = #tpu.pipeline_mode<synchronous>, transform_indices = @transform_8, window_bounds = array<i64: 1, 128>}, {transform_indices = @transform_9, window_bounds = array<i64: 1, 1, 128>}]} {
    %c0_i32 = arith.constant 0 : i32
    %0 = arith.cmpi eq, %arg1, %c0_i32 : i32
    %1 = arith.extui %0 : i1 to i32
    %c0_i32_0 = arith.constant 0 : i32
    %2 = arith.cmpi ne, %1, %c0_i32_0 : i32
    scf.if %2 {
      %cst_20 = arith.constant 0xFF800000 : f32
      %29 = vector.broadcast %cst_20 : f32 to vector<1x128xf32>
      %c0_21 = arith.constant 0 : index
      %c0_22 = arith.constant 0 : index
      %30 = vector.load %arg12[%c0_21, %c0_22] : memref<1x128xf32, #tpu.memory_space<vmem>>, vector<1x128xf32>
      tpu.vector_store %arg12[%c0_21, %c0_22], %29 {strides = array<i32>} : memref<1x128xf32, #tpu.memory_space<vmem>>, vector<1x128xf32>,
    } else {
    }
    %c0 = arith.constant 0 : index
    %c0_1 = arith.constant 0 : index
    %3 = vector.load %arg3[%c0, %c0_1] : memref<64x128xbf16, #tpu.memory_space<vmem>>, vector<64x128xbf16>
    %cst = arith.constant 0xFF800000 : f32
    %4 = vector.broadcast %cst : f32 to vector<1x128xf32>
    %c0_2 = arith.constant 0 : index
    %c0_3 = arith.constant 0 : index
    %c0_4 = arith.constant 0 : index
    %5 = vector.load %arg2[%c0_2, %c0_3, %c0_4] : memref<1x384x64xbf16, #tpu.memory_space<vmem>>, vector<1x128x64xbf16>
    %6 = vector.shape_cast %5 : vector<1x128x64xbf16> to vector<128x64xbf16>
    %cst_5 = arith.constant dense<0.000000e+00> : vector<128x128xf32>
    %7 = tpu.matmul %6, %3, %cst_5 {dimension_numbers = #tpu.dot_dimension_numbers<[1], [0], [0], [1], [0, 0, 1, 1], [], []>} : vector<128x64xbf16>, vector<64x128xbf16>, vector<128x128xf32> -> vector<128x128xf32>
    %cst_6 = arith.constant dense<0xFF800000> : vector<128xf32>
    %8 = vector.multi_reduction <maximumf>, %7, %cst_6 [0] : vector<128x128xf32> to vector<128xf32>
    %9 = vector.shape_cast %8 : vector<128xf32> to vector<1x128xf32>
    %10 = arith.maximumf %4, %9 : vector<1x128xf32>
    %c0_7 = arith.constant 0 : index
    %c128 = arith.constant 128 : index
    %c0_8 = arith.constant 0 : index
    %11 = vector.load %arg2[%c0_7, %c128, %c0_8] : memref<1x384x64xbf16, #tpu.memory_space<vmem>>, vector<1x128x64xbf16>
    %12 = vector.shape_cast %11 : vector<1x128x64xbf16> to vector<128x64xbf16>
    %cst_9 = arith.constant dense<0.000000e+00> : vector<128x128xf32>
    %13 = tpu.matmul %12, %3, %cst_9 {dimension_numbers = #tpu.dot_dimension_numbers<[1], [0], [0], [1], [0, 0, 1, 1], [], []>} : vector<128x64xbf16>, vector<64x128xbf16>, vector<128x128xf32> -> vector<128x128xf32>
    %cst_10 = arith.constant dense<0xFF800000> : vector<128xf32>
    %14 = vector.multi_reduction <maximumf>, %13, %cst_10 [0] : vector<128x128xf32> to vector<128xf32>
    %15 = vector.shape_cast %14 : vector<128xf32> to vector<1x128xf32>
    %16 = arith.maximumf %10, %15 : vector<1x128xf32>
    %c0_11 = arith.constant 0 : index
    %c256 = arith.constant 256 : index
    %c0_12 = arith.constant 0 : index
    %17 = vector.load %arg2[%c0_11, %c256, %c0_12] : memref<1x384x64xbf16, #tpu.memory_space<vmem>>, vector<1x128x64xbf16>
    %18 = vector.shape_cast %17 : vector<1x128x64xbf16> to vector<128x64xbf16>
    %cst_13 = arith.constant dense<0.000000e+00> : vector<128x128xf32>
    %19 = tpu.matmul %18, %3, %cst_13 {dimension_numbers = #tpu.dot_dimension_numbers<[1], [0], [0], [1], [0, 0, 1, 1], [], []>} : vector<128x64xbf16>, vector<64x128xbf16>, vector<128x128xf32> -> vector<128x128xf32>
    %cst_14 = arith.constant dense<0xFF800000> : vector<128xf32>
    %20 = vector.multi_reduction <maximumf>, %19, %cst_14 [0] : vector<128x128xf32> to vector<128xf32>
    %21 = vector.shape_cast %20 : vector<128xf32> to vector<1x128xf32>
    %22 = arith.maximumf %16, %21 : vector<1x128xf32>
    %c0_15 = arith.constant 0 : index
    %c0_16 = arith.constant 0 : index
    %23 = vector.load %arg12[%c0_15, %c0_16] : memref<1x128xf32, #tpu.memory_space<vmem>>, vector<1x128xf32>
    %24 = arith.maximumf %23, %22 : vector<1x128xf32>
    %c0_17 = arith.constant 0 : index
    %c0_18 = arith.constant 0 : index
    %25 = vector.load %arg12[%c0_17, %c0_18] : memref<1x128xf32, #tpu.memory_space<vmem>>, vector<1x128xf32>
    tpu.vector_store %arg12[%c0_17, %c0_18], %24 {strides = array<i32>} : memref<1x128xf32, #tpu.memory_space<vmem>>, vector<1x128xf32>,
    %c1_i32 = arith.constant 1 : i32
    %26 = arith.cmpi eq, %arg1, %c1_i32 : i32
    %27 = arith.extui %26 : i1 to i32
    %c0_i32_19 = arith.constant 0 : i32
    %28 = arith.cmpi ne, %27, %c0_i32_19 : i32
    scf.if %28 {
      %c0_20 = arith.constant 0 : index
      %c0_21 = arith.constant 0 : index
      %29 = vector.load %arg12[%c0_20, %c0_21] : memref<1x128xf32, #tpu.memory_space<vmem>>, vector<1x128xf32>
      %c0_22 = arith.constant 0 : index
      %c0_23 = arith.constant 0 : index
      %30 = vector.load %arg4[%c0_22, %c0_23] : memref<1x128xf32, #tpu.memory_space<vmem>>, vector<1x128xf32>
      %31 = arith.addf %29, %30 : vector<1x128xf32>
      %32 = arith.truncf %31 : vector<1x128xf32> to vector<1x128xbf16>
      %c0_24 = arith.constant 0 : index
      %c0_25 = arith.constant 0 : index
      %33 = vector.load %arg5[%c0_24, %c0_25] : memref<128x800xbf16, #tpu.memory_space<vmem>>, vector<128x800xbf16>
      %cst_26 = arith.constant dense<0.000000e+00> : vector<1x800xf32>
      %34 = tpu.matmul %32, %33, %cst_26 {dimension_numbers = #tpu.dot_dimension_numbers<[1], [0], [0], [1], [0, 0, 1, 1], [], []>} : vector<1x128xbf16>, vector<128x800xbf16>, vector<1x800xf32> -> vector<1x800xf32>
      %c0_27 = arith.constant 0 : index
      %c0_28 = arith.constant 0 : index
      %35 = vector.load %arg6[%c0_27, %c0_28] : memref<1x800xf32, #tpu.memory_space<vmem>>, vector<1x800xf32>
      %36 = arith.addf %34, %35 : vector<1x800xf32>
      %cst_29 = arith.constant 0.000000e+00 : f32
      %37 = vector.broadcast %cst_29 : f32 to vector<1x800xf32>
      %38 = arith.maximumf %36, %37 : vector<1x800xf32>
      %39 = arith.truncf %38 : vector<1x800xf32> to vector<1x800xbf16>
      %c0_30 = arith.constant 0 : index
      %c0_31 = arith.constant 0 : index
      %40 = vector.load %arg7[%c0_30, %c0_31] : memref<800x800xbf16, #tpu.memory_space<vmem>>, vector<800x800xbf16>
      %cst_32 = arith.constant dense<0.000000e+00> : vector<1x800xf32>
      %41 = tpu.matmul %39, %40, %cst_32 {dimension_numbers = #tpu.dot_dimension_numbers<[1], [0], [0], [1], [0, 0, 1, 1], [], []>} : vector<1x800xbf16>, vector<800x800xbf16>, vector<1x800xf32> -> vector<1x800xf32>
      %c0_33 = arith.constant 0 : index
      %c0_34 = arith.constant 0 : index
      %42 = vector.load %arg8[%c0_33, %c0_34] : memref<1x800xf32, #tpu.memory_space<vmem>>, vector<1x800xf32>
      %43 = arith.addf %41, %42 : vector<1x800xf32>
      %cst_35 = arith.constant 0.000000e+00 : f32
      %44 = vector.broadcast %cst_35 : f32 to vector<1x800xf32>
      %45 = arith.maximumf %43, %44 : vector<1x800xf32>
      %46 = arith.truncf %45 : vector<1x800xf32> to vector<1x800xbf16>
      %c0_36 = arith.constant 0 : index
      %c0_37 = arith.constant 0 : index
      %47 = vector.load %arg9[%c0_36, %c0_37] : memref<800x128xbf16, #tpu.memory_space<vmem>>, vector<800x128xbf16>
      %cst_38 = arith.constant dense<0.000000e+00> : vector<1x128xf32>
      %48 = tpu.matmul %46, %47, %cst_38 {dimension_numbers = #tpu.dot_dimension_numbers<[1], [0], [0], [1], [0, 0, 1, 1], [], []>} : vector<1x800xbf16>, vector<800x128xbf16>, vector<1x128xf32> -> vector<1x128xf32>
      %c0_39 = arith.constant 0 : index
      %c0_40 = arith.constant 0 : index
      %49 = vector.load %arg10[%c0_39, %c0_40] : memref<1x128xf32, #tpu.memory_space<vmem>>, vector<1x128xf32>
      %50 = arith.addf %48, %49 : vector<1x128xf32>
      %51 = vector.shape_cast %50 : vector<1x128xf32> to vector<1x1x128xf32>
      %c0_41 = arith.constant 0 : index
      %c0_42 = arith.constant 0 : index
      %c0_43 = arith.constant 0 : index
      %52 = vector.load %arg11[%c0_41, %c0_42, %c0_43] : memref<1x1x128xf32, #tpu.memory_space<vmem>>, vector<1x1x128xf32>
      tpu.vector_store %arg11[%c0_41, %c0_42, %c0_43], %51 {strides = array<i32>} : memref<1x1x128xf32, #tpu.memory_space<vmem>>, vector<1x1x128xf32>,
    } else {
    }
    return
  }
  func.func @transform_0(%arg0: i32, %arg1: i32) -> (i32, i32, i32) {
    %c0_i32 = arith.constant 0 : i32
    %c0_i32_0 = arith.constant 0 : i32
    return %arg0, %arg1, %c0_i32 : i32, i32, i32
  }
  func.func @transform_1(%arg0: i32, %arg1: i32) -> (i32, i32) {
    %c0_i32 = arith.constant 0 : i32
    %c0_i32_0 = arith.constant 0 : i32
    %c0_i32_1 = arith.constant 0 : i32
    return %c0_i32, %c0_i32_0 : i32, i32
  }
  func.func @transform_2(%arg0: i32, %arg1: i32) -> (i32, i32) {
    %c0_i32 = arith.constant 0 : i32
    %c0_i32_0 = arith.constant 0 : i32
    %c0_i32_1 = arith.constant 0 : i32
    return %c0_i32, %c0_i32_0 : i32, i32
  }
  func.func @transform_3(%arg0: i32, %arg1: i32) -> (i32, i32) {
    %c0_i32 = arith.constant 0 : i32
    %c0_i32_0 = arith.constant 0 : i32
    %c0_i32_1 = arith.constant 0 : i32
    return %c0_i32, %c0_i32_0 : i32, i32
  }
  func.func @transform_4(%arg0: i32, %arg1: i32) -> (i32, i32) {
    %c0_i32 = arith.constant 0 : i32
    %c0_i32_0 = arith.constant 0 : i32
    %c0_i32_1 = arith.constant 0 : i32
    return %c0_i32, %c0_i32_0 : i32, i32
  }
  func.func @transform_5(%arg0: i32, %arg1: i32) -> (i32, i32) {
    %c0_i32 = arith.constant 0 : i32
    %c0_i32_0 = arith.constant 0 : i32
    %c0_i32_1 = arith.constant 0 : i32
    return %c0_i32, %c0_i32_0 : i32, i32
  }
  func.func @transform_6(%arg0: i32, %arg1: i32) -> (i32, i32) {
    %c0_i32 = arith.constant 0 : i32
    %c0_i32_0 = arith.constant 0 : i32
    %c0_i32_1 = arith.constant 0 : i32
    return %c0_i32, %c0_i32_0 : i32, i32
  }
  func.func @transform_7(%arg0: i32, %arg1: i32) -> (i32, i32) {
    %c0_i32 = arith.constant 0 : i32
    %c0_i32_0 = arith.constant 0 : i32
    %c0_i32_1 = arith.constant 0 : i32
    return %c0_i32, %c0_i32_0 : i32, i32
  }
  func.func @transform_8(%arg0: i32, %arg1: i32) -> (i32, i32) {
    %c0_i32 = arith.constant 0 : i32
    %c0_i32_0 = arith.constant 0 : i32
    %c0_i32_1 = arith.constant 0 : i32
    return %c0_i32, %c0_i32_0 : i32, i32
  }
  func.func @transform_9(%arg0: i32, %arg1: i32) -> (i32, i32, i32) {
    %c0_i32 = arith.constant 0 : i32
    %c0_i32_0 = arith.constant 0 : i32
    %c0_i32_1 = arith.constant 0 : i32
    return %arg0, %c0_i32, %c0_i32_0 : i32, i32, i32
  }
}

</mosaic_0001>

<llo_original>
// kernel: cnniqanet_forward.1
$region0: #{cnniqanet_forward.1}
  #allocation0 [shape = 'u32[]', space=smem, size = 0x4, offset = 0x4, fixed_abs, tag = 'smem constant byte address 0x4 - core index']
  #allocation1 [shape = 'u32[72,128]{1,0:T(1,128)}', space=vmem, size = 0x9000, scoped, tag = 'internal scratch']
  #allocation2 [shape = 'f32[1,128]{1,0:T(1,128)}', space=vmem, size = 0x200, scoped, tag = 'scratch operand']
  %s0 = inlined_call_operand.vmem [shape: bf16[2,768,64], index: 0, kind: input, shape index: {}]
  %s1 = inlined_call_operand.vmem [shape: bf16[64,128], index: 1, kind: input, shape index: {}]
  %s2 = inlined_call_operand.vmem [shape: f32[1,128], index: 2, kind: input, shape index: {}]
  %s3 = inlined_call_operand.vmem [shape: bf16[128,800], index: 3, kind: input, shape index: {}]
  %s4 = inlined_call_operand.vmem [shape: f32[1,800], index: 4, kind: input, shape index: {}]
  %s5 = inlined_call_operand.vmem [shape: bf16[800,800], index: 5, kind: input, shape index: {}]
  %s6 = inlined_call_operand.vmem [shape: f32[1,800], index: 6, kind: input, shape index: {}]
  %s7 = inlined_call_operand.vmem [shape: bf16[800,128], index: 7, kind: input, shape index: {}]
  %s8 = inlined_call_operand.vmem [shape: f32[1,128], index: 8, kind: input, shape index: {}]
  %s9 = inlined_call_operand.vmem [shape: f32[2,1,128], index: 9, kind: output, shape index: {}]
  %s10 = sld [smem:[#allocation0]]
  $region77: #{cnniqanet_forward.1} parent=0
    _
  %s12 = ssub.s32 1, %s10
  %s13 = scalar_select 0, %s12, %s10
  loop: start=0, step=1, limit=6
  $region2: #{cnniqanet_forward.1} parent=0 // loop_pre_header
    _
  $region3: #{cnniqanet_forward.1} parent=0 // loop_header
    %s15 = sphi 0, %s19
    %p16 = scmp.ge.s32.totalorder %s15, 6
    %s22 = sphi 0, %s34
    %s23 = sphi 0, %s30
    %s24 = sphi 0, %s22
    %s25 = sphi 0, %s23
    %s26 = sphi 0, %s24
    %s27 = sphi 0, %s25
    %s39 = sphi 0, %s41
    %s42 = sphi 0, %s39
    %s43 = sphi 0, %s42
    %s59 = sphi 0, %s43
    %s63 = sphi 0, %s63
    %s65 = sphi 0, %s63
    %s66 = sphi 0, %s65
    %s80 = sphi 0, %s66
    %s84 = sphi 0, %s84
    %s86 = sphi 0, %s84
    %s87 = sphi 0, %s86
    %s101 = sphi 0, %s87
    %s105 = sphi 0, %s105
    %s107 = sphi 0, %s105
    %s108 = sphi 0, %s107
    %s122 = sphi 0, %s108
    %s126 = sphi 0, %s126
    %s128 = sphi 0, %s126
    %s129 = sphi 0, %s128
    %s143 = sphi 0, %s129
    %s147 = sphi 0, %s147
    %s149 = sphi 0, %s147
    %s150 = sphi 0, %s149
    %s164 = sphi 0, %s150
    %s168 = sphi 0, %s168
    %s170 = sphi 0, %s168
    %s171 = sphi 0, %s170
    %s185 = sphi 0, %s171
    %s189 = sphi 0, %s189
    %s191 = sphi 0, %s189
    %s192 = sphi 0, %s191
    %s206 = sphi 0, %s192
    %s210 = sphi 0, %s210
    %s212 = sphi 0, %s210
    %s213 = sphi 0, %s212
    %s227 = sphi 0, %s213
    %s233 = sphi 0, %s235
    %s236 = sphi 0, %s233
    %s237 = sphi 0, %s236
    %s253 = sphi 0, %s237
  $region4: #{cnniqanet_forward.1} parent=0 // loop_header_branch
    %18 = sbr.rel (%p16) target = $region8
  $region5: #{cnniqanet_forward.1} parent=0 // loop_body
    %s20 = ssub.s32 %s15, 1
    %s21 = ssub.s32 %s15, 2
    %s28 = sadd.s32 1, %s23
    %p29 = scmp.ge.s32.totalorder %s28, 2
    %s30 = scalar_select %p29, 0, %s28
    %s31 = sadd.s32 1, %s22
    %s32 = scalar_select %p29, %s31, %s22
    %p33 = scmp.ge.s32.totalorder %s32, 2
    %s34 = scalar_select %p33, 0, %s32
    %s35 = ssub.s32 %s22, %s34
    %s36 = ssub.s32 %s23, %s30
    %s37 = sor.u32 %s35, %s36
    %p38 = scmp.eq.s32.totalorder %s37, 0
    %s40 = sadd.s32 %s39, 1
    %s41 = scalar_select %p38, %s39, %s40
    %p44 = pneg %p38
    %p45 = scmp.eq.s32.totalorder %s15, 3
    %p46 = por %p44, %p45
    %p47 = scmp.ne.s32.totalorder %s39, %s42
    %p48 = scmp.eq.s32.totalorder %s15, 0
    %p49 = por %p47, %p48
    %p50 = scmp.ne.s32.totalorder %s39, %s42
    %p51 = scmp.eq.s32.totalorder %s20, 3
    %p52 = por %p50, %p51
    %p53 = scmp.ne.s32.totalorder %s42, %s43
    %p54 = scmp.eq.s32.totalorder %s20, 0
    %p55 = por %p53, %p54
    %p56 = scmp.ne.s32.totalorder %s42, %s43
    %p57 = scmp.eq.s32.totalorder %s21, 3
    %p58 = por %p56, %p57
    %p60 = scmp.ne.s32.totalorder %s43, %s59
    %p61 = scmp.eq.s32.totalorder %s21, 0
    %p62 = por %p60, %p61
    %s64 = sadd.s32 %s63, 1
    %p67 = scmp.eq.s32.totalorder %s15, 3
    %p68 = scmp.ne.s32.totalorder %s63, %s65
    %p69 = scmp.eq.s32.totalorder %s15, 0
    %p70 = por %p68, %p69
    %p71 = scmp.ne.s32.totalorder %s63, %s65
    %p72 = scmp.eq.s32.totalorder %s20, 3
    %p73 = por %p71, %p72
    %p74 = scmp.ne.s32.totalorder %s65, %s66
    %p75 = scmp.eq.s32.totalorder %s20, 0
    %p76 = por %p74, %p75
    %p77 = scmp.ne.s32.totalorder %s65, %s66
    %p78 = scmp.eq.s32.totalorder %s21, 3
    %p79 = por %p77, %p78
    %p81 = scmp.ne.s32.totalorder %s66, %s80
    %p82 = scmp.eq.s32.totalorder %s21, 0
    %p83 = por %p81, %p82
    %s85 = sadd.s32 %s84, 1
    %p88 = scmp.eq.s32.totalorder %s15, 3
    %p89 = scmp.ne.s32.totalorder %s84, %s86
    %p90 = scmp.eq.s32.totalorder %s15, 0
    %p91 = por %p89, %p90
    %p92 = scmp.ne.s32.totalorder %s84, %s86
    %p93 = scmp.eq.s32.totalorder %s20, 3
    %p94 = por %p92, %p93
    %p95 = scmp.ne.s32.totalorder %s86, %s87
    %p96 = scmp.eq.s32.totalorder %s20, 0
    %p97 = por %p95, %p96
    %p98 = scmp.ne.s32.totalorder %s86, %s87
    %p99 = scmp.eq.s32.totalorder %s21, 3
    %p100 = por %p98, %p99
    %p102 = scmp.ne.s32.totalorder %s87, %s101
    %p103 = scmp.eq.s32.totalorder %s21, 0
    %p104 = por %p102, %p103
    %s106 = sadd.s32 %s105, 1
    %p109 = scmp.eq.s32.totalorder %s15, 3
    %p110 = scmp.ne.s32.totalorder %s105, %s107
    %p111 = scmp.eq.s32.totalorder %s15, 0
    %p112 = por %p110, %p111
    %p113 = scmp.ne.s32.totalorder %s105, %s107
    %p114 = scmp.eq.s32.totalorder %s20, 3
    %p115 = por %p113, %p114
    %p116 = scmp.ne.s32.totalorder %s107, %s108
    %p117 = scmp.eq.s32.totalorder %s20, 0
    %p118 = por %p116, %p117
    %p119 = scmp.ne.s32.totalorder %s107, %s108
    %p120 = scmp.eq.s32.totalorder %s21, 3
    %p121 = por %p119, %p120
    %p123 = scmp.ne.s32.totalorder %s108, %s122
    %p124 = scmp.eq.s32.totalorder %s21, 0
    %p125 = por %p123, %p124
    %s127 = sadd.s32 %s126, 1
    %p130 = scmp.eq.s32.totalorder %s15, 3
    %p131 = scmp.ne.s32.totalorder %s126, %s128
    %p132 = scmp.eq.s32.totalorder %s15, 0
    %p133 = por %p131, %p132
    %p134 = scmp.ne.s32.totalorder %s126, %s128
    %p135 = scmp.eq.s32.totalorder %s20, 3
    %p136 = por %p134, %p135
    %p137 = scmp.ne.s32.totalorder %s128, %s129
    %p138 = scmp.eq.s32.totalorder %s20, 0
    %p139 = por %p137, %p138
    %p140 = scmp.ne.s32.totalorder %s128, %s129
    %p141 = scmp.eq.s32.totalorder %s21, 3
    %p142 = por %p140, %p141
    %p144 = scmp.ne.s32.totalorder %s129, %s143
    %p145 = scmp.eq.s32.totalorder %s21, 0
    %p146 = por %p144, %p145
    %s148 = sadd.s32 %s147, 1
    %p151 = scmp.eq.s32.totalorder %s15, 3
    %p152 = scmp.ne.s32.totalorder %s147, %s149
    %p153 = scmp.eq.s32.totalorder %s15, 0
    %p154 = por %p152, %p153
    %p155 = scmp.ne.s32.totalorder %s147, %s149
    %p156 = scmp.eq.s32.totalorder %s20, 3
    %p157 = por %p155, %p156
    %p158 = scmp.ne.s32.totalorder %s149, %s150
    %p159 = scmp.eq.s32.totalorder %s20, 0
    %p160 = por %p158, %p159
    %p161 = scmp.ne.s32.totalorder %s149, %s150
    %p162 = scmp.eq.s32.totalorder %s21, 3
    %p163 = por %p161, %p162
    %p165 = scmp.ne.s32.totalorder %s150, %s164
    %p166 = scmp.eq.s32.totalorder %s21, 0
    %p167 = por %p165, %p166
    %s169 = sadd.s32 %s168, 1
    %p172 = scmp.eq.s32.totalorder %s15, 3
    %p173 = scmp.ne.s32.totalorder %s168, %s170
    %p174 = scmp.eq.s32.totalorder %s15, 0
    %p175 = por %p173, %p174
    %p176 = scmp.ne.s32.totalorder %s168, %s170
    %p177 = scmp.eq.s32.totalorder %s20, 3
    %p178 = por %p176, %p177
    %p179 = scmp.ne.s32.totalorder %s170, %s171
    %p180 = scmp.eq.s32.totalorder %s20, 0
    %p181 = por %p179, %p180
    %p182 = scmp.ne.s32.totalorder %s170, %s171
    %p183 = scmp.eq.s32.totalorder %s21, 3
    %p184 = por %p182, %p183
    %p186 = scmp.ne.s32.totalorder %s171, %s185
    %p187 = scmp.eq.s32.totalorder %s21, 0
    %p188 = por %p186, %p187
    %s190 = sadd.s32 %s189, 1
    %p193 = scmp.eq.s32.totalorder %s15, 3
    %p194 = scmp.ne.s32.totalorder %s189, %s191
    %p195 = scmp.eq.s32.totalorder %s15, 0
    %p196 = por %p194, %p195
    %p197 = scmp.ne.s32.totalorder %s189, %s191
    %p198 = scmp.eq.s32.totalorder %s20, 3
    %p199 = por %p197, %p198
    %p200 = scmp.ne.s32.totalorder %s191, %s192
    %p201 = scmp.eq.s32.totalorder %s20, 0
    %p202 = por %p200, %p201
    %p203 = scmp.ne.s32.totalorder %s191, %s192
    %p204 = scmp.eq.s32.totalorder %s21, 3
    %p205 = por %p203, %p204
    %p207 = scmp.ne.s32.totalorder %s192, %s206
    %p208 = scmp.eq.s32.totalorder %s21, 0
    %p209 = por %p207, %p208
    %s211 = sadd.s32 %s210, 1
    %p214 = scmp.eq.s32.totalorder %s15, 3
    %p215 = scmp.ne.s32.totalorder %s210, %s212
    %p216 = scmp.eq.s32.totalorder %s15, 0
    %p217 = por %p215, %p216
    %p218 = scmp.ne.s32.totalorder %s210, %s212
    %p219 = scmp.eq.s32.totalorder %s20, 3
    %p220 = por %p218, %p219
    %p221 = scmp.ne.s32.totalorder %s212, %s213
    %p222 = scmp.eq.s32.totalorder %s20, 0
    %p223 = por %p221, %p222
    %p224 = scmp.ne.s32.totalorder %s212, %s213
    %p225 = scmp.eq.s32.totalorder %s21, 3
    %p226 = por %p224, %p225
    %p228 = scmp.ne.s32.totalorder %s213, %s227
    %p229 = scmp.eq.s32.totalorder %s21, 0
    %p230 = por %p228, %p229
    %s231 = ssub.s32 %s22, %s34
    %p232 = scmp.eq.s32.totalorder %s231, 0
    %s234 = sadd.s32 %s233, 1
    %s235 = scalar_select %p232, %s233, %s234
    %p238 = pneg %p232
    %p239 = scmp.eq.s32.totalorder %s15, 3
    %p240 = por %p238, %p239
    %p241 = scmp.ne.s32.totalorder %s233, %s236
    %p242 = scmp.eq.s32.totalorder %s15, 0
    %p243 = por %p241, %p242
    %p244 = scmp.ne.s32.totalorder %s233, %s236
    %p245 = scmp.eq.s32.totalorder %s20, 3
    %p246 = por %p244, %p245
    %p247 = scmp.ne.s32.totalorder %s236, %s237
    %p248 = scmp.eq.s32.totalorder %s20, 0
    %p249 = por %p247, %p248
    %p250 = scmp.ne.s32.totalorder %s236, %s237
    %p251 = scmp.eq.s32.totalorder %s21, 3
    %p252 = por %p250, %p251
    %p254 = scmp.ne.s32.totalorder %s237, %s253
    %p255 = scmp.eq.s32.totalorder %s21, 0
    %p256 = por %p254, %p255
    %p257 = scmp.le.s32.totalorder 1, %s15
    %p258 = scmp.lt.s32.totalorder %s15, 5
    %p259 = pnand %p257, %p258
    %p260 = pneg %p259
    // Predicated region
    $region9: #{cnniqanet_forward.1} parent=5 // pred_check
      _
    $region10: #{cnniqanet_forward.1} parent=5 // pred_check_branch
      %262 = sbr.rel (%p259) target = $region12
    $region11: #{cnniqanet_forward.1} parent=5 // pred_region
      %s263 = ssub.s32 %s15, 1
      // Predicated region
      $region13: #{cnniqanet_forward.1} parent=11 // pred_check
        %p264 = pneg %p76
      $region14: #{cnniqanet_forward.1} parent=11 // pred_check_branch
        %266 = sbr.rel (%p264) target = $region16
      $region15: #{cnniqanet_forward.1} parent=11 // pred_region
        _
      $region16: #{cnniqanet_forward.1} parent=11 // pred_fallthru
        _
      // Predicated region
      $region17: #{cnniqanet_forward.1} parent=11 // pred_check
        %p267 = pneg %p97
      $region18: #{cnniqanet_forward.1} parent=11 // pred_check_branch
        %269 = sbr.rel (%p267) target = $region20
      $region19: #{cnniqanet_forward.1} parent=11 // pred_region
        _
      $region20: #{cnniqanet_forward.1} parent=11 // pred_fallthru
        _
      // Predicated region
      $region21: #{cnniqanet_forward.1} parent=11 // pred_check
        %p270 = pneg %p118
      $region22: #{cnniqanet_forward.1} parent=11 // pred_check_branch
        %272 = sbr.rel (%p270) target = $region24
      $region23: #{cnniqanet_forward.1} parent=11 // pred_region
        _
      $region24: #{cnniqanet_forward.1} parent=11 // pred_fallthru
        _
      // Predicated region
      $region25: #{cnniqanet_forward.1} parent=11 // pred_check
        %p273 = pneg %p139
      $region26: #{cnniqanet_forward.1} parent=11 // pred_check_branch
        %275 = sbr.rel (%p273) target = $region28
      $region27: #{cnniqanet_forward.1} parent=11 // pred_region
        _
      $region28: #{cnniqanet_forward.1} parent=11 // pred_fallthru
        _
      // Predicated region
      $region29: #{cnniqanet_forward.1} parent=11 // pred_check
        %p276 = pneg %p160
      $region30: #{cnniqanet_forward.1} parent=11 // pred_check_branch
        %278 = sbr.rel (%p276) target = $region32
      $region31: #{cnniqanet_forward.1} parent=11 // pred_region
        _
      $region32: #{cnniqanet_forward.1} parent=11 // pred_fallthru
        _
      // Predicated region
      $region33: #{cnniqanet_forward.1} parent=11 // pred_check
        %p279 = pneg %p181
      $region34: #{cnniqanet_forward.1} parent=11 // pred_check_branch
        %281 = sbr.rel (%p279) target = $region36
      $region35: #{cnniqanet_forward.1} parent=11 // pred_region
        _
      $region36: #{cnniqanet_forward.1} parent=11 // pred_fallthru
        _
      // Predicated region
      $region37: #{cnniqanet_forward.1} parent=11 // pred_check
        %p282 = pneg %p202
      $region38: #{cnniqanet_forward.1} parent=11 // pred_check_branch
        %284 = sbr.rel (%p282) target = $region40
      $region39: #{cnniqanet_forward.1} parent=11 // pred_region
        _
      $region40: #{cnniqanet_forward.1} parent=11 // pred_fallthru
        _
      // Predicated region
      $region41: #{cnniqanet_forward.1} parent=11 // pred_check
        %p285 = pneg %p223
      $region42: #{cnniqanet_forward.1} parent=11 // pred_check_branch
        %287 = sbr.rel (%p285) target = $region44
      $region43: #{cnniqanet_forward.1} parent=11 // pred_region
        _
      $region44: #{cnniqanet_forward.1} parent=11 // pred_fallthru
        _
    $region12: #{cnniqanet_forward.1} parent=5 // pred_fallthru
      _
    %p288 = scmp.lt.s32.totalorder %s15, 4
    // Predicated region
    $region45: #{cnniqanet_forward.1} parent=5 // pred_check
      %p289 = pneg %p288
    $region46: #{cnniqanet_forward.1} parent=5 // pred_check_branch
      %291 = sbr.rel (%p289) target = $region48
    $region47: #{cnniqanet_forward.1} parent=5 // pred_region
      // Predicated region
      $region49: #{cnniqanet_forward.1} parent=47 // pred_check
        %p292 = pneg %p49
      $region50: #{cnniqanet_forward.1} parent=47 // pred_check_branch
        %294 = sbr.rel (%p292) target = $region52
      $region51: #{cnniqanet_forward.1} parent=47 // pred_region
        %s295 = smul.u32 48, %s23
        %p296 = scmp.lt.s32.totalorder %s22, 1
        %s297 = scalar_select %p296, %s22, 1
        %p298 = scmp.lt.s32.totalorder %s295, 95
        %s299 = scalar_select %p298, %s295, 95
        %s300 = smul.addr %s297, 96
        %s301 = sadd.s32 %s299, %s300
        %s302 = smul.addr %s301, 4
        %s303 = scalar_lea.vmem %s0, %s302
        %s304 = smul.u32 48, %s23
      $region52: #{cnniqanet_forward.1} parent=47 // pred_fallthru
        _
    $region48: #{cnniqanet_forward.1} parent=5 // pred_fallthru
      _
    %p305 = scmp.le.s32.totalorder 1, %s15
    %p306 = scmp.lt.s32.totalorder %s15, 5
    %p307 = pnand %p305, %p306
    %p308 = pneg %p307
    // Predicated region
    $region53: #{cnniqanet_forward.1} parent=5 // pred_check
      _
    $region54: #{cnniqanet_forward.1} parent=5 // pred_check_branch
      %310 = sbr.rel (%p307) target = $region56
    $region55: #{cnniqanet_forward.1} parent=5 // pred_region
      %s311 = ssub.s32 %s15, 1
      %s312 = smul.u32 48, %s25
      %p313 = scmp.lt.s32.totalorder %s24, 1
      %s314 = scalar_select %p313, %s24, 1
      %p315 = scmp.lt.s32.totalorder %s312, 95
      %s316 = scalar_select %p315, %s312, 95
      %s317 = smul.addr %s314, 96
      %s318 = sadd.s32 %s316, %s317
      %s319 = smul.addr %s318, 4
      %s320 = scalar_lea.vmem %s0, %s319
      %p321 = pneg %p55
      %p322 = pneg %p52
      %p323 = pneg %p76
      %p324 = pneg %p73
      %p325 = pneg %p97
      %p326 = pneg %p94
      %p327 = pneg %p118
      %p328 = pneg %p115
      %p329 = pneg %p139
      %p330 = pneg %p136
      %p331 = pneg %p160
      %p332 = pneg %p157
      %p333 = pneg %p181
      %p334 = pneg %p178
      %p335 = pneg %p202
      %p336 = pneg %p199
      %p337 = pneg %p223
      %p338 = pneg %p220
      %p339 = pneg %p249
      %p340 = pneg %p246
      %p341 = scmp.lt.s32.totalorder %s24, 1
      %s342 = scalar_select %p341, %s24, 1
      %s343 = scalar_lea.vmem %s9, %s342
      %s344 = smul.u32 48, %s25
      %p345 = scmp.lt.s32.totalorder %s24, 1
      %s346 = scalar_select %p345, %s24, 1
      %p347 = scmp.lt.s32.totalorder %s344, 95
      %s348 = scalar_select %p347, %s344, 95
      %s349 = smul.addr %s346, 96
      %s350 = sadd.s32 %s348, %s349
      %s351 = smul.addr %s350, 4
      %s352 = scalar_lea.vmem %s0, %s351
      %s353 = smul.u32 48, %s25
      %p354 = scmp.lt.s32.totalorder %s24, 1
      %s355 = scalar_select %p354, %s24, 1
      %s356 = scalar_lea.vmem %s9, %s355
      %p358 = scmp.eq.s32.totalorder %s25, 0
      // Predicated region
      $region57: #{cnniqanet_forward.1} parent=55 // pred_check
        %p359 = pneg %p358
      $region58: #{cnniqanet_forward.1} parent=55 // pred_check_branch
        %361 = sbr.rel (%p359) target = $region60
      $region59: #{cnniqanet_forward.1} parent=55 // pred_region
        %362 = vst [vmem:[#allocation2] sm:$0x1] -inf
      $region60: #{cnniqanet_forward.1} parent=55 // pred_fallthru
        _
      %v363 = vld [vmem:[%s1] sm:$0xf]
      %v364 = vld [vmem:[%s1 + $0x4] sm:$0xf]
      %v365 = vld [vmem:[%s1 + $0x8] sm:$0xf]
      %v366 = vld [vmem:[%s1 + $0xc] sm:$0xf]
      %v367 = vld [vmem:[%s1 + $0x10] sm:$0xf]
      %v368 = vld [vmem:[%s1 + $0x14] sm:$0xf]
      %v369 = vld [vmem:[%s1 + $0x18] sm:$0xf]
      %v370 = vld [vmem:[%s1 + $0x1c] sm:$0xf]
      %v371 = vld [vmem:[%s352] sm:$0xf]
      %v372 = vld [vmem:[%s352 + $0x4] sm:$0xf]
      %v373 = vld [vmem:[%s352 + $0x8] sm:$0xf]
      %v374 = vld [vmem:[%s352 + $0xc] sm:$0xf]
      %v375 = vld [vmem:[%s352 + $0x10] sm:$0xf]
      %v376 = vld [vmem:[%s352 + $0x14] sm:$0xf]
      %v377 = vld [vmem:[%s352 + $0x18] sm:$0xf]
      %v378 = vld [vmem:[%s352 + $0x1c] sm:$0xf]
      %v379 = vld [vmem:[%s352 + $0x20] sm:$0xf]
      %v380 = vld [vmem:[%s352 + $0x24] sm:$0xf]
      %v381 = vld [vmem:[%s352 + $0x28] sm:$0xf]
      %v382 = vld [vmem:[%s352 + $0x2c] sm:$0xf]
      %v383 = vld [vmem:[%s352 + $0x30] sm:$0xf]
      %v384 = vld [vmem:[%s352 + $0x34] sm:$0xf]
      %v385 = vld [vmem:[%s352 + $0x38] sm:$0xf]
      %v386 = vld [vmem:[%s352 + $0x3c] sm:$0xf]
      %v403 = vunpack.c.l.b16 %v371
      %v404 = vunpack.c.l.b16 %v372
      %v405 = vunpack.c.l.b16 %v373
      %v406 = vunpack.c.l.b16 %v374
      %v407 = vunpack.c.l.b16 %v375
      %v408 = vunpack.c.l.b16 %v376
      %v409 = vunpack.c.l.b16 %v377
      %v410 = vunpack.c.l.b16 %v378
      %v411 = vunpack.c.l.b16 %v379
      %v412 = vunpack.c.l.b16 %v380
      %v413 = vunpack.c.l.b16 %v381
      %v414 = vunpack.c.l.b16 %v382
      %v415 = vunpack.c.l.b16 %v383
      %v416 = vunpack.c.l.b16 %v384
      %v417 = vunpack.c.l.b16 %v385
      %v418 = vunpack.c.l.b16 %v386
      %v419 = vpack.c.b16 %v404, %v403
      %v420 = vpack.c.b16 %v406, %v405
      %v421 = vpack.c.b16 %v408, %v407
      %v422 = vpack.c.b16 %v410, %v409
      %v423 = vpack.c.b16 %v412, %v411
      %v424 = vpack.c.b16 %v414, %v413
      %v425 = vpack.c.b16 %v416, %v415
      %v426 = vpack.c.b16 %v418, %v417
      %v435 = vunpack.c.l.b16 %v363
      %v436 = vunpack.c.l.b16 %v364
      %v437 = vunpack.c.l.b16 %v365
      %v438 = vunpack.c.l.b16 %v366
      %v439 = vunpack.c.l.b16 %v367
      %v440 = vunpack.c.l.b16 %v368
      %v441 = vunpack.c.l.b16 %v369
      %v442 = vunpack.c.l.b16 %v370
      %v443 = vpack.c.b16 %v436, %v435
      %v444 = vpack.c.b16 %v438, %v437
      %v445 = vpack.c.b16 %v440, %v439
      %v446 = vpack.c.b16 %v442, %v441
      %vm451 = vcmask 523264
      %v453 = vsel %vm451, %v419, 0
      %v456 = vsel %vm451, %v420, 0
      %v459 = vsel %vm451, %v421, 0
      %v462 = vsel %vm451, %v422, 0
      %v465 = vsel %vm451, %v423, 0
      %v468 = vsel %vm451, %v424, 0
      %v471 = vsel %vm451, %v425, 0
      %v474 = vsel %vm451, %v426, 0
      %476 = vmatpush.bf16.msra.mxu0 0
      %477 = vmatpush.bf16.msra.mxu0 0
      %478 = vmatpush.bf16.msra.mxu0 0
      %479 = vmatpush.bf16.msra.mxu0 0
      %480 = vmatpush.bf16.msra.mxu0 %v446
      %481 = vmatpush.bf16.msra.mxu0 %v445
      %482 = vmatpush.bf16.msra.mxu0 %v444
      %483 = vmatpush.bf16.msra.mxu0 %v443
      %484 = vmatmul.bf16.gmra.mxu0 %v453
      %v485 = vpop.f32.mrf.mxu0
      %v486 = vadd.f32 0.0, %v485
      %v487 = vpop.f32.mrf.mxu0
      %v488 = vadd.f32 0.0, %v487
      %489 = vmatmul.bf16.gmra.mxu0 %v456
      %v490 = vpop.f32.mrf.mxu0
      %v491 = vadd.f32 0.0, %v490
      %v492 = vpop.f32.mrf.mxu0
      %v493 = vadd.f32 0.0, %v492
      %494 = vmatmul.bf16.gmra.mxu0 %v459
      %v495 = vpop.f32.mrf.mxu0
      %v496 = vadd.f32 0.0, %v495
      %v497 = vpop.f32.mrf.mxu0
      %v498 = vadd.f32 0.0, %v497
      %499 = vmatmul.bf16.gmra.mxu0 %v462
      %v500 = vpop.f32.mrf.mxu0
      %v501 = vadd.f32 0.0, %v500
      %v502 = vpop.f32.mrf.mxu0
      %v503 = vadd.f32 0.0, %v502
      %504 = vmatmul.bf16.gmra.mxu0 %v465
      %v505 = vpop.f32.mrf.mxu0
      %v506 = vadd.f32 0.0, %v505
      %v507 = vpop.f32.mrf.mxu0
      %v508 = vadd.f32 0.0, %v507
      %509 = vmatmul.bf16.gmra.mxu0 %v468
      %v510 = vpop.f32.mrf.mxu0
      %v511 = vadd.f32 0.0, %v510
      %v512 = vpop.f32.mrf.mxu0
      %v513 = vadd.f32 0.0, %v512
      %514 = vmatmul.bf16.gmra.mxu0 %v471
      %v515 = vpop.f32.mrf.mxu0
      %v516 = vadd.f32 0.0, %v515
      %v517 = vpop.f32.mrf.mxu0
      %v518 = vadd.f32 0.0, %v517
      %519 = vmatmul.bf16.gmra.mxu0 %v474
      %v520 = vpop.f32.mrf.mxu0
      %v521 = vadd.f32 0.0, %v520
      %v522 = vpop.f32.mrf.mxu0
      %v523 = vadd.f32 0.0, %v522
      %524 = vdwg.mxu0
      %v525 = vmax.f32 %v486, %v496
      %v526 = vmax.f32 %v488, %v498
      %v527 = vmax.f32 %v491, %v501
      %v528 = vmax.f32 %v493, %v503
      %v529 = vmax.f32 %v525, %v506
      %v530 = vmax.f32 %v526, %v508
      %v531 = vmax.f32 %v527, %v511
      %v532 = vmax.f32 %v528, %v513
      %v533 = vmax.f32 %v529, %v516
      %v534 = vmax.f32 %v530, %v518
      %v535 = vmax.f32 %v531, %v521
      %v536 = vmax.f32 %v532, %v523
      %v537 = vmax.f32 %v533, %v534
      %v538 = vmax.f32 %v535, %v536
      %v539 = vmax.f32 %v537, %v538
      %v540 = vrot.slane %v539, 4
      %v541 = vmax.f32 %v539, %v540
      %v542 = vrot.slane %v541, 2
      %v543 = vmax.f32 %v541, %v542
      %v544 = vrot.slane %v543, 1
      %v545 = vmax.f32 %v543, %v544
      %v546 = vld [vmem:[%s352 + $0x40] sm:$0xf]
      %v547 = vld [vmem:[%s352 + $0x44] sm:$0xf]
      %v548 = vld [vmem:[%s352 + $0x48] sm:$0xf]
      %v549 = vld [vmem:[%s352 + $0x4c] sm:$0xf]
      %v550 = vld [vmem:[%s352 + $0x50] sm:$0xf]
      %v551 = vld [vmem:[%s352 + $0x54] sm:$0xf]
      %v552 = vld [vmem:[%s352 + $0x58] sm:$0xf]
      %v553 = vld [vmem:[%s352 + $0x5c] sm:$0xf]
      %v554 = vld [vmem:[%s352 + $0x60] sm:$0xf]
      %v555 = vld [vmem:[%s352 + $0x64] sm:$0xf]
      %v556 = vld [vmem:[%s352 + $0x68] sm:$0xf]
      %v557 = vld [vmem:[%s352 + $0x6c] sm:$0xf]
      %v558 = vld [vmem:[%s352 + $0x70] sm:$0xf]
      %v559 = vld [vmem:[%s352 + $0x74] sm:$0xf]
      %v560 = vld [vmem:[%s352 + $0x78] sm:$0xf]
      %v561 = vld [vmem:[%s352 + $0x7c] sm:$0xf]
      %v578 = vunpack.c.l.b16 %v546
      %v579 = vunpack.c.l.b16 %v547
      %v580 = vunpack.c.l.b16 %v548
      %v581 = vunpack.c.l.b16 %v549
      %v582 = vunpack.c.l.b16 %v550
      %v583 = vunpack.c.l.b16 %v551
      %v584 = vunpack.c.l.b16 %v552
      %v585 = vunpack.c.l.b16 %v553
      %v586 = vunpack.c.l.b16 %v554
      %v587 = vunpack.c.l.b16 %v555
      %v588 = vunpack.c.l.b16 %v556
      %v589 = vunpack.c.l.b16 %v557
      %v590 = vunpack.c.l.b16 %v558
      %v591 = vunpack.c.l.b16 %v559
      %v592 = vunpack.c.l.b16 %v560
      %v593 = vunpack.c.l.b16 %v561
      %v594 = vpack.c.b16 %v579, %v578
      %v595 = vpack.c.b16 %v581, %v580
      %v596 = vpack.c.b16 %v583, %v582
      %v597 = vpack.c.b16 %v585, %v584
      %v598 = vpack.c.b16 %v587, %v586
      %v599 = vpack.c.b16 %v589, %v588
      %v600 = vpack.c.b16 %v591, %v590
      %v601 = vpack.c.b16 %v593, %v592
      %v603 = vsel %vm451, %v594, 0
      %v606 = vsel %vm451, %v595, 0
      %v609 = vsel %vm451, %v596, 0
      %v612 = vsel %vm451, %v597, 0
      %v615 = vsel %vm451, %v598, 0
      %v618 = vsel %vm451, %v599, 0
      %v621 = vsel %vm451, %v600, 0
      %v624 = vsel %vm451, %v601, 0
      %626 = vmatpush.bf16.msra.mxu0 0
      %627 = vmatpush.bf16.msra.mxu0 0
      %628 = vmatpush.bf16.msra.mxu0 0
      %629 = vmatpush.bf16.msra.mxu0 0
      %630 = vmatpush.bf16.msra.mxu0 %v446
      %631 = vmatpush.bf16.msra.mxu0 %v445
      %632 = vmatpush.bf16.msra.mxu0 %v444
      %633 = vmatpush.bf16.msra.mxu0 %v443
      %634 = vmatmul.bf16.gmra.mxu0 %v603
      %v635 = vpop.f32.mrf.mxu0
      %v636 = vadd.f32 0.0, %v635
      %v637 = vpop.f32.mrf.mxu0
      %v638 = vadd.f32 0.0, %v637
      %639 = vmatmul.bf16.gmra.mxu0 %v606
      %v640 = vpop.f32.mrf.mxu0
      %v641 = vadd.f32 0.0, %v640
      %v642 = vpop.f32.mrf.mxu0
      %v643 = vadd.f32 0.0, %v642
      %644 = vmatmul.bf16.gmra.mxu0 %v609
      %v645 = vpop.f32.mrf.mxu0
      %v646 = vadd.f32 0.0, %v645
      %v647 = vpop.f32.mrf.mxu0
      %v648 = vadd.f32 0.0, %v647
      %649 = vmatmul.bf16.gmra.mxu0 %v612
      %v650 = vpop.f32.mrf.mxu0
      %v651 = vadd.f32 0.0, %v650
      %v652 = vpop.f32.mrf.mxu0
      %v653 = vadd.f32 0.0, %v652
      %654 = vmatmul.bf16.gmra.mxu0 %v615
      %v655 = vpop.f32.mrf.mxu0
      %v656 = vadd.f32 0.0, %v655
      %v657 = vpop.f32.mrf.mxu0
      %v658 = vadd.f32 0.0, %v657
      %659 = vmatmul.bf16.gmra.mxu0 %v618
      %v660 = vpop.f32.mrf.mxu0
      %v661 = vadd.f32 0.0, %v660
      %v662 = vpop.f32.mrf.mxu0
      %v663 = vadd.f32 0.0, %v662
      %664 = vmatmul.bf16.gmra.mxu0 %v621
      %v665 = vpop.f32.mrf.mxu0
      %v666 = vadd.f32 0.0, %v665
      %v667 = vpop.f32.mrf.mxu0
      %v668 = vadd.f32 0.0, %v667
      %669 = vmatmul.bf16.gmra.mxu0 %v624
      %v670 = vpop.f32.mrf.mxu0
      %v671 = vadd.f32 0.0, %v670
      %v672 = vpop.f32.mrf.mxu0
      %v673 = vadd.f32 0.0, %v672
      %674 = vdwg.mxu0
      %v675 = vmax.f32 %v636, %v646
      %v676 = vmax.f32 %v638, %v648
      %v677 = vmax.f32 %v641, %v651
      %v678 = vmax.f32 %v643, %v653
      %v679 = vmax.f32 %v675, %v656
      %v680 = vmax.f32 %v676, %v658
      %v681 = vmax.f32 %v677, %v661
      %v682 = vmax.f32 %v678, %v663
      %v683 = vmax.f32 %v679, %v666
      %v684 = vmax.f32 %v680, %v668
      %v685 = vmax.f32 %v681, %v671
      %v686 = vmax.f32 %v682, %v673
      %v687 = vmax.f32 %v683, %v684
      %v688 = vmax.f32 %v685, %v686
      %v689 = vmax.f32 %v687, %v688
      %v690 = vrot.slane %v689, 4
      %v691 = vmax.f32 %v689, %v690
      %v692 = vrot.slane %v691, 2
      %v693 = vmax.f32 %v691, %v692
      %v694 = vrot.slane %v693, 1
      %v695 = vmax.f32 %v693, %v694
      %v696 = vmax.f32 %v545, %v695
      %v697 = vld [vmem:[%s352 + $0x80] sm:$0xf]
      %v698 = vld [vmem:[%s352 + $0x84] sm:$0xf]
      %v699 = vld [vmem:[%s352 + $0x88] sm:$0xf]
      %v700 = vld [vmem:[%s352 + $0x8c] sm:$0xf]
      %v701 = vld [vmem:[%s352 + $0x90] sm:$0xf]
      %v702 = vld [vmem:[%s352 + $0x94] sm:$0xf]
      %v703 = vld [vmem:[%s352 + $0x98] sm:$0xf]
      %v704 = vld [vmem:[%s352 + $0x9c] sm:$0xf]
      %v705 = vld [vmem:[%s352 + $0xa0] sm:$0xf]
      %v706 = vld [vmem:[%s352 + $0xa4] sm:$0xf]
      %v707 = vld [vmem:[%s352 + $0xa8] sm:$0xf]
      %v708 = vld [vmem:[%s352 + $0xac] sm:$0xf]
      %v709 = vld [vmem:[%s352 + $0xb0] sm:$0xf]
      %v710 = vld [vmem:[%s352 + $0xb4] sm:$0xf]
      %v711 = vld [vmem:[%s352 + $0xb8] sm:$0xf]
      %v712 = vld [vmem:[%s352 + $0xbc] sm:$0xf]
      %v729 = vunpack.c.l.b16 %v697
      %v730 = vunpack.c.l.b16 %v698
      %v731 = vunpack.c.l.b16 %v699
      %v732 = vunpack.c.l.b16 %v700
      %v733 = vunpack.c.l.b16 %v701
      %v734 = vunpack.c.l.b16 %v702
      %v735 = vunpack.c.l.b16 %v703
      %v736 = vunpack.c.l.b16 %v704
      %v737 = vunpack.c.l.b16 %v705
      %v738 = vunpack.c.l.b16 %v706
      %v739 = vunpack.c.l.b16 %v707
      %v740 = vunpack.c.l.b16 %v708
      %v741 = vunpack.c.l.b16 %v709
      %v742 = vunpack.c.l.b16 %v710
      %v743 = vunpack.c.l.b16 %v711
      %v744 = vunpack.c.l.b16 %v712
      %v745 = vpack.c.b16 %v730, %v729
      %v746 = vpack.c.b16 %v732, %v731
      %v747 = vpack.c.b16 %v734, %v733
      %v748 = vpack.c.b16 %v736, %v735
      %v749 = vpack.c.b16 %v738, %v737
      %v750 = vpack.c.b16 %v740, %v739
      %v751 = vpack.c.b16 %v742, %v741
      %v752 = vpack.c.b16 %v744, %v743
      %v754 = vsel %vm451, %v745, 0
      %v757 = vsel %vm451, %v746, 0
      %v760 = vsel %vm451, %v747, 0
      %v763 = vsel %vm451, %v748, 0
      %v766 = vsel %vm451, %v749, 0
      %v769 = vsel %vm451, %v750, 0
      %v772 = vsel %vm451, %v751, 0
      %v775 = vsel %vm451, %v752, 0
      %777 = vmatpush.bf16.msra.mxu0 0
      %778 = vmatpush.bf16.msra.mxu0 0
      %779 = vmatpush.bf16.msra.mxu0 0
      %780 = vmatpush.bf16.msra.mxu0 0
      %781 = vmatpush.bf16.msra.mxu0 %v446
      %782 = vmatpush.bf16.msra.mxu0 %v445
      %783 = vmatpush.bf16.msra.mxu0 %v444
      %784 = vmatpush.bf16.msra.mxu0 %v443
      %785 = vmatmul.bf16.gmra.mxu0 %v754
      %v786 = vpop.f32.mrf.mxu0
      %v787 = vadd.f32 0.0, %v786
      %v788 = vpop.f32.mrf.mxu0
      %v789 = vadd.f32 0.0, %v788
      %790 = vmatmul.bf16.gmra.mxu0 %v757
      %v791 = vpop.f32.mrf.mxu0
      %v792 = vadd.f32 0.0, %v791
      %v793 = vpop.f32.mrf.mxu0
      %v794 = vadd.f32 0.0, %v793
      %795 = vmatmul.bf16.gmra.mxu0 %v760
      %v796 = vpop.f32.mrf.mxu0
      %v797 = vadd.f32 0.0, %v796
      %v798 = vpop.f32.mrf.mxu0
      %v799 = vadd.f32 0.0, %v798
      %800 = vmatmul.bf16.gmra.mxu0 %v763
      %v801 = vpop.f32.mrf.mxu0
      %v802 = vadd.f32 0.0, %v801
      %v803 = vpop.f32.mrf.mxu0
      %v804 = vadd.f32 0.0, %v803
      %805 = vmatmul.bf16.gmra.mxu0 %v766
      %v806 = vpop.f32.mrf.mxu0
      %v807 = vadd.f32 0.0, %v806
      %v808 = vpop.f32.mrf.mxu0
      %v809 = vadd.f32 0.0, %v808
      %810 = vmatmul.bf16.gmra.mxu0 %v769
      %v811 = vpop.f32.mrf.mxu0
      %v812 = vadd.f32 0.0, %v811
      %v813 = vpop.f32.mrf.mxu0
      %v814 = vadd.f32 0.0, %v813
      %815 = vmatmul.bf16.gmra.mxu0 %v772
      %v816 = vpop.f32.mrf.mxu0
      %v817 = vadd.f32 0.0, %v816
      %v818 = vpop.f32.mrf.mxu0
      %v819 = vadd.f32 0.0, %v818
      %820 = vmatmul.bf16.gmra.mxu0 %v775
      %v821 = vpop.f32.mrf.mxu0
      %v822 = vadd.f32 0.0, %v821
      %v823 = vpop.f32.mrf.mxu0
      %v824 = vadd.f32 0.0, %v823
      %825 = vdwg.mxu0
      %v826 = vmax.f32 %v787, %v797
      %v827 = vmax.f32 %v789, %v799
      %v828 = vmax.f32 %v792, %v802
      %v829 = vmax.f32 %v794, %v804
      %v830 = vmax.f32 %v826, %v807
      %v831 = vmax.f32 %v827, %v809
      %v832 = vmax.f32 %v828, %v812
      %v833 = vmax.f32 %v829, %v814
      %v834 = vmax.f32 %v830, %v817
      %v835 = vmax.f32 %v831, %v819
      %v836 = vmax.f32 %v832, %v822
      %v837 = vmax.f32 %v833, %v824
      %v838 = vmax.f32 %v834, %v835
      %v839 = vmax.f32 %v836, %v837
      %v840 = vmax.f32 %v838, %v839
      %v841 = vrot.slane %v840, 4
      %v842 = vmax.f32 %v840, %v841
      %v843 = vrot.slane %v842, 2
      %v844 = vmax.f32 %v842, %v843
      %v845 = vrot.slane %v844, 1
      %v846 = vmax.f32 %v844, %v845
      %v847 = vmax.f32 %v696, %v846
      %v848 = vld [vmem:[#allocation2] sm:$0x1]
      %v849 = vmax.f32 %v848, %v847
      %850 = vst [vmem:[#allocation2] sm:$0x1] %v849
      %p851 = scmp.eq.s32.totalorder %s25, 1
      // Predicated region
      $region61: #{cnniqanet_forward.1} parent=55 // pred_check
        %p852 = pneg %p851
      $region62: #{cnniqanet_forward.1} parent=55 // pred_check_branch
        %854 = sbr.rel (%p852) target = $region64
      $region63: #{cnniqanet_forward.1} parent=55 // pred_region
        %v855 = vld [vmem:[#allocation2] sm:$0x1]
        %v856 = vld [vmem:[%s2] sm:$0x1]
        %v857 = vadd.f32 %v855, %v856
        %v858 = vpack.c.bf16 %v857, %v857
        %v859 = vld [vmem:[%s3] sm:$0xff]
        %v860 = vld [vmem:[%s3 + $0x8] sm:$0xff]
        %v861 = vld [vmem:[%s3 + $0x10] sm:$0xff]
        %v862 = vld [vmem:[%s3 + $0x18] sm:$0xf]
        %v863 = vld [vmem:[%s3 + $0x1c] sm:$0xff]
        %v864 = vld [vmem:[%s3 + $0x24] sm:$0xff]
        %v865 = vld [vmem:[%s3 + $0x2c] sm:$0xff]
        %v866 = vld [vmem:[%s3 + $0x34] sm:$0xf]
        %v867 = vld [vmem:[%s3 + $0x38] sm:$0xff]
        %v868 = vld [vmem:[%s3 + $0x40] sm:$0xff]
        %v869 = vld [vmem:[%s3 + $0x48] sm:$0xff]
        %v870 = vld [vmem:[%s3 + $0x50] sm:$0xf]
        %v871 = vld [vmem:[%s3 + $0x54] sm:$0xff]
        %v872 = vld [vmem:[%s3 + $0x5c] sm:$0xff]
        %v873 = vld [vmem:[%s3 + $0x64] sm:$0xff]
        %v874 = vld [vmem:[%s3 + $0x6c] sm:$0xf]
        %v875 = vld [vmem:[%s3 + $0x70] sm:$0xff]
        %v876 = vld [vmem:[%s3 + $0x78] sm:$0xff]
        %v877 = vld [vmem:[%s3 + $0x80] sm:$0xff]
        %v878 = vld [vmem:[%s3 + $0x88] sm:$0xf]
        %v879 = vld [vmem:[%s3 + $0x8c] sm:$0xff]
        %v880 = vld [vmem:[%s3 + $0x94] sm:$0xff]
        %v881 = vld [vmem:[%s3 + $0x9c] sm:$0xff]
        %v882 = vld [vmem:[%s3 + $0xa4] sm:$0xf]
        %v883 = vld [vmem:[%s3 + $0xa8] sm:$0xff]
        %v884 = vld [vmem:[%s3 + $0xb0] sm:$0xff]
        %v885 = vld [vmem:[%s3 + $0xb8] sm:$0xff]
        %v886 = vld [vmem:[%s3 + $0xc0] sm:$0xf]
        %v887 = vld [vmem:[%s3 + $0xc4] sm:$0xff]
        %v888 = vld [vmem:[%s3 + $0xcc] sm:$0xff]
        %v889 = vld [vmem:[%s3 + $0xd4] sm:$0xff]
        %v890 = vld [vmem:[%s3 + $0xdc] sm:$0xf]
        %v891 = vld [vmem:[%s3 + $0xe0] sm:$0xff]
        %v892 = vld [vmem:[%s3 + $0xe8] sm:$0xff]
        %v893 = vld [vmem:[%s3 + $0xf0] sm:$0xff]
        %v894 = vld [vmem:[%s3 + $0xf8] sm:$0xf]
        %v895 = vld [vmem:[%s3 + $0xfc] sm:$0xff]
        %v896 = vld [vmem:[%s3 + $0x104] sm:$0xff]
        %v897 = vld [vmem:[%s3 + $0x10c] sm:$0xff]
        %v898 = vld [vmem:[%s3 + $0x114] sm:$0xf]
        %v899 = vld [vmem:[%s3 + $0x118] sm:$0xff]
        %v900 = vld [vmem:[%s3 + $0x120] sm:$0xff]
        %v901 = vld [vmem:[%s3 + $0x128] sm:$0xff]
        %v902 = vld [vmem:[%s3 + $0x130] sm:$0xf]
        %v903 = vld [vmem:[%s3 + $0x134] sm:$0xff]
        %v904 = vld [vmem:[%s3 + $0x13c] sm:$0xff]
        %v905 = vld [vmem:[%s3 + $0x144] sm:$0xff]
        %v906 = vld [vmem:[%s3 + $0x14c] sm:$0xf]
        %v907 = vld [vmem:[%s3 + $0x150] sm:$0xff]
        %v908 = vld [vmem:[%s3 + $0x158] sm:$0xff]
        %v909 = vld [vmem:[%s3 + $0x160] sm:$0xff]
        %v910 = vld [vmem:[%s3 + $0x168] sm:$0xf]
        %v911 = vld [vmem:[%s3 + $0x16c] sm:$0xff]
        %v912 = vld [vmem:[%s3 + $0x174] sm:$0xff]
        %v913 = vld [vmem:[%s3 + $0x17c] sm:$0xff]
        %v914 = vld [vmem:[%s3 + $0x184] sm:$0xf]
        %v915 = vld [vmem:[%s3 + $0x188] sm:$0xff]
        %v916 = vld [vmem:[%s3 + $0x190] sm:$0xff]
        %v917 = vld [vmem:[%s3 + $0x198] sm:$0xff]
        %v918 = vld [vmem:[%s3 + $0x1a0] sm:$0xf]
        %v919 = vld [vmem:[%s3 + $0x1a4] sm:$0xff]
        %v920 = vld [vmem:[%s3 + $0x1ac] sm:$0xff]
        %v921 = vld [vmem:[%s3 + $0x1b4] sm:$0xff]
        %v922 = vld [vmem:[%s3 + $0x1bc] sm:$0xf]
        %v923 = vld [vmem:[%s4] sm:$0x7f]
        %v988 = vunpack.c.l.b16 %v859
        %v989 = vunpack.c.h.b16 %v859
        %v990 = vunpack.c.l.b16 %v860
        %v991 = vunpack.c.h.b16 %v860
        %v992 = vunpack.c.l.b16 %v861
        %v993 = vunpack.c.h.b16 %v861
        %v994 = vunpack.c.l.b16 %v862
        %v995 = vunpack.c.l.b16 %v863
        %v996 = vunpack.c.h.b16 %v863
        %v997 = vunpack.c.l.b16 %v864
        %v998 = vunpack.c.h.b16 %v864
        %v999 = vunpack.c.l.b16 %v865
        %v1000 = vunpack.c.h.b16 %v865
        %v1001 = vunpack.c.l.b16 %v866
        %v1002 = vunpack.c.l.b16 %v867
        %v1003 = vunpack.c.h.b16 %v867
        %v1004 = vunpack.c.l.b16 %v868
        %v1005 = vunpack.c.h.b16 %v868
        %v1006 = vunpack.c.l.b16 %v869
        %v1007 = vunpack.c.h.b16 %v869
        %v1008 = vunpack.c.l.b16 %v870
        %v1009 = vunpack.c.l.b16 %v871
        %v1010 = vunpack.c.h.b16 %v871
        %v1011 = vunpack.c.l.b16 %v872
        %v1012 = vunpack.c.h.b16 %v872
        %v1013 = vunpack.c.l.b16 %v873
        %v1014 = vunpack.c.h.b16 %v873
        %v1015 = vunpack.c.l.b16 %v874
        %v1016 = vunpack.c.l.b16 %v875
        %v1017 = vunpack.c.h.b16 %v875
        %v1018 = vunpack.c.l.b16 %v876
        %v1019 = vunpack.c.h.b16 %v876
        %v1020 = vunpack.c.l.b16 %v877
        %v1021 = vunpack.c.h.b16 %v877
        %v1022 = vunpack.c.l.b16 %v878
        %v1023 = vunpack.c.l.b16 %v879
        %v1024 = vunpack.c.h.b16 %v879
        %v1025 = vunpack.c.l.b16 %v880
        %v1026 = vunpack.c.h.b16 %v880
        %v1027 = vunpack.c.l.b16 %v881
        %v1028 = vunpack.c.h.b16 %v881
        %v1029 = vunpack.c.l.b16 %v882
        %v1030 = vunpack.c.l.b16 %v883
        %v1031 = vunpack.c.h.b16 %v883
        %v1032 = vunpack.c.l.b16 %v884
        %v1033 = vunpack.c.h.b16 %v884
        %v1034 = vunpack.c.l.b16 %v885
        %v1035 = vunpack.c.h.b16 %v885
        %v1036 = vunpack.c.l.b16 %v886
        %v1037 = vunpack.c.l.b16 %v887
        %v1038 = vunpack.c.h.b16 %v887
        %v1039 = vunpack.c.l.b16 %v888
        %v1040 = vunpack.c.h.b16 %v888
        %v1041 = vunpack.c.l.b16 %v889
        %v1042 = vunpack.c.h.b16 %v889
        %v1043 = vunpack.c.l.b16 %v890
        %v1044 = vunpack.c.l.b16 %v891
        %v1045 = vunpack.c.h.b16 %v891
        %v1046 = vunpack.c.l.b16 %v892
        %v1047 = vunpack.c.h.b16 %v892
        %v1048 = vunpack.c.l.b16 %v893
        %v1049 = vunpack.c.h.b16 %v893
        %v1050 = vunpack.c.l.b16 %v894
        %v1051 = vunpack.c.l.b16 %v895
        %v1052 = vunpack.c.h.b16 %v895
        %v1053 = vunpack.c.l.b16 %v896
        %v1054 = vunpack.c.h.b16 %v896
        %v1055 = vunpack.c.l.b16 %v897
        %v1056 = vunpack.c.h.b16 %v897
        %v1057 = vunpack.c.l.b16 %v898
        %v1058 = vunpack.c.l.b16 %v899
        %v1059 = vunpack.c.h.b16 %v899
        %v1060 = vunpack.c.l.b16 %v900
        %v1061 = vunpack.c.h.b16 %v900
        %v1062 = vunpack.c.l.b16 %v901
        %v1063 = vunpack.c.h.b16 %v901
        %v1064 = vunpack.c.l.b16 %v902
        %v1065 = vunpack.c.l.b16 %v903
        %v1066 = vunpack.c.h.b16 %v903
        %v1067 = vunpack.c.l.b16 %v904
        %v1068 = vunpack.c.h.b16 %v904
        %v1069 = vunpack.c.l.b16 %v905
        %v1070 = vunpack.c.h.b16 %v905
        %v1071 = vunpack.c.l.b16 %v906
        %v1072 = vunpack.c.l.b16 %v907
        %v1073 = vunpack.c.h.b16 %v907
        %v1074 = vunpack.c.l.b16 %v908
        %v1075 = vunpack.c.h.b16 %v908
        %v1076 = vunpack.c.l.b16 %v909
        %v1077 = vunpack.c.h.b16 %v909
        %v1078 = vunpack.c.l.b16 %v910
        %v1079 = vunpack.c.l.b16 %v911
        %v1080 = vunpack.c.h.b16 %v911
        %v1081 = vunpack.c.l.b16 %v912
        %v1082 = vunpack.c.h.b16 %v912
        %v1083 = vunpack.c.l.b16 %v913
        %v1084 = vunpack.c.h.b16 %v913
        %v1085 = vunpack.c.l.b16 %v914
        %v1086 = vunpack.c.l.b16 %v915
        %v1087 = vunpack.c.h.b16 %v915
        %v1088 = vunpack.c.l.b16 %v916
        %v1089 = vunpack.c.h.b16 %v916
        %v1090 = vunpack.c.l.b16 %v917
        %v1091 = vunpack.c.h.b16 %v917
        %v1092 = vunpack.c.l.b16 %v918
        %v1093 = vunpack.c.l.b16 %v919
        %v1094 = vunpack.c.h.b16 %v919
        %v1095 = vunpack.c.l.b16 %v920
        %v1096 = vunpack.c.h.b16 %v920
        %v1097 = vunpack.c.l.b16 %v921
        %v1098 = vunpack.c.h.b16 %v921
        %v1099 = vunpack.c.l.b16 %v922
        %v1100 = vpack.c.b16 %v995, %v988
        %v1101 = vpack.c.b16 %v996, %v989
        %v1102 = vpack.c.b16 %v997, %v990
        %v1103 = vpack.c.b16 %v998, %v991
        %v1104 = vpack.c.b16 %v999, %v992
        %v1105 = vpack.c.b16 %v1000, %v993
        %v1106 = vpack.c.b16 %v1001, %v994
        %v1107 = vpack.c.b16 %v1009, %v1002
        %v1108 = vpack.c.b16 %v1010, %v1003
        %v1109 = vpack.c.b16 %v1011, %v1004
        %v1110 = vpack.c.b16 %v1012, %v1005
        %v1111 = vpack.c.b16 %v1013, %v1006
        %v1112 = vpack.c.b16 %v1014, %v1007
        %v1113 = vpack.c.b16 %v1015, %v1008
        %v1114 = vpack.c.b16 %v1023, %v1016
        %v1115 = vpack.c.b16 %v1024, %v1017
        %v1116 = vpack.c.b16 %v1025, %v1018
        %v1117 = vpack.c.b16 %v1026, %v1019
        %v1118 = vpack.c.b16 %v1027, %v1020
        %v1119 = vpack.c.b16 %v1028, %v1021
        %v1120 = vpack.c.b16 %v1029, %v1022
        %v1121 = vpack.c.b16 %v1037, %v1030
        %v1122 = vpack.c.b16 %v1038, %v1031
        %v1123 = vpack.c.b16 %v1039, %v1032
        %v1124 = vpack.c.b16 %v1040, %v1033
        %v1125 = vpack.c.b16 %v1041, %v1034
        %v1126 = vpack.c.b16 %v1042, %v1035
        %v1127 = vpack.c.b16 %v1043, %v1036
        %v1128 = vpack.c.b16 %v1051, %v1044
        %v1129 = vpack.c.b16 %v1052, %v1045
        %v1130 = vpack.c.b16 %v1053, %v1046
        %v1131 = vpack.c.b16 %v1054, %v1047
        %v1132 = vpack.c.b16 %v1055, %v1048
        %v1133 = vpack.c.b16 %v1056, %v1049
        %v1134 = vpack.c.b16 %v1057, %v1050
        %v1135 = vpack.c.b16 %v1065, %v1058
        %v1136 = vpack.c.b16 %v1066, %v1059
        %v1137 = vpack.c.b16 %v1067, %v1060
        %v1138 = vpack.c.b16 %v1068, %v1061
        %v1139 = vpack.c.b16 %v1069, %v1062
        %v1140 = vpack.c.b16 %v1070, %v1063
        %v1141 = vpack.c.b16 %v1071, %v1064
        %v1142 = vpack.c.b16 %v1079, %v1072
        %v1143 = vpack.c.b16 %v1080, %v1073
        %v1144 = vpack.c.b16 %v1081, %v1074
        %v1145 = vpack.c.b16 %v1082, %v1075
        %v1146 = vpack.c.b16 %v1083, %v1076
        %v1147 = vpack.c.b16 %v1084, %v1077
        %v1148 = vpack.c.b16 %v1085, %v1078
        %v1149 = vpack.c.b16 %v1093, %v1086
        %v1150 = vpack.c.b16 %v1094, %v1087
        %v1151 = vpack.c.b16 %v1095, %v1088
        %v1152 = vpack.c.b16 %v1096, %v1089
        %v1153 = vpack.c.b16 %v1097, %v1090
        %v1154 = vpack.c.b16 %v1098, %v1091
        %v1155 = vpack.c.b16 %v1099, %v1092
        %v1213 = vperm.slane %v923, 0
        %v1214 = vperm.slane %v923, 1
        %v1215 = vperm.slane %v923, 2
        %v1216 = vperm.slane %v923, 3
        %v1217 = vperm.slane %v923, 4
        %v1218 = vperm.slane %v923, 5
        %v1219 = vperm.slane %v923, 6
        %1227 = vmatpush.bf16.msra.mxu0 %v1149
        %1228 = vmatpush.bf16.msra.mxu0 %v1142
        %1229 = vmatpush.bf16.msra.mxu0 %v1135
        %1230 = vmatpush.bf16.msra.mxu0 %v1128
        %1231 = vmatpush.bf16.msra.mxu0 %v1121
        %1232 = vmatpush.bf16.msra.mxu0 %v1114
        %1233 = vmatpush.bf16.msra.mxu0 %v1107
        %1234 = vmatpush.bf16.msra.mxu0 %v1100
        %1235 = vmatmul.bf16.gmra.mxu0 %v858
        %v1236 = vpop.f32.mrf.mxu0
        %v1237 = vadd.f32 %v1213, %v1236
        %v1238 = vpop.f32.mrf.mxu0
        %1239 = vdwg.mxu0
        %1240 = vmatpush.bf16.msra.mxu0 %v1150
        %1241 = vmatpush.bf16.msra.mxu0 %v1143
        %1242 = vmatpush.bf16.msra.mxu0 %v1136
        %1243 = vmatpush.bf16.msra.mxu0 %v1129
        %1244 = vmatpush.bf16.msra.mxu0 %v1122
        %1245 = vmatpush.bf16.msra.mxu0 %v1115
        %1246 = vmatpush.bf16.msra.mxu0 %v1108
        %1247 = vmatpush.bf16.msra.mxu0 %v1101
        %1248 = vmatmul.bf16.gmra.mxu0 %v858
        %v1249 = vpop.f32.mrf.mxu0
        %v1250 = vadd.f32 %v1214, %v1249
        %v1251 = vpop.f32.mrf.mxu0
        %1252 = vdwg.mxu0
        %1253 = vmatpush.bf16.msra.mxu0 %v1151
        %1254 = vmatpush.bf16.msra.mxu0 %v1144
        %1255 = vmatpush.bf16.msra.mxu0 %v1137
        %1256 = vmatpush.bf16.msra.mxu0 %v1130
        %1257 = vmatpush.bf16.msra.mxu0 %v1123
        %1258 = vmatpush.bf16.msra.mxu0 %v1116
        %1259 = vmatpush.bf16.msra.mxu0 %v1109
        %1260 = vmatpush.bf16.msra.mxu0 %v1102
        %1261 = vmatmul.bf16.gmra.mxu0 %v858
        %v1262 = vpop.f32.mrf.mxu0
        %v1263 = vadd.f32 %v1215, %v1262
        %v1264 = vpop.f32.mrf.mxu0
        %1265 = vdwg.mxu0
        %1266 = vmatpush.bf16.msra.mxu0 %v1152
        %1267 = vmatpush.bf16.msra.mxu0 %v1145
        %1268 = vmatpush.bf16.msra.mxu0 %v1138
        %1269 = vmatpush.bf16.msra.mxu0 %v1131
        %1270 = vmatpush.bf16.msra.mxu0 %v1124
        %1271 = vmatpush.bf16.msra.mxu0 %v1117
        %1272 = vmatpush.bf16.msra.mxu0 %v1110
        %1273 = vmatpush.bf16.msra.mxu0 %v1103
        %1274 = vmatmul.bf16.gmra.mxu0 %v858
        %v1275 = vpop.f32.mrf.mxu0
        %v1276 = vadd.f32 %v1216, %v1275
        %v1277 = vpop.f32.mrf.mxu0
        %1278 = vdwg.mxu0
        %1279 = vmatpush.bf16.msra.mxu0 %v1153
        %1280 = vmatpush.bf16.msra.mxu0 %v1146
        %1281 = vmatpush.bf16.msra.mxu0 %v1139
        %1282 = vmatpush.bf16.msra.mxu0 %v1132
        %1283 = vmatpush.bf16.msra.mxu0 %v1125
        %1284 = vmatpush.bf16.msra.mxu0 %v1118
        %1285 = vmatpush.bf16.msra.mxu0 %v1111
        %1286 = vmatpush.bf16.msra.mxu0 %v1104
        %1287 = vmatmul.bf16.gmra.mxu0 %v858
        %v1288 = vpop.f32.mrf.mxu0
        %v1289 = vadd.f32 %v1217, %v1288
        %v1290 = vpop.f32.mrf.mxu0
        %1291 = vdwg.mxu0
        %1292 = vmatpush.bf16.msra.mxu0 %v1154
        %1293 = vmatpush.bf16.msra.mxu0 %v1147
        %1294 = vmatpush.bf16.msra.mxu0 %v1140
        %1295 = vmatpush.bf16.msra.mxu0 %v1133
        %1296 = vmatpush.bf16.msra.mxu0 %v1126
        %1297 = vmatpush.bf16.msra.mxu0 %v1119
        %1298 = vmatpush.bf16.msra.mxu0 %v1112
        %1299 = vmatpush.bf16.msra.mxu0 %v1105
        %1300 = vmatmul.bf16.gmra.mxu0 %v858
        %v1301 = vpop.f32.mrf.mxu0
        %v1302 = vadd.f32 %v1218, %v1301
        %v1303 = vpop.f32.mrf.mxu0
        %1304 = vdwg.mxu0
        %1305 = vmatpush.bf16.msra.mxu0 %v1155
        %1306 = vmatpush.bf16.msra.mxu0 %v1148
        %1307 = vmatpush.bf16.msra.mxu0 %v1141
        %1308 = vmatpush.bf16.msra.mxu0 %v1134
        %1309 = vmatpush.bf16.msra.mxu0 %v1127
        %1310 = vmatpush.bf16.msra.mxu0 %v1120
        %1311 = vmatpush.bf16.msra.mxu0 %v1113
        %1312 = vmatpush.bf16.msra.mxu0 %v1106
        %1313 = vmatmul.bf16.gmra.mxu0 %v858
        %v1314 = vpop.f32.mrf.mxu0
        %v1315 = vadd.f32 %v1219, %v1314
        %v1316 = vpop.f32.mrf.mxu0
        %1317 = vdwg.mxu0
        %v1318 = vmax.f32 %v1237, 0.0
        %v1319 = vmax.f32 %v1250, 0.0
        %v1320 = vmax.f32 %v1263, 0.0
        %v1321 = vmax.f32 %v1276, 0.0
        %v1322 = vmax.f32 %v1289, 0.0
        %v1323 = vmax.f32 %v1302, 0.0
        %v1324 = vmax.f32 %v1315, 0.0
        %v1325 = vpack.c.bf16 %v1318, %v1318
        %v1326 = vpack.c.bf16 %v1319, %v1319
        %v1327 = vpack.c.bf16 %v1320, %v1320
        %v1328 = vpack.c.bf16 %v1321, %v1321
        %v1329 = vpack.c.bf16 %v1322, %v1322
        %v1330 = vpack.c.bf16 %v1323, %v1323
        %v1331 = vpack.c.bf16 %v1324, %v1324
        %v1332 = vld [vmem:[%s5] sm:$0xff]
        %v1333 = vld [vmem:[%s5 + $0x8] sm:$0xff]
        %v1334 = vld [vmem:[%s5 + $0x10] sm:$0xff]
        %v1335 = vld [vmem:[%s5 + $0x18] sm:$0xf]
        %v1336 = vld [vmem:[%s5 + $0x1c] sm:$0xff]
        %v1337 = vld [vmem:[%s5 + $0x24] sm:$0xff]
        %v1338 = vld [vmem:[%s5 + $0x2c] sm:$0xff]
        %v1339 = vld [vmem:[%s5 + $0x34] sm:$0xf]
        %v1340 = vld [vmem:[%s5 + $0x38] sm:$0xff]
        %v1341 = vld [vmem:[%s5 + $0x40] sm:$0xff]
        %v1342 = vld [vmem:[%s5 + $0x48] sm:$0xff]
        %v1343 = vld [vmem:[%s5 + $0x50] sm:$0xf]
        %v1344 = vld [vmem:[%s5 + $0x54] sm:$0xff]
        %v1345 = vld [vmem:[%s5 + $0x5c] sm:$0xff]
        %v1346 = vld [vmem:[%s5 + $0x64] sm:$0xff]
        %v1347 = vld [vmem:[%s5 + $0x6c] sm:$0xf]
        %v1348 = vld [vmem:[%s5 + $0x70] sm:$0xff]
        %v1349 = vld [vmem:[%s5 + $0x78] sm:$0xff]
        %v1350 = vld [vmem:[%s5 + $0x80] sm:$0xff]
        %v1351 = vld [vmem:[%s5 + $0x88] sm:$0xf]
        %v1352 = vld [vmem:[%s5 + $0x8c] sm:$0xff]
        %v1353 = vld [vmem:[%s5 + $0x94] sm:$0xff]
        %v1354 = vld [vmem:[%s5 + $0x9c] sm:$0xff]
        %v1355 = vld [vmem:[%s5 + $0xa4] sm:$0xf]
        %v1356 = vld [vmem:[%s5 + $0xa8] sm:$0xff]
        %v1357 = vld [vmem:[%s5 + $0xb0] sm:$0xff]
        %v1358 = vld [vmem:[%s5 + $0xb8] sm:$0xff]
        %v1359 = vld [vmem:[%s5 + $0xc0] sm:$0xf]
        %v1360 = vld [vmem:[%s5 + $0xc4] sm:$0xff]
        %v1361 = vld [vmem:[%s5 + $0xcc] sm:$0xff]
        %v1362 = vld [vmem:[%s5 + $0xd4] sm:$0xff]
        %v1363 = vld [vmem:[%s5 + $0xdc] sm:$0xf]
        %v1364 = vld [vmem:[%s5 + $0xe0] sm:$0xff]
        %v1365 = vld [vmem:[%s5 + $0xe8] sm:$0xff]
        %v1366 = vld [vmem:[%s5 + $0xf0] sm:$0xff]
        %v1367 = vld [vmem:[%s5 + $0xf8] sm:$0xf]
        %v1368 = vld [vmem:[%s5 + $0xfc] sm:$0xff]
        %v1369 = vld [vmem:[%s5 + $0x104] sm:$0xff]
        %v1370 = vld [vmem:[%s5 + $0x10c] sm:$0xff]
        %v1371 = vld [vmem:[%s5 + $0x114] sm:$0xf]
        %v1372 = vld [vmem:[%s5 + $0x118] sm:$0xff]
        %v1373 = vld [vmem:[%s5 + $0x120] sm:$0xff]
        %v1374 = vld [vmem:[%s5 + $0x128] sm:$0xff]
        %v1375 = vld [vmem:[%s5 + $0x130] sm:$0xf]
        %v1376 = vld [vmem:[%s5 + $0x134] sm:$0xff]
        %v1377 = vld [vmem:[%s5 + $0x13c] sm:$0xff]
        %v1378 = vld [vmem:[%s5 + $0x144] sm:$0xff]
        %v1379 = vld [vmem:[%s5 + $0x14c] sm:$0xf]
        %v1380 = vld [vmem:[%s5 + $0x150] sm:$0xff]
        %v1381 = vld [vmem:[%s5 + $0x158] sm:$0xff]
        %v1382 = vld [vmem:[%s5 + $0x160] sm:$0xff]
        %v1383 = vld [vmem:[%s5 + $0x168] sm:$0xf]
        %v1384 = vld [vmem:[%s5 + $0x16c] sm:$0xff]
        %v1385 = vld [vmem:[%s5 + $0x174] sm:$0xff]
        %v1386 = vld [vmem:[%s5 + $0x17c] sm:$0xff]
        %v1387 = vld [vmem:[%s5 + $0x184] sm:$0xf]
        %v1388 = vld [vmem:[%s5 + $0x188] sm:$0xff]
        %v1389 = vld [vmem:[%s5 + $0x190] sm:$0xff]
        %v1390 = vld [vmem:[%s5 + $0x198] sm:$0xff]
        %v1391 = vld [vmem:[%s5 + $0x1a0] sm:$0xf]
        %v1392 = vld [vmem:[%s5 + $0x1a4] sm:$0xff]
        %v1393 = vld [vmem:[%s5 + $0x1ac] sm:$0xff]
        %v1394 = vld [vmem:[%s5 + $0x1b4] sm:$0xff]
        %v1395 = vld [vmem:[%s5 + $0x1bc] sm:$0xf]
        %v1396 = vld [vmem:[%s5 + $0x1c0] sm:$0xff]
        %v1397 = vld [vmem:[%s5 + $0x1c8] sm:$0xff]
        %v1398 = vld [vmem:[%s5 + $0x1d0] sm:$0xff]
        %v1399 = vld [vmem:[%s5 + $0x1d8] sm:$0xf]
        %v1400 = vld [vmem:[%s5 + $0x1dc] sm:$0xff]
        %v1401 = vld [vmem:[%s5 + $0x1e4] sm:$0xff]
        %v1402 = vld [vmem:[%s5 + $0x1ec] sm:$0xff]
        %v1403 = vld [vmem:[%s5 + $0x1f4] sm:$0xf]
        %v1404 = vld [vmem:[%s5 + $0x1f8] sm:$0xff]
        %v1405 = vld [vmem:[%s5 + $0x200] sm:$0xff]
        %v1406 = vld [vmem:[%s5 + $0x208] sm:$0xff]
        %v1407 = vld [vmem:[%s5 + $0x210] sm:$0xf]
        %v1408 = vld [vmem:[%s5 + $0x214] sm:$0xff]
        %v1409 = vld [vmem:[%s5 + $0x21c] sm:$0xff]
        %v1410 = vld [vmem:[%s5 + $0x224] sm:$0xff]
        %v1411 = vld [vmem:[%s5 + $0x22c] sm:$0xf]
        %v1412 = vld [vmem:[%s5 + $0x230] sm:$0xff]
        %v1413 = vld [vmem:[%s5 + $0x238] sm:$0xff]
        %v1414 = vld [vmem:[%s5 + $0x240] sm:$0xff]
        %v1415 = vld [vmem:[%s5 + $0x248] sm:$0xf]
        %v1416 = vld [vmem:[%s5 + $0x24c] sm:$0xff]
        %v1417 = vld [vmem:[%s5 + $0x254] sm:$0xff]
        %v1418 = vld [vmem:[%s5 + $0x25c] sm:$0xff]
        %v1419 = vld [vmem:[%s5 + $0x264] sm:$0xf]
        %v1420 = vld [vmem:[%s5 + $0x268] sm:$0xff]
        %v1421 = vld [vmem:[%s5 + $0x270] sm:$0xff]
        %v1422 = vld [vmem:[%s5 + $0x278] sm:$0xff]
        %v1423 = vld [vmem:[%s5 + $0x280] sm:$0xf]
        %v1424 = vld [vmem:[%s5 + $0x284] sm:$0xff]
        %v1425 = vld [vmem:[%s5 + $0x28c] sm:$0xff]
        %v1426 = vld [vmem:[%s5 + $0x294] sm:$0xff]
        %v1427 = vld [vmem:[%s5 + $0x29c] sm:$0xf]
        %v1428 = vld [vmem:[%s5 + $0x2a0] sm:$0xff]
        %v1429 = vld [vmem:[%s5 + $0x2a8] sm:$0xff]
        %v1430 = vld [vmem:[%s5 + $0x2b0] sm:$0xff]
        %v1431 = vld [vmem:[%s5 + $0x2b8] sm:$0xf]
        %v1432 = vld [vmem:[%s5 + $0x2bc] sm:$0xff]
        %v1433 = vld [vmem:[%s5 + $0x2c4] sm:$0xff]
        %v1434 = vld [vmem:[%s5 + $0x2cc] sm:$0xff]
        %v1435 = vld [vmem:[%s5 + $0x2d4] sm:$0xf]
        %v1436 = vld [vmem:[%s5 + $0x2d8] sm:$0xff]
        %v1437 = vld [vmem:[%s5 + $0x2e0] sm:$0xff]
        %v1438 = vld [vmem:[%s5 + $0x2e8] sm:$0xff]
        %v1439 = vld [vmem:[%s5 + $0x2f0] sm:$0xf]
        %v1440 = vld [vmem:[%s5 + $0x2f4] sm:$0xff]
        %v1441 = vld [vmem:[%s5 + $0x2fc] sm:$0xff]
        %v1442 = vld [vmem:[%s5 + $0x304] sm:$0xff]
        %v1443 = vld [vmem:[%s5 + $0x30c] sm:$0xf]
        %v1444 = vld [vmem:[%s5 + $0x310] sm:$0xff]
        %v1445 = vld [vmem:[%s5 + $0x318] sm:$0xff]
        %v1446 = vld [vmem:[%s5 + $0x320] sm:$0xff]
        %v1447 = vld [vmem:[%s5 + $0x328] sm:$0xf]
        %v1448 = vld [vmem:[%s5 + $0x32c] sm:$0xff]
        %v1449 = vld [vmem:[%s5 + $0x334] sm:$0xff]
        %v1450 = vld [vmem:[%s5 + $0x33c] sm:$0xff]
        %v1451 = vld [vmem:[%s5 + $0x344] sm:$0xf]
        %v1452 = vld [vmem:[%s5 + $0x348] sm:$0xff]
        %v1453 = vld [vmem:[%s5 + $0x350] sm:$0xff]
        %v1454 = vld [vmem:[%s5 + $0x358] sm:$0xff]
        %v1455 = vld [vmem:[%s5 + $0x360] sm:$0xf]
        %v1456 = vld [vmem:[%s5 + $0x364] sm:$0xff]
        %v1457 = vld [vmem:[%s5 + $0x36c] sm:$0xff]
        %v1458 = vld [vmem:[%s5 + $0x374] sm:$0xff]
        %v1459 = vld [vmem:[%s5 + $0x37c] sm:$0xf]
        %v1460 = vld [vmem:[%s5 + $0x380] sm:$0xff]
        %v1461 = vld [vmem:[%s5 + $0x388] sm:$0xff]
        %v1462 = vld [vmem:[%s5 + $0x390] sm:$0xff]
        %v1463 = vld [vmem:[%s5 + $0x398] sm:$0xf]
        %v1464 = vld [vmem:[%s5 + $0x39c] sm:$0xff]
        %v1465 = vld [vmem:[%s5 + $0x3a4] sm:$0xff]
        %v1466 = vld [vmem:[%s5 + $0x3ac] sm:$0xff]
        %v1467 = vld [vmem:[%s5 + $0x3b4] sm:$0xf]
        %v1468 = vld [vmem:[%s5 + $0x3b8] sm:$0xff]
        %v1469 = vld [vmem:[%s5 + $0x3c0] sm:$0xff]
        %v1470 = vld [vmem:[%s5 + $0x3c8] sm:$0xff]
        %v1471 = vld [vmem:[%s5 + $0x3d0] sm:$0xf]
        %v1472 = vld [vmem:[%s5 + $0x3d4] sm:$0xff]
        %v1473 = vld [vmem:[%s5 + $0x3dc] sm:$0xff]
        %v1474 = vld [vmem:[%s5 + $0x3e4] sm:$0xff]
        %v1475 = vld [vmem:[%s5 + $0x3ec] sm:$0xf]
        %v1476 = vld [vmem:[%s5 + $0x3f0] sm:$0xff]
        %v1477 = vld [vmem:[%s5 + $0x3f8] sm:$0xff]
        %v1478 = vld [vmem:[%s5 + $0x400] sm:$0xff]
        %v1479 = vld [vmem:[%s5 + $0x408] sm:$0xf]
        %v1480 = vld [vmem:[%s5 + $0x40c] sm:$0xff]
        %v1481 = vld [vmem:[%s5 + $0x414] sm:$0xff]
        %v1482 = vld [vmem:[%s5 + $0x41c] sm:$0xff]
        %v1483 = vld [vmem:[%s5 + $0x424] sm:$0xf]
        %v1484 = vld [vmem:[%s5 + $0x428] sm:$0xff]
        %v1485 = vld [vmem:[%s5 + $0x430] sm:$0xff]
        %v1486 = vld [vmem:[%s5 + $0x438] sm:$0xff]
        %v1487 = vld [vmem:[%s5 + $0x440] sm:$0xf]
        %v1488 = vld [vmem:[%s5 + $0x444] sm:$0xff]
        %v1489 = vld [vmem:[%s5 + $0x44c] sm:$0xff]
        %v1490 = vld [vmem:[%s5 + $0x454] sm:$0xff]
        %v1491 = vld [vmem:[%s5 + $0x45c] sm:$0xf]
        %v1492 = vld [vmem:[%s5 + $0x460] sm:$0xff]
        %v1493 = vld [vmem:[%s5 + $0x468] sm:$0xff]
        %v1494 = vld [vmem:[%s5 + $0x470] sm:$0xff]
        %v1495 = vld [vmem:[%s5 + $0x478] sm:$0xf]
        %v1496 = vld [vmem:[%s5 + $0x47c] sm:$0xff]
        %v1497 = vld [vmem:[%s5 + $0x484] sm:$0xff]
        %v1498 = vld [vmem:[%s5 + $0x48c] sm:$0xff]
        %v1499 = vld [vmem:[%s5 + $0x494] sm:$0xf]
        %v1500 = vld [vmem:[%s5 + $0x498] sm:$0xff]
        %v1501 = vld [vmem:[%s5 + $0x4a0] sm:$0xff]
        %v1502 = vld [vmem:[%s5 + $0x4a8] sm:$0xff]
        %v1503 = vld [vmem:[%s5 + $0x4b0] sm:$0xf]
        %v1504 = vld [vmem:[%s5 + $0x4b4] sm:$0xff]
        %v1505 = vld [vmem:[%s5 + $0x4bc] sm:$0xff]
        %v1506 = vld [vmem:[%s5 + $0x4c4] sm:$0xff]
        %v1507 = vld [vmem:[%s5 + $0x4cc] sm:$0xf]
        %v1508 = vld [vmem:[%s5 + $0x4d0] sm:$0xff]
        %v1509 = vld [vmem:[%s5 + $0x4d8] sm:$0xff]
        %v1510 = vld [vmem:[%s5 + $0x4e0] sm:$0xff]
        %v1511 = vld [vmem:[%s5 + $0x4e8] sm:$0xf]
        %v1512 = vld [vmem:[%s5 + $0x4ec] sm:$0xff]
        %v1513 = vld [vmem:[%s5 + $0x4f4] sm:$0xff]
        %v1514 = vld [vmem:[%s5 + $0x4fc] sm:$0xff]
        %v1515 = vld [vmem:[%s5 + $0x504] sm:$0xf]
        %v1516 = vld [vmem:[%s5 + $0x508] sm:$0xff]
        %v1517 = vld [vmem:[%s5 + $0x510] sm:$0xff]
        %v1518 = vld [vmem:[%s5 + $0x518] sm:$0xff]
        %v1519 = vld [vmem:[%s5 + $0x520] sm:$0xf]
        %v1520 = vld [vmem:[%s5 + $0x524] sm:$0xff]
        %v1521 = vld [vmem:[%s5 + $0x52c] sm:$0xff]
        %v1522 = vld [vmem:[%s5 + $0x534] sm:$0xff]
        %v1523 = vld [vmem:[%s5 + $0x53c] sm:$0xf]
        %v1524 = vld [vmem:[%s5 + $0x540] sm:$0xff]
        %v1525 = vld [vmem:[%s5 + $0x548] sm:$0xff]
        %v1526 = vld [vmem:[%s5 + $0x550] sm:$0xff]
        %v1527 = vld [vmem:[%s5 + $0x558] sm:$0xf]
        %v1528 = vld [vmem:[%s5 + $0x55c] sm:$0xff]
        %v1529 = vld [vmem:[%s5 + $0x564] sm:$0xff]
        %v1530 = vld [vmem:[%s5 + $0x56c] sm:$0xff]
        %v1531 = vld [vmem:[%s5 + $0x574] sm:$0xf]
        %v1532 = vld [vmem:[%s5 + $0x578] sm:$0xff]
        %v1533 = vld [vmem:[%s5 + $0x580] sm:$0xff]
        %v1534 = vld [vmem:[%s5 + $0x588] sm:$0xff]
        %v1535 = vld [vmem:[%s5 + $0x590] sm:$0xf]
        %v1536 = vld [vmem:[%s5 + $0x594] sm:$0xff]
        %v1537 = vld [vmem:[%s5 + $0x59c] sm:$0xff]
        %v1538 = vld [vmem:[%s5 + $0x5a4] sm:$0xff]
        %v1539 = vld [vmem:[%s5 + $0x5ac] sm:$0xf]
        %v1540 = vld [vmem:[%s5 + $0x5b0] sm:$0xff]
        %v1541 = vld [vmem:[%s5 + $0x5b8] sm:$0xff]
        %v1542 = vld [vmem:[%s5 + $0x5c0] sm:$0xff]
        %v1543 = vld [vmem:[%s5 + $0x5c8] sm:$0xf]
        %v1544 = vld [vmem:[%s5 + $0x5cc] sm:$0xff]
        %v1545 = vld [vmem:[%s5 + $0x5d4] sm:$0xff]
        %v1546 = vld [vmem:[%s5 + $0x5dc] sm:$0xff]
        %v1547 = vld [vmem:[%s5 + $0x5e4] sm:$0xf]
        %v1548 = vld [vmem:[%s5 + $0x5e8] sm:$0xff]
        %v1549 = vld [vmem:[%s5 + $0x5f0] sm:$0xff]
        %v1550 = vld [vmem:[%s5 + $0x5f8] sm:$0xff]
        %v1551 = vld [vmem:[%s5 + $0x600] sm:$0xf]
        %v1552 = vld [vmem:[%s5 + $0x604] sm:$0xff]
        %v1553 = vld [vmem:[%s5 + $0x60c] sm:$0xff]
        %v1554 = vld [vmem:[%s5 + $0x614] sm:$0xff]
        %v1555 = vld [vmem:[%s5 + $0x61c] sm:$0xf]
        %v1556 = vld [vmem:[%s5 + $0x620] sm:$0xff]
        %v1557 = vld [vmem:[%s5 + $0x628] sm:$0xff]
        %v1558 = vld [vmem:[%s5 + $0x630] sm:$0xff]
        %v1559 = vld [vmem:[%s5 + $0x638] sm:$0xf]
        %v1560 = vld [vmem:[%s5 + $0x63c] sm:$0xff]
        %v1561 = vld [vmem:[%s5 + $0x644] sm:$0xff]
        %v1562 = vld [vmem:[%s5 + $0x64c] sm:$0xff]
        %v1563 = vld [vmem:[%s5 + $0x654] sm:$0xf]
        %v1564 = vld [vmem:[%s5 + $0x658] sm:$0xff]
        %v1565 = vld [vmem:[%s5 + $0x660] sm:$0xff]
        %v1566 = vld [vmem:[%s5 + $0x668] sm:$0xff]
        %v1567 = vld [vmem:[%s5 + $0x670] sm:$0xf]
        %v1568 = vld [vmem:[%s5 + $0x674] sm:$0xff]
        %v1569 = vld [vmem:[%s5 + $0x67c] sm:$0xff]
        %v1570 = vld [vmem:[%s5 + $0x684] sm:$0xff]
        %v1571 = vld [vmem:[%s5 + $0x68c] sm:$0xf]
        %v1572 = vld [vmem:[%s5 + $0x690] sm:$0xff]
        %v1573 = vld [vmem:[%s5 + $0x698] sm:$0xff]
        %v1574 = vld [vmem:[%s5 + $0x6a0] sm:$0xff]
        %v1575 = vld [vmem:[%s5 + $0x6a8] sm:$0xf]
        %v1576 = vld [vmem:[%s5 + $0x6ac] sm:$0xff]
        %v1577 = vld [vmem:[%s5 + $0x6b4] sm:$0xff]
        %v1578 = vld [vmem:[%s5 + $0x6bc] sm:$0xff]
        %v1579 = vld [vmem:[%s5 + $0x6c4] sm:$0xf]
        %v1580 = vld [vmem:[%s5 + $0x6c8] sm:$0xff]
        %v1581 = vld [vmem:[%s5 + $0x6d0] sm:$0xff]
        %v1582 = vld [vmem:[%s5 + $0x6d8] sm:$0xff]
        %v1583 = vld [vmem:[%s5 + $0x6e0] sm:$0xf]
        %v1584 = vld [vmem:[%s5 + $0x6e4] sm:$0xff]
        %v1585 = vld [vmem:[%s5 + $0x6ec] sm:$0xff]
        %v1586 = vld [vmem:[%s5 + $0x6f4] sm:$0xff]
        %v1587 = vld [vmem:[%s5 + $0x6fc] sm:$0xf]
        %v1588 = vld [vmem:[%s5 + $0x700] sm:$0xff]
        %v1589 = vld [vmem:[%s5 + $0x708] sm:$0xff]
        %v1590 = vld [vmem:[%s5 + $0x710] sm:$0xff]
        %v1591 = vld [vmem:[%s5 + $0x718] sm:$0xf]
        %v1592 = vld [vmem:[%s5 + $0x71c] sm:$0xff]
        %v1593 = vld [vmem:[%s5 + $0x724] sm:$0xff]
        %v1594 = vld [vmem:[%s5 + $0x72c] sm:$0xff]
        %v1595 = vld [vmem:[%s5 + $0x734] sm:$0xf]
        %v1596 = vld [vmem:[%s5 + $0x738] sm:$0xff]
        %v1597 = vld [vmem:[%s5 + $0x740] sm:$0xff]
        %v1598 = vld [vmem:[%s5 + $0x748] sm:$0xff]
        %v1599 = vld [vmem:[%s5 + $0x750] sm:$0xf]
        %v1600 = vld [vmem:[%s5 + $0x754] sm:$0xff]
        %v1601 = vld [vmem:[%s5 + $0x75c] sm:$0xff]
        %v1602 = vld [vmem:[%s5 + $0x764] sm:$0xff]
        %v1603 = vld [vmem:[%s5 + $0x76c] sm:$0xf]
        %v1604 = vld [vmem:[%s5 + $0x770] sm:$0xff]
        %v1605 = vld [vmem:[%s5 + $0x778] sm:$0xff]
        %v1606 = vld [vmem:[%s5 + $0x780] sm:$0xff]
        %v1607 = vld [vmem:[%s5 + $0x788] sm:$0xf]
        %v1608 = vld [vmem:[%s5 + $0x78c] sm:$0xff]
        %v1609 = vld [vmem:[%s5 + $0x794] sm:$0xff]
        %v1610 = vld [vmem:[%s5 + $0x79c] sm:$0xff]
        %v1611 = vld [vmem:[%s5 + $0x7a4] sm:$0xf]
        %v1612 = vld [vmem:[%s5 + $0x7a8] sm:$0xff]
        %v1613 = vld [vmem:[%s5 + $0x7b0] sm:$0xff]
        %v1614 = vld [vmem:[%s5 + $0x7b8] sm:$0xff]
        %v1615 = vld [vmem:[%s5 + $0x7c0] sm:$0xf]
        %v1616 = vld [vmem:[%s5 + $0x7c4] sm:$0xff]
        %v1617 = vld [vmem:[%s5 + $0x7cc] sm:$0xff]
        %v1618 = vld [vmem:[%s5 + $0x7d4] sm:$0xff]
        %v1619 = vld [vmem:[%s5 + $0x7dc] sm:$0xf]
        %v1620 = vld [vmem:[%s5 + $0x7e0] sm:$0xff]
        %v1621 = vld [vmem:[%s5 + $0x7e8] sm:$0xff]
        %v1622 = vld [vmem:[%s5 + $0x7f0] sm:$0xff]
        %v1623 = vld [vmem:[%s5 + $0x7f8] sm:$0xf]
        %v1624 = vld [vmem:[%s5 + $0x7fc] sm:$0xff]
        %v1625 = vld [vmem:[%s5 + $0x804] sm:$0xff]
        %v1626 = vld [vmem:[%s5 + $0x80c] sm:$0xff]
        %v1627 = vld [vmem:[%s5 + $0x814] sm:$0xf]
        %v1628 = vld [vmem:[%s5 + $0x818] sm:$0xff]
        %v1629 = vld [vmem:[%s5 + $0x820] sm:$0xff]
        %v1630 = vld [vmem:[%s5 + $0x828] sm:$0xff]
        %v1631 = vld [vmem:[%s5 + $0x830] sm:$0xf]
        %v1632 = vld [vmem:[%s5 + $0x834] sm:$0xff]
        %v1633 = vld [vmem:[%s5 + $0x83c] sm:$0xff]
        %v1634 = vld [vmem:[%s5 + $0x844] sm:$0xff]
        %v1635 = vld [vmem:[%s5 + $0x84c] sm:$0xf]
        %v1636 = vld [vmem:[%s5 + $0x850] sm:$0xff]
        %v1637 = vld [vmem:[%s5 + $0x858] sm:$0xff]
        %v1638 = vld [vmem:[%s5 + $0x860] sm:$0xff]
        %v1639 = vld [vmem:[%s5 + $0x868] sm:$0xf]
        %v1640 = vld [vmem:[%s5 + $0x86c] sm:$0xff]
        %v1641 = vld [vmem:[%s5 + $0x874] sm:$0xff]
        %v1642 = vld [vmem:[%s5 + $0x87c] sm:$0xff]
        %v1643 = vld [vmem:[%s5 + $0x884] sm:$0xf]
        %v1644 = vld [vmem:[%s5 + $0x888] sm:$0xff]
        %v1645 = vld [vmem:[%s5 + $0x890] sm:$0xff]
        %v1646 = vld [vmem:[%s5 + $0x898] sm:$0xff]
        %v1647 = vld [vmem:[%s5 + $0x8a0] sm:$0xf]
        %v1648 = vld [vmem:[%s5 + $0x8a4] sm:$0xff]
        %v1649 = vld [vmem:[%s5 + $0x8ac] sm:$0xff]
        %v1650 = vld [vmem:[%s5 + $0x8b4] sm:$0xff]
        %v1651 = vld [vmem:[%s5 + $0x8bc] sm:$0xf]
        %v1652 = vld [vmem:[%s5 + $0x8c0] sm:$0xff]
        %v1653 = vld [vmem:[%s5 + $0x8c8] sm:$0xff]
        %v1654 = vld [vmem:[%s5 + $0x8d0] sm:$0xff]
        %v1655 = vld [vmem:[%s5 + $0x8d8] sm:$0xf]
        %v1656 = vld [vmem:[%s5 + $0x8dc] sm:$0xff]
        %v1657 = vld [vmem:[%s5 + $0x8e4] sm:$0xff]
        %v1658 = vld [vmem:[%s5 + $0x8ec] sm:$0xff]
        %v1659 = vld [vmem:[%s5 + $0x8f4] sm:$0xf]
        %v1660 = vld [vmem:[%s5 + $0x8f8] sm:$0xff]
        %v1661 = vld [vmem:[%s5 + $0x900] sm:$0xff]
        %v1662 = vld [vmem:[%s5 + $0x908] sm:$0xff]
        %v1663 = vld [vmem:[%s5 + $0x910] sm:$0xf]
        %v1664 = vld [vmem:[%s5 + $0x914] sm:$0xff]
        %v1665 = vld [vmem:[%s5 + $0x91c] sm:$0xff]
        %v1666 = vld [vmem:[%s5 + $0x924] sm:$0xff]
        %v1667 = vld [vmem:[%s5 + $0x92c] sm:$0xf]
        %v1668 = vld [vmem:[%s5 + $0x930] sm:$0xff]
        %v1669 = vld [vmem:[%s5 + $0x938] sm:$0xff]
        %v1670 = vld [vmem:[%s5 + $0x940] sm:$0xff]
        %v1671 = vld [vmem:[%s5 + $0x948] sm:$0xf]
        %v1672 = vld [vmem:[%s5 + $0x94c] sm:$0xff]
        %v1673 = vld [vmem:[%s5 + $0x954] sm:$0xff]
        %v1674 = vld [vmem:[%s5 + $0x95c] sm:$0xff]
        %v1675 = vld [vmem:[%s5 + $0x964] sm:$0xf]
        %v1676 = vld [vmem:[%s5 + $0x968] sm:$0xff]
        %v1677 = vld [vmem:[%s5 + $0x970] sm:$0xff]
        %v1678 = vld [vmem:[%s5 + $0x978] sm:$0xff]
        %v1679 = vld [vmem:[%s5 + $0x980] sm:$0xf]
        %v1680 = vld [vmem:[%s5 + $0x984] sm:$0xff]
        %v1681 = vld [vmem:[%s5 + $0x98c] sm:$0xff]
        %v1682 = vld [vmem:[%s5 + $0x994] sm:$0xff]
        %v1683 = vld [vmem:[%s5 + $0x99c] sm:$0xf]
        %v1684 = vld [vmem:[%s5 + $0x9a0] sm:$0xff]
        %v1685 = vld [vmem:[%s5 + $0x9a8] sm:$0xff]
        %v1686 = vld [vmem:[%s5 + $0x9b0] sm:$0xff]
        %v1687 = vld [vmem:[%s5 + $0x9b8] sm:$0xf]
        %v1688 = vld [vmem:[%s5 + $0x9bc] sm:$0xff]
        %v1689 = vld [vmem:[%s5 + $0x9c4] sm:$0xff]
        %v1690 = vld [vmem:[%s5 + $0x9cc] sm:$0xff]
        %v1691 = vld [vmem:[%s5 + $0x9d4] sm:$0xf]
        %v1692 = vld [vmem:[%s5 + $0x9d8] sm:$0xff]
        %v1693 = vld [vmem:[%s5 + $0x9e0] sm:$0xff]
        %v1694 = vld [vmem:[%s5 + $0x9e8] sm:$0xff]
        %v1695 = vld [vmem:[%s5 + $0x9f0] sm:$0xf]
        %v1696 = vld [vmem:[%s5 + $0x9f4] sm:$0xff]
        %v1697 = vld [vmem:[%s5 + $0x9fc] sm:$0xff]
        %v1698 = vld [vmem:[%s5 + $0xa04] sm:$0xff]
        %v1699 = vld [vmem:[%s5 + $0xa0c] sm:$0xf]
        %v1700 = vld [vmem:[%s5 + $0xa10] sm:$0xff]
        %v1701 = vld [vmem:[%s5 + $0xa18] sm:$0xff]
        %v1702 = vld [vmem:[%s5 + $0xa20] sm:$0xff]
        %v1703 = vld [vmem:[%s5 + $0xa28] sm:$0xf]
        %v1704 = vld [vmem:[%s5 + $0xa2c] sm:$0xff]
        %v1705 = vld [vmem:[%s5 + $0xa34] sm:$0xff]
        %v1706 = vld [vmem:[%s5 + $0xa3c] sm:$0xff]
        %v1707 = vld [vmem:[%s5 + $0xa44] sm:$0xf]
        %v1708 = vld [vmem:[%s5 + $0xa48] sm:$0xff]
        %v1709 = vld [vmem:[%s5 + $0xa50] sm:$0xff]
        %v1710 = vld [vmem:[%s5 + $0xa58] sm:$0xff]
        %v1711 = vld [vmem:[%s5 + $0xa60] sm:$0xf]
        %v1712 = vld [vmem:[%s5 + $0xa64] sm:$0xff]
        %v1713 = vld [vmem:[%s5 + $0xa6c] sm:$0xff]
        %v1714 = vld [vmem:[%s5 + $0xa74] sm:$0xff]
        %v1715 = vld [vmem:[%s5 + $0xa7c] sm:$0xf]
        %v1716 = vld [vmem:[%s5 + $0xa80] sm:$0xff]
        %v1717 = vld [vmem:[%s5 + $0xa88] sm:$0xff]
        %v1718 = vld [vmem:[%s5 + $0xa90] sm:$0xff]
        %v1719 = vld [vmem:[%s5 + $0xa98] sm:$0xf]
        %v1720 = vld [vmem:[%s5 + $0xa9c] sm:$0xff]
        %v1721 = vld [vmem:[%s5 + $0xaa4] sm:$0xff]
        %v1722 = vld [vmem:[%s5 + $0xaac] sm:$0xff]
        %v1723 = vld [vmem:[%s5 + $0xab4] sm:$0xf]
        %v1724 = vld [vmem:[%s5 + $0xab8] sm:$0xff]
        %v1725 = vld [vmem:[%s5 + $0xac0] sm:$0xff]
        %v1726 = vld [vmem:[%s5 + $0xac8] sm:$0xff]
        %v1727 = vld [vmem:[%s5 + $0xad0] sm:$0xf]
        %v1728 = vld [vmem:[%s5 + $0xad4] sm:$0xff]
        %v1729 = vld [vmem:[%s5 + $0xadc] sm:$0xff]
        %v1730 = vld [vmem:[%s5 + $0xae4] sm:$0xff]
        %v1731 = vld [vmem:[%s5 + $0xaec] sm:$0xf]
        %v1732 = vld [vmem:[%s6] sm:$0x7f]
        %v2133 = vunpack.c.l.b16 %v1332
        %v2134 = vunpack.c.h.b16 %v1332
        %v2135 = vunpack.c.l.b16 %v1333
        %v2136 = vunpack.c.h.b16 %v1333
        %v2137 = vunpack.c.l.b16 %v1334
        %v2138 = vunpack.c.h.b16 %v1334
        %v2139 = vunpack.c.l.b16 %v1335
        %v2140 = vunpack.c.l.b16 %v1336
        %v2141 = vunpack.c.h.b16 %v1336
        %v2142 = vunpack.c.l.b16 %v1337
        %v2143 = vunpack.c.h.b16 %v1337
        %v2144 = vunpack.c.l.b16 %v1338
        %v2145 = vunpack.c.h.b16 %v1338
        %v2146 = vunpack.c.l.b16 %v1339
        %v2147 = vunpack.c.l.b16 %v1340
        %v2148 = vunpack.c.h.b16 %v1340
        %v2149 = vunpack.c.l.b16 %v1341
        %v2150 = vunpack.c.h.b16 %v1341
        %v2151 = vunpack.c.l.b16 %v1342
        %v2152 = vunpack.c.h.b16 %v1342
        %v2153 = vunpack.c.l.b16 %v1343
        %v2154 = vunpack.c.l.b16 %v1344
        %v2155 = vunpack.c.h.b16 %v1344
        %v2156 = vunpack.c.l.b16 %v1345
        %v2157 = vunpack.c.h.b16 %v1345
        %v2158 = vunpack.c.l.b16 %v1346
        %v2159 = vunpack.c.h.b16 %v1346
        %v2160 = vunpack.c.l.b16 %v1347
        %v2161 = vunpack.c.l.b16 %v1348
        %v2162 = vunpack.c.h.b16 %v1348
        %v2163 = vunpack.c.l.b16 %v1349
        %v2164 = vunpack.c.h.b16 %v1349
        %v2165 = vunpack.c.l.b16 %v1350
        %v2166 = vunpack.c.h.b16 %v1350
        %v2167 = vunpack.c.l.b16 %v1351
        %v2168 = vunpack.c.l.b16 %v1352
        %v2169 = vunpack.c.h.b16 %v1352
        %v2170 = vunpack.c.l.b16 %v1353
        %v2171 = vunpack.c.h.b16 %v1353
        %v2172 = vunpack.c.l.b16 %v1354
        %v2173 = vunpack.c.h.b16 %v1354
        %v2174 = vunpack.c.l.b16 %v1355
        %v2175 = vunpack.c.l.b16 %v1356
        %v2176 = vunpack.c.h.b16 %v1356
        %v2177 = vunpack.c.l.b16 %v1357
        %v2178 = vunpack.c.h.b16 %v1357
        %v2179 = vunpack.c.l.b16 %v1358
        %v2180 = vunpack.c.h.b16 %v1358
        %v2181 = vunpack.c.l.b16 %v1359
        %v2182 = vunpack.c.l.b16 %v1360
        %v2183 = vunpack.c.h.b16 %v1360
        %v2184 = vunpack.c.l.b16 %v1361
        %v2185 = vunpack.c.h.b16 %v1361
        %v2186 = vunpack.c.l.b16 %v1362
        %v2187 = vunpack.c.h.b16 %v1362
        %v2188 = vunpack.c.l.b16 %v1363
        %v2189 = vunpack.c.l.b16 %v1364
        %v2190 = vunpack.c.h.b16 %v1364
        %v2191 = vunpack.c.l.b16 %v1365
        %v2192 = vunpack.c.h.b16 %v1365
        %v2193 = vunpack.c.l.b16 %v1366
        %v2194 = vunpack.c.h.b16 %v1366
        %v2195 = vunpack.c.l.b16 %v1367
        %v2196 = vunpack.c.l.b16 %v1368
        %v2197 = vunpack.c.h.b16 %v1368
        %v2198 = vunpack.c.l.b16 %v1369
        %v2199 = vunpack.c.h.b16 %v1369
        %v2200 = vunpack.c.l.b16 %v1370
        %v2201 = vunpack.c.h.b16 %v1370
        %v2202 = vunpack.c.l.b16 %v1371
        %v2203 = vunpack.c.l.b16 %v1372
        %v2204 = vunpack.c.h.b16 %v1372
        %v2205 = vunpack.c.l.b16 %v1373
        %v2206 = vunpack.c.h.b16 %v1373
        %v2207 = vunpack.c.l.b16 %v1374
        %v2208 = vunpack.c.h.b16 %v1374
        %v2209 = vunpack.c.l.b16 %v1375
        %v2210 = vunpack.c.l.b16 %v1376
        %v2211 = vunpack.c.h.b16 %v1376
        %v2212 = vunpack.c.l.b16 %v1377
        %v2213 = vunpack.c.h.b16 %v1377
        %v2214 = vunpack.c.l.b16 %v1378
        %v2215 = vunpack.c.h.b16 %v1378
        %v2216 = vunpack.c.l.b16 %v1379
        %v2217 = vunpack.c.l.b16 %v1380
        %v2218 = vunpack.c.h.b16 %v1380
        %v2219 = vunpack.c.l.b16 %v1381
        %v2220 = vunpack.c.h.b16 %v1381
        %v2221 = vunpack.c.l.b16 %v1382
        %v2222 = vunpack.c.h.b16 %v1382
        %v2223 = vunpack.c.l.b16 %v1383
        %v2224 = vunpack.c.l.b16 %v1384
        %v2225 = vunpack.c.h.b16 %v1384
        %v2226 = vunpack.c.l.b16 %v1385
        %v2227 = vunpack.c.h.b16 %v1385
        %v2228 = vunpack.c.l.b16 %v1386
        %v2229 = vunpack.c.h.b16 %v1386
        %v2230 = vunpack.c.l.b16 %v1387
        %v2231 = vunpack.c.l.b16 %v1388
        %v2232 = vunpack.c.h.b16 %v1388
        %v2233 = vunpack.c.l.b16 %v1389
        %v2234 = vunpack.c.h.b16 %v1389
        %v2235 = vunpack.c.l.b16 %v1390
        %v2236 = vunpack.c.h.b16 %v1390
        %v2237 = vunpack.c.l.b16 %v1391
        %v2238 = vunpack.c.l.b16 %v1392
        %v2239 = vunpack.c.h.b16 %v1392
        %v2240 = vunpack.c.l.b16 %v1393
        %v2241 = vunpack.c.h.b16 %v1393
        %v2242 = vunpack.c.l.b16 %v1394
        %v2243 = vunpack.c.h.b16 %v1394
        %v2244 = vunpack.c.l.b16 %v1395
        %v2245 = vunpack.c.l.b16 %v1396
        %v2246 = vunpack.c.h.b16 %v1396
        %v2247 = vunpack.c.l.b16 %v1397
        %v2248 = vunpack.c.h.b16 %v1397
        %v2249 = vunpack.c.l.b16 %v1398
        %v2250 = vunpack.c.h.b16 %v1398
        %v2251 = vunpack.c.l.b16 %v1399
        %v2252 = vunpack.c.l.b16 %v1400
        %v2253 = vunpack.c.h.b16 %v1400
        %v2254 = vunpack.c.l.b16 %v1401
        %v2255 = vunpack.c.h.b16 %v1401
        %v2256 = vunpack.c.l.b16 %v1402
        %v2257 = vunpack.c.h.b16 %v1402
        %v2258 = vunpack.c.l.b16 %v1403
        %v2259 = vunpack.c.l.b16 %v1404
        %v2260 = vunpack.c.h.b16 %v1404
        %v2261 = vunpack.c.l.b16 %v1405
        %v2262 = vunpack.c.h.b16 %v1405
        %v2263 = vunpack.c.l.b16 %v1406
        %v2264 = vunpack.c.h.b16 %v1406
        %v2265 = vunpack.c.l.b16 %v1407
        %v2266 = vunpack.c.l.b16 %v1408
        %v2267 = vunpack.c.h.b16 %v1408
        %v2268 = vunpack.c.l.b16 %v1409
        %v2269 = vunpack.c.h.b16 %v1409
        %v2270 = vunpack.c.l.b16 %v1410
        %v2271 = vunpack.c.h.b16 %v1410
        %v2272 = vunpack.c.l.b16 %v1411
        %v2273 = vunpack.c.l.b16 %v1412
        %v2274 = vunpack.c.h.b16 %v1412
        %v2275 = vunpack.c.l.b16 %v1413
        %v2276 = vunpack.c.h.b16 %v1413
        %v2277 = vunpack.c.l.b16 %v1414
        %v2278 = vunpack.c.h.b16 %v1414
        %v2279 = vunpack.c.l.b16 %v1415
        %v2280 = vunpack.c.l.b16 %v1416
        %v2281 = vunpack.c.h.b16 %v1416
        %v2282 = vunpack.c.l.b16 %v1417
        %v2283 = vunpack.c.h.b16 %v1417
        %v2284 = vunpack.c.l.b16 %v1418
        %v2285 = vunpack.c.h.b16 %v1418
        %v2286 = vunpack.c.l.b16 %v1419
        %v2287 = vunpack.c.l.b16 %v1420
        %v2288 = vunpack.c.h.b16 %v1420
        %v2289 = vunpack.c.l.b16 %v1421
        %v2290 = vunpack.c.h.b16 %v1421
        %v2291 = vunpack.c.l.b16 %v1422
        %v2292 = vunpack.c.h.b16 %v1422
        %v2293 = vunpack.c.l.b16 %v1423
        %v2294 = vunpack.c.l.b16 %v1424
        %v2295 = vunpack.c.h.b16 %v1424
        %v2296 = vunpack.c.l.b16 %v1425
        %v2297 = vunpack.c.h.b16 %v1425
        %v2298 = vunpack.c.l.b16 %v1426
        %v2299 = vunpack.c.h.b16 %v1426
        %v2300 = vunpack.c.l.b16 %v1427
        %v2301 = vunpack.c.l.b16 %v1428
        %v2302 = vunpack.c.h.b16 %v1428
        %v2303 = vunpack.c.l.b16 %v1429
        %v2304 = vunpack.c.h.b16 %v1429
        %v2305 = vunpack.c.l.b16 %v1430
        %v2306 = vunpack.c.h.b16 %v1430
        %v2307 = vunpack.c.l.b16 %v1431
        %v2308 = vunpack.c.l.b16 %v1432
        %v2309 = vunpack.c.h.b16 %v1432
        %v2310 = vunpack.c.l.b16 %v1433
        %v2311 = vunpack.c.h.b16 %v1433
        %v2312 = vunpack.c.l.b16 %v1434
        %v2313 = vunpack.c.h.b16 %v1434
        %v2314 = vunpack.c.l.b16 %v1435
        %v2315 = vunpack.c.l.b16 %v1436
        %v2316 = vunpack.c.h.b16 %v1436
        %v2317 = vunpack.c.l.b16 %v1437
        %v2318 = vunpack.c.h.b16 %v1437
        %v2319 = vunpack.c.l.b16 %v1438
        %v2320 = vunpack.c.h.b16 %v1438
        %v2321 = vunpack.c.l.b16 %v1439
        %v2322 = vunpack.c.l.b16 %v1440
        %v2323 = vunpack.c.h.b16 %v1440
        %v2324 = vunpack.c.l.b16 %v1441
        %v2325 = vunpack.c.h.b16 %v1441
        %v2326 = vunpack.c.l.b16 %v1442
        %v2327 = vunpack.c.h.b16 %v1442
        %v2328 = vunpack.c.l.b16 %v1443
        %v2329 = vunpack.c.l.b16 %v1444
        %v2330 = vunpack.c.h.b16 %v1444
        %v2331 = vunpack.c.l.b16 %v1445
        %v2332 = vunpack.c.h.b16 %v1445
        %v2333 = vunpack.c.l.b16 %v1446
        %v2334 = vunpack.c.h.b16 %v1446
        %v2335 = vunpack.c.l.b16 %v1447
        %v2336 = vunpack.c.l.b16 %v1448
        %v2337 = vunpack.c.h.b16 %v1448
        %v2338 = vunpack.c.l.b16 %v1449
        %v2339 = vunpack.c.h.b16 %v1449
        %v2340 = vunpack.c.l.b16 %v1450
        %v2341 = vunpack.c.h.b16 %v1450
        %v2342 = vunpack.c.l.b16 %v1451
        %v2343 = vunpack.c.l.b16 %v1452
        %v2344 = vunpack.c.h.b16 %v1452
        %v2345 = vunpack.c.l.b16 %v1453
        %v2346 = vunpack.c.h.b16 %v1453
        %v2347 = vunpack.c.l.b16 %v1454
        %v2348 = vunpack.c.h.b16 %v1454
        %v2349 = vunpack.c.l.b16 %v1455
        %v2350 = vunpack.c.l.b16 %v1456
        %v2351 = vunpack.c.h.b16 %v1456
        %v2352 = vunpack.c.l.b16 %v1457
        %v2353 = vunpack.c.h.b16 %v1457
        %v2354 = vunpack.c.l.b16 %v1458
        %v2355 = vunpack.c.h.b16 %v1458
        %v2356 = vunpack.c.l.b16 %v1459
        %v2357 = vunpack.c.l.b16 %v1460
        %v2358 = vunpack.c.h.b16 %v1460
        %v2359 = vunpack.c.l.b16 %v1461
        %v2360 = vunpack.c.h.b16 %v1461
        %v2361 = vunpack.c.l.b16 %v1462
        %v2362 = vunpack.c.h.b16 %v1462
        %v2363 = vunpack.c.l.b16 %v1463
        %v2364 = vunpack.c.l.b16 %v1464
        %v2365 = vunpack.c.h.b16 %v1464
        %v2366 = vunpack.c.l.b16 %v1465
        %v2367 = vunpack.c.h.b16 %v1465
        %v2368 = vunpack.c.l.b16 %v1466
        %v2369 = vunpack.c.h.b16 %v1466
        %v2370 = vunpack.c.l.b16 %v1467
        %v2371 = vunpack.c.l.b16 %v1468
        %v2372 = vunpack.c.h.b16 %v1468
        %v2373 = vunpack.c.l.b16 %v1469
        %v2374 = vunpack.c.h.b16 %v1469
        %v2375 = vunpack.c.l.b16 %v1470
        %v2376 = vunpack.c.h.b16 %v1470
        %v2377 = vunpack.c.l.b16 %v1471
        %v2378 = vunpack.c.l.b16 %v1472
        %v2379 = vunpack.c.h.b16 %v1472
        %v2380 = vunpack.c.l.b16 %v1473
        %v2381 = vunpack.c.h.b16 %v1473
        %v2382 = vunpack.c.l.b16 %v1474
        %v2383 = vunpack.c.h.b16 %v1474
        %v2384 = vunpack.c.l.b16 %v1475
        %v2385 = vunpack.c.l.b16 %v1476
        %v2386 = vunpack.c.h.b16 %v1476
        %v2387 = vunpack.c.l.b16 %v1477
        %v2388 = vunpack.c.h.b16 %v1477
        %v2389 = vunpack.c.l.b16 %v1478
        %v2390 = vunpack.c.h.b16 %v1478
        %v2391 = vunpack.c.l.b16 %v1479
        %v2392 = vunpack.c.l.b16 %v1480
        %v2393 = vunpack.c.h.b16 %v1480
        %v2394 = vunpack.c.l.b16 %v1481
        %v2395 = vunpack.c.h.b16 %v1481
        %v2396 = vunpack.c.l.b16 %v1482
        %v2397 = vunpack.c.h.b16 %v1482
        %v2398 = vunpack.c.l.b16 %v1483
        %v2399 = vunpack.c.l.b16 %v1484
        %v2400 = vunpack.c.h.b16 %v1484
        %v2401 = vunpack.c.l.b16 %v1485
        %v2402 = vunpack.c.h.b16 %v1485
        %v2403 = vunpack.c.l.b16 %v1486
        %v2404 = vunpack.c.h.b16 %v1486
        %v2405 = vunpack.c.l.b16 %v1487
        %v2406 = vunpack.c.l.b16 %v1488
        %v2407 = vunpack.c.h.b16 %v1488
        %v2408 = vunpack.c.l.b16 %v1489
        %v2409 = vunpack.c.h.b16 %v1489
        %v2410 = vunpack.c.l.b16 %v1490
        %v2411 = vunpack.c.h.b16 %v1490
        %v2412 = vunpack.c.l.b16 %v1491
        %v2413 = vunpack.c.l.b16 %v1492
        %v2414 = vunpack.c.h.b16 %v1492
        %v2415 = vunpack.c.l.b16 %v1493
        %v2416 = vunpack.c.h.b16 %v1493
        %v2417 = vunpack.c.l.b16 %v1494
        %v2418 = vunpack.c.h.b16 %v1494
        %v2419 = vunpack.c.l.b16 %v1495
        %v2420 = vunpack.c.l.b16 %v1496
        %v2421 = vunpack.c.h.b16 %v1496
        %v2422 = vunpack.c.l.b16 %v1497
        %v2423 = vunpack.c.h.b16 %v1497
        %v2424 = vunpack.c.l.b16 %v1498
        %v2425 = vunpack.c.h.b16 %v1498
        %v2426 = vunpack.c.l.b16 %v1499
        %v2427 = vunpack.c.l.b16 %v1500
        %v2428 = vunpack.c.h.b16 %v1500
        %v2429 = vunpack.c.l.b16 %v1501
        %v2430 = vunpack.c.h.b16 %v1501
        %v2431 = vunpack.c.l.b16 %v1502
        %v2432 = vunpack.c.h.b16 %v1502
        %v2433 = vunpack.c.l.b16 %v1503
        %v2434 = vunpack.c.l.b16 %v1504
        %v2435 = vunpack.c.h.b16 %v1504
        %v2436 = vunpack.c.l.b16 %v1505
        %v2437 = vunpack.c.h.b16 %v1505
        %v2438 = vunpack.c.l.b16 %v1506
        %v2439 = vunpack.c.h.b16 %v1506
        %v2440 = vunpack.c.l.b16 %v1507
        %v2441 = vunpack.c.l.b16 %v1508
        %v2442 = vunpack.c.h.b16 %v1508
        %v2443 = vunpack.c.l.b16 %v1509
        %v2444 = vunpack.c.h.b16 %v1509
        %v2445 = vunpack.c.l.b16 %v1510
        %v2446 = vunpack.c.h.b16 %v1510
        %v2447 = vunpack.c.l.b16 %v1511
        %v2448 = vunpack.c.l.b16 %v1512
        %v2449 = vunpack.c.h.b16 %v1512
        %v2450 = vunpack.c.l.b16 %v1513
        %v2451 = vunpack.c.h.b16 %v1513
        %v2452 = vunpack.c.l.b16 %v1514
        %v2453 = vunpack.c.h.b16 %v1514
        %v2454 = vunpack.c.l.b16 %v1515
        %v2455 = vunpack.c.l.b16 %v1516
        %v2456 = vunpack.c.h.b16 %v1516
        %v2457 = vunpack.c.l.b16 %v1517
        %v2458 = vunpack.c.h.b16 %v1517
        %v2459 = vunpack.c.l.b16 %v1518
        %v2460 = vunpack.c.h.b16 %v1518
        %v2461 = vunpack.c.l.b16 %v1519
        %v2462 = vunpack.c.l.b16 %v1520
        %v2463 = vunpack.c.h.b16 %v1520
        %v2464 = vunpack.c.l.b16 %v1521
        %v2465 = vunpack.c.h.b16 %v1521
        %v2466 = vunpack.c.l.b16 %v1522
        %v2467 = vunpack.c.h.b16 %v1522
        %v2468 = vunpack.c.l.b16 %v1523
        %v2469 = vunpack.c.l.b16 %v1524
        %v2470 = vunpack.c.h.b16 %v1524
        %v2471 = vunpack.c.l.b16 %v1525
        %v2472 = vunpack.c.h.b16 %v1525
        %v2473 = vunpack.c.l.b16 %v1526
        %v2474 = vunpack.c.h.b16 %v1526
        %v2475 = vunpack.c.l.b16 %v1527
        %v2476 = vunpack.c.l.b16 %v1528
        %v2477 = vunpack.c.h.b16 %v1528
        %v2478 = vunpack.c.l.b16 %v1529
        %v2479 = vunpack.c.h.b16 %v1529
        %v2480 = vunpack.c.l.b16 %v1530
        %v2481 = vunpack.c.h.b16 %v1530
        %v2482 = vunpack.c.l.b16 %v1531
        %v2483 = vunpack.c.l.b16 %v1532
        %v2484 = vunpack.c.h.b16 %v1532
        %v2485 = vunpack.c.l.b16 %v1533
        %v2486 = vunpack.c.h.b16 %v1533
        %v2487 = vunpack.c.l.b16 %v1534
        %v2488 = vunpack.c.h.b16 %v1534
        %v2489 = vunpack.c.l.b16 %v1535
        %v2490 = vunpack.c.l.b16 %v1536
        %v2491 = vunpack.c.h.b16 %v1536
        %v2492 = vunpack.c.l.b16 %v1537
        %v2493 = vunpack.c.h.b16 %v1537
        %v2494 = vunpack.c.l.b16 %v1538
        %v2495 = vunpack.c.h.b16 %v1538
        %v2496 = vunpack.c.l.b16 %v1539
        %v2497 = vunpack.c.l.b16 %v1540
        %v2498 = vunpack.c.h.b16 %v1540
        %v2499 = vunpack.c.l.b16 %v1541
        %v2500 = vunpack.c.h.b16 %v1541
        %v2501 = vunpack.c.l.b16 %v1542
        %v2502 = vunpack.c.h.b16 %v1542
        %v2503 = vunpack.c.l.b16 %v1543
        %v2504 = vunpack.c.l.b16 %v1544
        %v2505 = vunpack.c.h.b16 %v1544
        %v2506 = vunpack.c.l.b16 %v1545
        %v2507 = vunpack.c.h.b16 %v1545
        %v2508 = vunpack.c.l.b16 %v1546
        %v2509 = vunpack.c.h.b16 %v1546
        %v2510 = vunpack.c.l.b16 %v1547
        %v2511 = vunpack.c.l.b16 %v1548
        %v2512 = vunpack.c.h.b16 %v1548
        %v2513 = vunpack.c.l.b16 %v1549
        %v2514 = vunpack.c.h.b16 %v1549
        %v2515 = vunpack.c.l.b16 %v1550
        %v2516 = vunpack.c.h.b16 %v1550
        %v2517 = vunpack.c.l.b16 %v1551
        %v2518 = vunpack.c.l.b16 %v1552
        %v2519 = vunpack.c.h.b16 %v1552
        %v2520 = vunpack.c.l.b16 %v1553
        %v2521 = vunpack.c.h.b16 %v1553
        %v2522 = vunpack.c.l.b16 %v1554
        %v2523 = vunpack.c.h.b16 %v1554
        %v2524 = vunpack.c.l.b16 %v1555
        %v2525 = vunpack.c.l.b16 %v1556
        %v2526 = vunpack.c.h.b16 %v1556
        %v2527 = vunpack.c.l.b16 %v1557
        %v2528 = vunpack.c.h.b16 %v1557
        %v2529 = vunpack.c.l.b16 %v1558
        %v2530 = vunpack.c.h.b16 %v1558
        %v2531 = vunpack.c.l.b16 %v1559
        %v2532 = vunpack.c.l.b16 %v1560
        %v2533 = vunpack.c.h.b16 %v1560
        %v2534 = vunpack.c.l.b16 %v1561
        %v2535 = vunpack.c.h.b16 %v1561
        %v2536 = vunpack.c.l.b16 %v1562
        %v2537 = vunpack.c.h.b16 %v1562
        %v2538 = vunpack.c.l.b16 %v1563
        %v2539 = vunpack.c.l.b16 %v1564
        %v2540 = vunpack.c.h.b16 %v1564
        %v2541 = vunpack.c.l.b16 %v1565
        %v2542 = vunpack.c.h.b16 %v1565
        %v2543 = vunpack.c.l.b16 %v1566
        %v2544 = vunpack.c.h.b16 %v1566
        %v2545 = vunpack.c.l.b16 %v1567
        %v2546 = vunpack.c.l.b16 %v1568
        %v2547 = vunpack.c.h.b16 %v1568
        %v2548 = vunpack.c.l.b16 %v1569
        %v2549 = vunpack.c.h.b16 %v1569
        %v2550 = vunpack.c.l.b16 %v1570
        %v2551 = vunpack.c.h.b16 %v1570
        %v2552 = vunpack.c.l.b16 %v1571
        %v2553 = vunpack.c.l.b16 %v1572
        %v2554 = vunpack.c.h.b16 %v1572
        %v2555 = vunpack.c.l.b16 %v1573
        %v2556 = vunpack.c.h.b16 %v1573
        %v2557 = vunpack.c.l.b16 %v1574
        %v2558 = vunpack.c.h.b16 %v1574
        %v2559 = vunpack.c.l.b16 %v1575
        %v2560 = vunpack.c.l.b16 %v1576
        %v2561 = vunpack.c.h.b16 %v1576
        %v2562 = vunpack.c.l.b16 %v1577
        %v2563 = vunpack.c.h.b16 %v1577
        %v2564 = vunpack.c.l.b16 %v1578
        %v2565 = vunpack.c.h.b16 %v1578
        %v2566 = vunpack.c.l.b16 %v1579
        %v2567 = vunpack.c.l.b16 %v1580
        %v2568 = vunpack.c.h.b16 %v1580
        %v2569 = vunpack.c.l.b16 %v1581
        %v2570 = vunpack.c.h.b16 %v1581
        %v2571 = vunpack.c.l.b16 %v1582
        %v2572 = vunpack.c.h.b16 %v1582
        %v2573 = vunpack.c.l.b16 %v1583
        %v2574 = vunpack.c.l.b16 %v1584
        %v2575 = vunpack.c.h.b16 %v1584
        %v2576 = vunpack.c.l.b16 %v1585
        %v2577 = vunpack.c.h.b16 %v1585
        %v2578 = vunpack.c.l.b16 %v1586
        %v2579 = vunpack.c.h.b16 %v1586
        %v2580 = vunpack.c.l.b16 %v1587
        %v2581 = vunpack.c.l.b16 %v1588
        %v2582 = vunpack.c.h.b16 %v1588
        %v2583 = vunpack.c.l.b16 %v1589
        %v2584 = vunpack.c.h.b16 %v1589
        %v2585 = vunpack.c.l.b16 %v1590
        %v2586 = vunpack.c.h.b16 %v1590
        %v2587 = vunpack.c.l.b16 %v1591
        %v2588 = vunpack.c.l.b16 %v1592
        %v2589 = vunpack.c.h.b16 %v1592
        %v2590 = vunpack.c.l.b16 %v1593
        %v2591 = vunpack.c.h.b16 %v1593
        %v2592 = vunpack.c.l.b16 %v1594
        %v2593 = vunpack.c.h.b16 %v1594
        %v2594 = vunpack.c.l.b16 %v1595
        %v2595 = vunpack.c.l.b16 %v1596
        %v2596 = vunpack.c.h.b16 %v1596
        %v2597 = vunpack.c.l.b16 %v1597
        %v2598 = vunpack.c.h.b16 %v1597
        %v2599 = vunpack.c.l.b16 %v1598
        %v2600 = vunpack.c.h.b16 %v1598
        %v2601 = vunpack.c.l.b16 %v1599
        %v2602 = vunpack.c.l.b16 %v1600
        %v2603 = vunpack.c.h.b16 %v1600
        %v2604 = vunpack.c.l.b16 %v1601
        %v2605 = vunpack.c.h.b16 %v1601
        %v2606 = vunpack.c.l.b16 %v1602
        %v2607 = vunpack.c.h.b16 %v1602
        %v2608 = vunpack.c.l.b16 %v1603
        %v2609 = vunpack.c.l.b16 %v1604
        %v2610 = vunpack.c.h.b16 %v1604
        %v2611 = vunpack.c.l.b16 %v1605
        %v2612 = vunpack.c.h.b16 %v1605
        %v2613 = vunpack.c.l.b16 %v1606
        %v2614 = vunpack.c.h.b16 %v1606
        %v2615 = vunpack.c.l.b16 %v1607
        %v2616 = vunpack.c.l.b16 %v1608
        %v2617 = vunpack.c.h.b16 %v1608
        %v2618 = vunpack.c.l.b16 %v1609
        %v2619 = vunpack.c.h.b16 %v1609
        %v2620 = vunpack.c.l.b16 %v1610
        %v2621 = vunpack.c.h.b16 %v1610
        %v2622 = vunpack.c.l.b16 %v1611
        %v2623 = vunpack.c.l.b16 %v1612
        %v2624 = vunpack.c.h.b16 %v1612
        %v2625 = vunpack.c.l.b16 %v1613
        %v2626 = vunpack.c.h.b16 %v1613
        %v2627 = vunpack.c.l.b16 %v1614
        %v2628 = vunpack.c.h.b16 %v1614
        %v2629 = vunpack.c.l.b16 %v1615
        %v2630 = vunpack.c.l.b16 %v1616
        %v2631 = vunpack.c.h.b16 %v1616
        %v2632 = vunpack.c.l.b16 %v1617
        %v2633 = vunpack.c.h.b16 %v1617
        %v2634 = vunpack.c.l.b16 %v1618
        %v2635 = vunpack.c.h.b16 %v1618
        %v2636 = vunpack.c.l.b16 %v1619
        %v2637 = vunpack.c.l.b16 %v1620
        %v2638 = vunpack.c.h.b16 %v1620
        %v2639 = vunpack.c.l.b16 %v1621
        %v2640 = vunpack.c.h.b16 %v1621
        %v2641 = vunpack.c.l.b16 %v1622
        %v2642 = vunpack.c.h.b16 %v1622
        %v2643 = vunpack.c.l.b16 %v1623
        %v2644 = vunpack.c.l.b16 %v1624
        %v2645 = vunpack.c.h.b16 %v1624
        %v2646 = vunpack.c.l.b16 %v1625
        %v2647 = vunpack.c.h.b16 %v1625
        %v2648 = vunpack.c.l.b16 %v1626
        %v2649 = vunpack.c.h.b16 %v1626
        %v2650 = vunpack.c.l.b16 %v1627
        %v2651 = vunpack.c.l.b16 %v1628
        %v2652 = vunpack.c.h.b16 %v1628
        %v2653 = vunpack.c.l.b16 %v1629
        %v2654 = vunpack.c.h.b16 %v1629
        %v2655 = vunpack.c.l.b16 %v1630
        %v2656 = vunpack.c.h.b16 %v1630
        %v2657 = vunpack.c.l.b16 %v1631
        %v2658 = vunpack.c.l.b16 %v1632
        %v2659 = vunpack.c.h.b16 %v1632
        %v2660 = vunpack.c.l.b16 %v1633
        %v2661 = vunpack.c.h.b16 %v1633
        %v2662 = vunpack.c.l.b16 %v1634
        %v2663 = vunpack.c.h.b16 %v1634
        %v2664 = vunpack.c.l.b16 %v1635
        %v2665 = vunpack.c.l.b16 %v1636
        %v2666 = vunpack.c.h.b16 %v1636
        %v2667 = vunpack.c.l.b16 %v1637
        %v2668 = vunpack.c.h.b16 %v1637
        %v2669 = vunpack.c.l.b16 %v1638
        %v2670 = vunpack.c.h.b16 %v1638
        %v2671 = vunpack.c.l.b16 %v1639
        %v2672 = vunpack.c.l.b16 %v1640
        %v2673 = vunpack.c.h.b16 %v1640
        %v2674 = vunpack.c.l.b16 %v1641
        %v2675 = vunpack.c.h.b16 %v1641
        %v2676 = vunpack.c.l.b16 %v1642
        %v2677 = vunpack.c.h.b16 %v1642
        %v2678 = vunpack.c.l.b16 %v1643
        %v2679 = vunpack.c.l.b16 %v1644
        %v2680 = vunpack.c.h.b16 %v1644
        %v2681 = vunpack.c.l.b16 %v1645
        %v2682 = vunpack.c.h.b16 %v1645
        %v2683 = vunpack.c.l.b16 %v1646
        %v2684 = vunpack.c.h.b16 %v1646
        %v2685 = vunpack.c.l.b16 %v1647
        %v2686 = vunpack.c.l.b16 %v1648
        %v2687 = vunpack.c.h.b16 %v1648
        %v2688 = vunpack.c.l.b16 %v1649
        %v2689 = vunpack.c.h.b16 %v1649
        %v2690 = vunpack.c.l.b16 %v1650
        %v2691 = vunpack.c.h.b16 %v1650
        %v2692 = vunpack.c.l.b16 %v1651
        %v2693 = vunpack.c.l.b16 %v1652
        %v2694 = vunpack.c.h.b16 %v1652
        %v2695 = vunpack.c.l.b16 %v1653
        %v2696 = vunpack.c.h.b16 %v1653
        %v2697 = vunpack.c.l.b16 %v1654
        %v2698 = vunpack.c.h.b16 %v1654
        %v2699 = vunpack.c.l.b16 %v1655
        %v2700 = vunpack.c.l.b16 %v1656
        %v2701 = vunpack.c.h.b16 %v1656
        %v2702 = vunpack.c.l.b16 %v1657
        %v2703 = vunpack.c.h.b16 %v1657
        %v2704 = vunpack.c.l.b16 %v1658
        %v2705 = vunpack.c.h.b16 %v1658
        %v2706 = vunpack.c.l.b16 %v1659
        %v2707 = vunpack.c.l.b16 %v1660
        %v2708 = vunpack.c.h.b16 %v1660
        %v2709 = vunpack.c.l.b16 %v1661
        %v2710 = vunpack.c.h.b16 %v1661
        %v2711 = vunpack.c.l.b16 %v1662
        %v2712 = vunpack.c.h.b16 %v1662
        %v2713 = vunpack.c.l.b16 %v1663
        %v2714 = vunpack.c.l.b16 %v1664
        %v2715 = vunpack.c.h.b16 %v1664
        %v2716 = vunpack.c.l.b16 %v1665
        %v2717 = vunpack.c.h.b16 %v1665
        %v2718 = vunpack.c.l.b16 %v1666
        %v2719 = vunpack.c.h.b16 %v1666
        %v2720 = vunpack.c.l.b16 %v1667
        %v2721 = vunpack.c.l.b16 %v1668
        %v2722 = vunpack.c.h.b16 %v1668
        %v2723 = vunpack.c.l.b16 %v1669
        %v2724 = vunpack.c.h.b16 %v1669
        %v2725 = vunpack.c.l.b16 %v1670
        %v2726 = vunpack.c.h.b16 %v1670
        %v2727 = vunpack.c.l.b16 %v1671
        %v2728 = vunpack.c.l.b16 %v1672
        %v2729 = vunpack.c.h.b16 %v1672
        %v2730 = vunpack.c.l.b16 %v1673
        %v2731 = vunpack.c.h.b16 %v1673
        %v2732 = vunpack.c.l.b16 %v1674
        %v2733 = vunpack.c.h.b16 %v1674
        %v2734 = vunpack.c.l.b16 %v1675
        %v2735 = vunpack.c.l.b16 %v1676
        %v2736 = vunpack.c.h.b16 %v1676
        %v2737 = vunpack.c.l.b16 %v1677
        %v2738 = vunpack.c.h.b16 %v1677
        %v2739 = vunpack.c.l.b16 %v1678
        %v2740 = vunpack.c.h.b16 %v1678
        %v2741 = vunpack.c.l.b16 %v1679
        %v2742 = vunpack.c.l.b16 %v1680
        %v2743 = vunpack.c.h.b16 %v1680
        %v2744 = vunpack.c.l.b16 %v1681
        %v2745 = vunpack.c.h.b16 %v1681
        %v2746 = vunpack.c.l.b16 %v1682
        %v2747 = vunpack.c.h.b16 %v1682
        %v2748 = vunpack.c.l.b16 %v1683
        %v2749 = vunpack.c.l.b16 %v1684
        %v2750 = vunpack.c.h.b16 %v1684
        %v2751 = vunpack.c.l.b16 %v1685
        %v2752 = vunpack.c.h.b16 %v1685
        %v2753 = vunpack.c.l.b16 %v1686
        %v2754 = vunpack.c.h.b16 %v1686
        %v2755 = vunpack.c.l.b16 %v1687
        %v2756 = vunpack.c.l.b16 %v1688
        %v2757 = vunpack.c.h.b16 %v1688
        %v2758 = vunpack.c.l.b16 %v1689
        %v2759 = vunpack.c.h.b16 %v1689
        %v2760 = vunpack.c.l.b16 %v1690
        %v2761 = vunpack.c.h.b16 %v1690
        %v2762 = vunpack.c.l.b16 %v1691
        %v2763 = vunpack.c.l.b16 %v1692
        %v2764 = vunpack.c.h.b16 %v1692
        %v2765 = vunpack.c.l.b16 %v1693
        %v2766 = vunpack.c.h.b16 %v1693
        %v2767 = vunpack.c.l.b16 %v1694
        %v2768 = vunpack.c.h.b16 %v1694
        %v2769 = vunpack.c.l.b16 %v1695
        %v2770 = vunpack.c.l.b16 %v1696
        %v2771 = vunpack.c.h.b16 %v1696
        %v2772 = vunpack.c.l.b16 %v1697
        %v2773 = vunpack.c.h.b16 %v1697
        %v2774 = vunpack.c.l.b16 %v1698
        %v2775 = vunpack.c.h.b16 %v1698
        %v2776 = vunpack.c.l.b16 %v1699
        %v2777 = vunpack.c.l.b16 %v1700
        %v2778 = vunpack.c.h.b16 %v1700
        %v2779 = vunpack.c.l.b16 %v1701
        %v2780 = vunpack.c.h.b16 %v1701
        %v2781 = vunpack.c.l.b16 %v1702
        %v2782 = vunpack.c.h.b16 %v1702
        %v2783 = vunpack.c.l.b16 %v1703
        %v2784 = vunpack.c.l.b16 %v1704
        %v2785 = vunpack.c.h.b16 %v1704
        %v2786 = vunpack.c.l.b16 %v1705
        %v2787 = vunpack.c.h.b16 %v1705
        %v2788 = vunpack.c.l.b16 %v1706
        %v2789 = vunpack.c.h.b16 %v1706
        %v2790 = vunpack.c.l.b16 %v1707
        %v2791 = vunpack.c.l.b16 %v1708
        %v2792 = vunpack.c.h.b16 %v1708
        %v2793 = vunpack.c.l.b16 %v1709
        %v2794 = vunpack.c.h.b16 %v1709
        %v2795 = vunpack.c.l.b16 %v1710
        %v2796 = vunpack.c.h.b16 %v1710
        %v2797 = vunpack.c.l.b16 %v1711
        %v2798 = vunpack.c.l.b16 %v1712
        %v2799 = vunpack.c.h.b16 %v1712
        %v2800 = vunpack.c.l.b16 %v1713
        %v2801 = vunpack.c.h.b16 %v1713
        %v2802 = vunpack.c.l.b16 %v1714
        %v2803 = vunpack.c.h.b16 %v1714
        %v2804 = vunpack.c.l.b16 %v1715
        %v2805 = vunpack.c.l.b16 %v1716
        %v2806 = vunpack.c.h.b16 %v1716
        %v2807 = vunpack.c.l.b16 %v1717
        %v2808 = vunpack.c.h.b16 %v1717
        %v2809 = vunpack.c.l.b16 %v1718
        %v2810 = vunpack.c.h.b16 %v1718
        %v2811 = vunpack.c.l.b16 %v1719
        %v2812 = vunpack.c.l.b16 %v1720
        %v2813 = vunpack.c.h.b16 %v1720
        %v2814 = vunpack.c.l.b16 %v1721
        %v2815 = vunpack.c.h.b16 %v1721
        %v2816 = vunpack.c.l.b16 %v1722
        %v2817 = vunpack.c.h.b16 %v1722
        %v2818 = vunpack.c.l.b16 %v1723
        %v2819 = vunpack.c.l.b16 %v1724
        %v2820 = vunpack.c.h.b16 %v1724
        %v2821 = vunpack.c.l.b16 %v1725
        %v2822 = vunpack.c.h.b16 %v1725
        %v2823 = vunpack.c.l.b16 %v1726
        %v2824 = vunpack.c.h.b16 %v1726
        %v2825 = vunpack.c.l.b16 %v1727
        %v2826 = vunpack.c.l.b16 %v1728
        %v2827 = vunpack.c.h.b16 %v1728
        %v2828 = vunpack.c.l.b16 %v1729
        %v2829 = vunpack.c.h.b16 %v1729
        %v2830 = vunpack.c.l.b16 %v1730
        %v2831 = vunpack.c.h.b16 %v1730
        %v2832 = vunpack.c.l.b16 %v1731
        %v2833 = vpack.c.b16 %v2140, %v2133
        %v2834 = vpack.c.b16 %v2141, %v2134
        %v2835 = vpack.c.b16 %v2142, %v2135
        %v2836 = vpack.c.b16 %v2143, %v2136
        %v2837 = vpack.c.b16 %v2144, %v2137
        %v2838 = vpack.c.b16 %v2145, %v2138
        %v2839 = vpack.c.b16 %v2146, %v2139
        %v2840 = vpack.c.b16 %v2154, %v2147
        %v2841 = vpack.c.b16 %v2155, %v2148
        %v2842 = vpack.c.b16 %v2156, %v2149
        %v2843 = vpack.c.b16 %v2157, %v2150
        %v2844 = vpack.c.b16 %v2158, %v2151
        %v2845 = vpack.c.b16 %v2159, %v2152
        %v2846 = vpack.c.b16 %v2160, %v2153
        %v2847 = vpack.c.b16 %v2168, %v2161
        %v2848 = vpack.c.b16 %v2169, %v2162
        %v2849 = vpack.c.b16 %v2170, %v2163
        %v2850 = vpack.c.b16 %v2171, %v2164
        %v2851 = vpack.c.b16 %v2172, %v2165
        %v2852 = vpack.c.b16 %v2173, %v2166
        %v2853 = vpack.c.b16 %v2174, %v2167
        %v2854 = vpack.c.b16 %v2182, %v2175
        %v2855 = vpack.c.b16 %v2183, %v2176
        %v2856 = vpack.c.b16 %v2184, %v2177
        %v2857 = vpack.c.b16 %v2185, %v2178
        %v2858 = vpack.c.b16 %v2186, %v2179
        %v2859 = vpack.c.b16 %v2187, %v2180
        %v2860 = vpack.c.b16 %v2188, %v2181
        %v2861 = vpack.c.b16 %v2196, %v2189
        %v2862 = vpack.c.b16 %v2197, %v2190
        %v2863 = vpack.c.b16 %v2198, %v2191
        %v2864 = vpack.c.b16 %v2199, %v2192
        %v2865 = vpack.c.b16 %v2200, %v2193
        %v2866 = vpack.c.b16 %v2201, %v2194
        %v2867 = vpack.c.b16 %v2202, %v2195
        %v2868 = vpack.c.b16 %v2210, %v2203
        %v2869 = vpack.c.b16 %v2211, %v2204
        %v2870 = vpack.c.b16 %v2212, %v2205
        %v2871 = vpack.c.b16 %v2213, %v2206
        %v2872 = vpack.c.b16 %v2214, %v2207
        %v2873 = vpack.c.b16 %v2215, %v2208
        %v2874 = vpack.c.b16 %v2216, %v2209
        %v2875 = vpack.c.b16 %v2224, %v2217
        %v2876 = vpack.c.b16 %v2225, %v2218
        %v2877 = vpack.c.b16 %v2226, %v2219
        %v2878 = vpack.c.b16 %v2227, %v2220
        %v2879 = vpack.c.b16 %v2228, %v2221
        %v2880 = vpack.c.b16 %v2229, %v2222
        %v2881 = vpack.c.b16 %v2230, %v2223
        %v2882 = vpack.c.b16 %v2238, %v2231
        %v2883 = vpack.c.b16 %v2239, %v2232
        %v2884 = vpack.c.b16 %v2240, %v2233
        %v2885 = vpack.c.b16 %v2241, %v2234
        %v2886 = vpack.c.b16 %v2242, %v2235
        %v2887 = vpack.c.b16 %v2243, %v2236
        %v2888 = vpack.c.b16 %v2244, %v2237
        %v2889 = vpack.c.b16 %v2252, %v2245
        %v2890 = vpack.c.b16 %v2253, %v2246
        %v2891 = vpack.c.b16 %v2254, %v2247
        %v2892 = vpack.c.b16 %v2255, %v2248
        %v2893 = vpack.c.b16 %v2256, %v2249
        %v2894 = vpack.c.b16 %v2257, %v2250
        %v2895 = vpack.c.b16 %v2258, %v2251
        %v2896 = vpack.c.b16 %v2266, %v2259
        %v2897 = vpack.c.b16 %v2267, %v2260
        %v2898 = vpack.c.b16 %v2268, %v2261
        %v2899 = vpack.c.b16 %v2269, %v2262
        %v2900 = vpack.c.b16 %v2270, %v2263
        %v2901 = vpack.c.b16 %v2271, %v2264
        %v2902 = vpack.c.b16 %v2272, %v2265
        %v2903 = vpack.c.b16 %v2280, %v2273
        %v2904 = vpack.c.b16 %v2281, %v2274
        %v2905 = vpack.c.b16 %v2282, %v2275
        %v2906 = vpack.c.b16 %v2283, %v2276
        %v2907 = vpack.c.b16 %v2284, %v2277
        %v2908 = vpack.c.b16 %v2285, %v2278
        %v2909 = vpack.c.b16 %v2286, %v2279
        %v2910 = vpack.c.b16 %v2294, %v2287
        %v2911 = vpack.c.b16 %v2295, %v2288
        %v2912 = vpack.c.b16 %v2296, %v2289
        %v2913 = vpack.c.b16 %v2297, %v2290
        %v2914 = vpack.c.b16 %v2298, %v2291
        %v2915 = vpack.c.b16 %v2299, %v2292
        %v2916 = vpack.c.b16 %v2300, %v2293
        %v2917 = vpack.c.b16 %v2308, %v2301
        %v2918 = vpack.c.b16 %v2309, %v2302
        %v2919 = vpack.c.b16 %v2310, %v2303
        %v2920 = vpack.c.b16 %v2311, %v2304
        %v2921 = vpack.c.b16 %v2312, %v2305
        %v2922 = vpack.c.b16 %v2313, %v2306
        %v2923 = vpack.c.b16 %v2314, %v2307
        %v2924 = vpack.c.b16 %v2322, %v2315
        %v2925 = vpack.c.b16 %v2323, %v2316
        %v2926 = vpack.c.b16 %v2324, %v2317
        %v2927 = vpack.c.b16 %v2325, %v2318
        %v2928 = vpack.c.b16 %v2326, %v2319
        %v2929 = vpack.c.b16 %v2327, %v2320
        %v2930 = vpack.c.b16 %v2328, %v2321
        %v2931 = vpack.c.b16 %v2336, %v2329
        %v2932 = vpack.c.b16 %v2337, %v2330
        %v2933 = vpack.c.b16 %v2338, %v2331
        %v2934 = vpack.c.b16 %v2339, %v2332
        %v2935 = vpack.c.b16 %v2340, %v2333
        %v2936 = vpack.c.b16 %v2341, %v2334
        %v2937 = vpack.c.b16 %v2342, %v2335
        %v2938 = vpack.c.b16 %v2350, %v2343
        %v2939 = vpack.c.b16 %v2351, %v2344
        %v2940 = vpack.c.b16 %v2352, %v2345
        %v2941 = vpack.c.b16 %v2353, %v2346
        %v2942 = vpack.c.b16 %v2354, %v2347
        %v2943 = vpack.c.b16 %v2355, %v2348
        %v2944 = vpack.c.b16 %v2356, %v2349
        %v2945 = vpack.c.b16 %v2364, %v2357
        %v2946 = vpack.c.b16 %v2365, %v2358
        %v2947 = vpack.c.b16 %v2366, %v2359
        %v2948 = vpack.c.b16 %v2367, %v2360
        %v2949 = vpack.c.b16 %v2368, %v2361
        %v2950 = vpack.c.b16 %v2369, %v2362
        %v2951 = vpack.c.b16 %v2370, %v2363
        %v2952 = vpack.c.b16 %v2378, %v2371
        %v2953 = vpack.c.b16 %v2379, %v2372
        %v2954 = vpack.c.b16 %v2380, %v2373
        %v2955 = vpack.c.b16 %v2381, %v2374
        %v2956 = vpack.c.b16 %v2382, %v2375
        %v2957 = vpack.c.b16 %v2383, %v2376
        %v2958 = vpack.c.b16 %v2384, %v2377
        %v2959 = vpack.c.b16 %v2392, %v2385
        %v2960 = vpack.c.b16 %v2393, %v2386
        %v2961 = vpack.c.b16 %v2394, %v2387
        %v2962 = vpack.c.b16 %v2395, %v2388
        %v2963 = vpack.c.b16 %v2396, %v2389
        %v2964 = vpack.c.b16 %v2397, %v2390
        %v2965 = vpack.c.b16 %v2398, %v2391
        %v2966 = vpack.c.b16 %v2406, %v2399
        %v2967 = vpack.c.b16 %v2407, %v2400
        %v2968 = vpack.c.b16 %v2408, %v2401
        %v2969 = vpack.c.b16 %v2409, %v2402
        %v2970 = vpack.c.b16 %v2410, %v2403
        %v2971 = vpack.c.b16 %v2411, %v2404
        %v2972 = vpack.c.b16 %v2412, %v2405
        %v2973 = vpack.c.b16 %v2420, %v2413
        %v2974 = vpack.c.b16 %v2421, %v2414
        %v2975 = vpack.c.b16 %v2422, %v2415
        %v2976 = vpack.c.b16 %v2423, %v2416
        %v2977 = vpack.c.b16 %v2424, %v2417
        %v2978 = vpack.c.b16 %v2425, %v2418
        %v2979 = vpack.c.b16 %v2426, %v2419
        %v2980 = vpack.c.b16 %v2434, %v2427
        %v2981 = vpack.c.b16 %v2435, %v2428
        %v2982 = vpack.c.b16 %v2436, %v2429
        %v2983 = vpack.c.b16 %v2437, %v2430
        %v2984 = vpack.c.b16 %v2438, %v2431
        %v2985 = vpack.c.b16 %v2439, %v2432
        %v2986 = vpack.c.b16 %v2440, %v2433
        %v2987 = vpack.c.b16 %v2448, %v2441
        %v2988 = vpack.c.b16 %v2449, %v2442
        %v2989 = vpack.c.b16 %v2450, %v2443
        %v2990 = vpack.c.b16 %v2451, %v2444
        %v2991 = vpack.c.b16 %v2452, %v2445
        %v2992 = vpack.c.b16 %v2453, %v2446
        %v2993 = vpack.c.b16 %v2454, %v2447
        %v2994 = vpack.c.b16 %v2462, %v2455
        %v2995 = vpack.c.b16 %v2463, %v2456
        %v2996 = vpack.c.b16 %v2464, %v2457
        %v2997 = vpack.c.b16 %v2465, %v2458
        %v2998 = vpack.c.b16 %v2466, %v2459
        %v2999 = vpack.c.b16 %v2467, %v2460
        %v3000 = vpack.c.b16 %v2468, %v2461
        %v3001 = vpack.c.b16 %v2476, %v2469
        %v3002 = vpack.c.b16 %v2477, %v2470
        %v3003 = vpack.c.b16 %v2478, %v2471
        %v3004 = vpack.c.b16 %v2479, %v2472
        %v3005 = vpack.c.b16 %v2480, %v2473
        %v3006 = vpack.c.b16 %v2481, %v2474
        %v3007 = vpack.c.b16 %v2482, %v2475
        %v3008 = vpack.c.b16 %v2490, %v2483
        %v3009 = vpack.c.b16 %v2491, %v2484
        %v3010 = vpack.c.b16 %v2492, %v2485
        %v3011 = vpack.c.b16 %v2493, %v2486
        %v3012 = vpack.c.b16 %v2494, %v2487
        %v3013 = vpack.c.b16 %v2495, %v2488
        %v3014 = vpack.c.b16 %v2496, %v2489
        %v3015 = vpack.c.b16 %v2504, %v2497
        %v3016 = vpack.c.b16 %v2505, %v2498
        %v3017 = vpack.c.b16 %v2506, %v2499
        %v3018 = vpack.c.b16 %v2507, %v2500
        %v3019 = vpack.c.b16 %v2508, %v2501
        %v3020 = vpack.c.b16 %v2509, %v2502
        %v3021 = vpack.c.b16 %v2510, %v2503
        %v3022 = vpack.c.b16 %v2518, %v2511
        %v3023 = vpack.c.b16 %v2519, %v2512
        %v3024 = vpack.c.b16 %v2520, %v2513
        %v3025 = vpack.c.b16 %v2521, %v2514
        %v3026 = vpack.c.b16 %v2522, %v2515
        %v3027 = vpack.c.b16 %v2523, %v2516
        %v3028 = vpack.c.b16 %v2524, %v2517
        %v3029 = vpack.c.b16 %v2532, %v2525
        %v3030 = vpack.c.b16 %v2533, %v2526
        %v3031 = vpack.c.b16 %v2534, %v2527
        %v3032 = vpack.c.b16 %v2535, %v2528
        %v3033 = vpack.c.b16 %v2536, %v2529
        %v3034 = vpack.c.b16 %v2537, %v2530
        %v3035 = vpack.c.b16 %v2538, %v2531
        %v3036 = vpack.c.b16 %v2546, %v2539
        %v3037 = vpack.c.b16 %v2547, %v2540
        %v3038 = vpack.c.b16 %v2548, %v2541
        %v3039 = vpack.c.b16 %v2549, %v2542
        %v3040 = vpack.c.b16 %v2550, %v2543
        %v3041 = vpack.c.b16 %v2551, %v2544
        %v3042 = vpack.c.b16 %v2552, %v2545
        %v3043 = vpack.c.b16 %v2560, %v2553
        %v3044 = vpack.c.b16 %v2561, %v2554
        %v3045 = vpack.c.b16 %v2562, %v2555
        %v3046 = vpack.c.b16 %v2563, %v2556
        %v3047 = vpack.c.b16 %v2564, %v2557
        %v3048 = vpack.c.b16 %v2565, %v2558
        %v3049 = vpack.c.b16 %v2566, %v2559
        %v3050 = vpack.c.b16 %v2574, %v2567
        %v3051 = vpack.c.b16 %v2575, %v2568
        %v3052 = vpack.c.b16 %v2576, %v2569
        %v3053 = vpack.c.b16 %v2577, %v2570
        %v3054 = vpack.c.b16 %v2578, %v2571
        %v3055 = vpack.c.b16 %v2579, %v2572
        %v3056 = vpack.c.b16 %v2580, %v2573
        %v3057 = vpack.c.b16 %v2588, %v2581
        %v3058 = vpack.c.b16 %v2589, %v2582
        %v3059 = vpack.c.b16 %v2590, %v2583
        %v3060 = vpack.c.b16 %v2591, %v2584
        %v3061 = vpack.c.b16 %v2592, %v2585
        %v3062 = vpack.c.b16 %v2593, %v2586
        %v3063 = vpack.c.b16 %v2594, %v2587
        %v3064 = vpack.c.b16 %v2602, %v2595
        %v3065 = vpack.c.b16 %v2603, %v2596
        %v3066 = vpack.c.b16 %v2604, %v2597
        %v3067 = vpack.c.b16 %v2605, %v2598
        %v3068 = vpack.c.b16 %v2606, %v2599
        %v3069 = vpack.c.b16 %v2607, %v2600
        %v3070 = vpack.c.b16 %v2608, %v2601
        %v3071 = vpack.c.b16 %v2616, %v2609
        %v3072 = vpack.c.b16 %v2617, %v2610
        %v3073 = vpack.c.b16 %v2618, %v2611
        %v3074 = vpack.c.b16 %v2619, %v2612
        %v3075 = vpack.c.b16 %v2620, %v2613
        %v3076 = vpack.c.b16 %v2621, %v2614
        %v3077 = vpack.c.b16 %v2622, %v2615
        %v3078 = vpack.c.b16 %v2630, %v2623
        %v3079 = vpack.c.b16 %v2631, %v2624
        %v3080 = vpack.c.b16 %v2632, %v2625
        %v3081 = vpack.c.b16 %v2633, %v2626
        %v3082 = vpack.c.b16 %v2634, %v2627
        %v3083 = vpack.c.b16 %v2635, %v2628
        %v3084 = vpack.c.b16 %v2636, %v2629
        %v3085 = vpack.c.b16 %v2644, %v2637
        %v3086 = vpack.c.b16 %v2645, %v2638
        %v3087 = vpack.c.b16 %v2646, %v2639
        %v3088 = vpack.c.b16 %v2647, %v2640
        %v3089 = vpack.c.b16 %v2648, %v2641
        %v3090 = vpack.c.b16 %v2649, %v2642
        %v3091 = vpack.c.b16 %v2650, %v2643
        %v3092 = vpack.c.b16 %v2658, %v2651
        %v3093 = vpack.c.b16 %v2659, %v2652
        %v3094 = vpack.c.b16 %v2660, %v2653
        %v3095 = vpack.c.b16 %v2661, %v2654
        %v3096 = vpack.c.b16 %v2662, %v2655
        %v3097 = vpack.c.b16 %v2663, %v2656
        %v3098 = vpack.c.b16 %v2664, %v2657
        %v3099 = vpack.c.b16 %v2672, %v2665
        %v3100 = vpack.c.b16 %v2673, %v2666
        %v3101 = vpack.c.b16 %v2674, %v2667
        %v3102 = vpack.c.b16 %v2675, %v2668
        %v3103 = vpack.c.b16 %v2676, %v2669
        %v3104 = vpack.c.b16 %v2677, %v2670
        %v3105 = vpack.c.b16 %v2678, %v2671
        %v3106 = vpack.c.b16 %v2686, %v2679
        %v3107 = vpack.c.b16 %v2687, %v2680
        %v3108 = vpack.c.b16 %v2688, %v2681
        %v3109 = vpack.c.b16 %v2689, %v2682
        %v3110 = vpack.c.b16 %v2690, %v2683
        %v3111 = vpack.c.b16 %v2691, %v2684
        %v3112 = vpack.c.b16 %v2692, %v2685
        %v3113 = vpack.c.b16 %v2700, %v2693
        %v3114 = vpack.c.b16 %v2701, %v2694
        %v3115 = vpack.c.b16 %v2702, %v2695
        %v3116 = vpack.c.b16 %v2703, %v2696
        %v3117 = vpack.c.b16 %v2704, %v2697
        %v3118 = vpack.c.b16 %v2705, %v2698
        %v3119 = vpack.c.b16 %v2706, %v2699
        %v3120 = vpack.c.b16 %v2714, %v2707
        %v3121 = vpack.c.b16 %v2715, %v2708
        %v3122 = vpack.c.b16 %v2716, %v2709
        %v3123 = vpack.c.b16 %v2717, %v2710
        %v3124 = vpack.c.b16 %v2718, %v2711
        %v3125 = vpack.c.b16 %v2719, %v2712
        %v3126 = vpack.c.b16 %v2720, %v2713
        %v3127 = vpack.c.b16 %v2728, %v2721
        %v3128 = vpack.c.b16 %v2729, %v2722
        %v3129 = vpack.c.b16 %v2730, %v2723
        %v3130 = vpack.c.b16 %v2731, %v2724
        %v3131 = vpack.c.b16 %v2732, %v2725
        %v3132 = vpack.c.b16 %v2733, %v2726
        %v3133 = vpack.c.b16 %v2734, %v2727
        %v3134 = vpack.c.b16 %v2742, %v2735
        %v3135 = vpack.c.b16 %v2743, %v2736
        %v3136 = vpack.c.b16 %v2744, %v2737
        %v3137 = vpack.c.b16 %v2745, %v2738
        %v3138 = vpack.c.b16 %v2746, %v2739
        %v3139 = vpack.c.b16 %v2747, %v2740
        %v3140 = vpack.c.b16 %v2748, %v2741
        %v3141 = vpack.c.b16 %v2756, %v2749
        %v3142 = vpack.c.b16 %v2757, %v2750
        %v3143 = vpack.c.b16 %v2758, %v2751
        %v3144 = vpack.c.b16 %v2759, %v2752
        %v3145 = vpack.c.b16 %v2760, %v2753
        %v3146 = vpack.c.b16 %v2761, %v2754
        %v3147 = vpack.c.b16 %v2762, %v2755
        %v3148 = vpack.c.b16 %v2770, %v2763
        %v3149 = vpack.c.b16 %v2771, %v2764
        %v3150 = vpack.c.b16 %v2772, %v2765
        %v3151 = vpack.c.b16 %v2773, %v2766
        %v3152 = vpack.c.b16 %v2774, %v2767
        %v3153 = vpack.c.b16 %v2775, %v2768
        %v3154 = vpack.c.b16 %v2776, %v2769
        %v3155 = vpack.c.b16 %v2784, %v2777
        %v3156 = vpack.c.b16 %v2785, %v2778
        %v3157 = vpack.c.b16 %v2786, %v2779
        %v3158 = vpack.c.b16 %v2787, %v2780
        %v3159 = vpack.c.b16 %v2788, %v2781
        %v3160 = vpack.c.b16 %v2789, %v2782
        %v3161 = vpack.c.b16 %v2790, %v2783
        %v3162 = vpack.c.b16 %v2798, %v2791
        %v3163 = vpack.c.b16 %v2799, %v2792
        %v3164 = vpack.c.b16 %v2800, %v2793
        %v3165 = vpack.c.b16 %v2801, %v2794
        %v3166 = vpack.c.b16 %v2802, %v2795
        %v3167 = vpack.c.b16 %v2803, %v2796
        %v3168 = vpack.c.b16 %v2804, %v2797
        %v3169 = vpack.c.b16 %v2812, %v2805
        %v3170 = vpack.c.b16 %v2813, %v2806
        %v3171 = vpack.c.b16 %v2814, %v2807
        %v3172 = vpack.c.b16 %v2815, %v2808
        %v3173 = vpack.c.b16 %v2816, %v2809
        %v3174 = vpack.c.b16 %v2817, %v2810
        %v3175 = vpack.c.b16 %v2818, %v2811
        %v3176 = vpack.c.b16 %v2826, %v2819
        %v3177 = vpack.c.b16 %v2827, %v2820
        %v3178 = vpack.c.b16 %v2828, %v2821
        %v3179 = vpack.c.b16 %v2829, %v2822
        %v3180 = vpack.c.b16 %v2830, %v2823
        %v3181 = vpack.c.b16 %v2831, %v2824
        %v3182 = vpack.c.b16 %v2832, %v2825
        %v3534 = vperm.slane %v1732, 0
        %v3535 = vperm.slane %v1732, 1
        %v3536 = vperm.slane %v1732, 2
        %v3537 = vperm.slane %v1732, 3
        %v3538 = vperm.slane %v1732, 4
        %v3539 = vperm.slane %v1732, 5
        %v3540 = vperm.slane %v1732, 6
        %vm3548 = vcmask 261120
        %v3550 = vsel %vm3548, %v1331, 0
        %3552 = vmatpush.bf16.msra.mxu0 %v2882
        %3553 = vmatpush.bf16.msra.mxu0 %v2875
        %3554 = vmatpush.bf16.msra.mxu0 %v2868
        %3555 = vmatpush.bf16.msra.mxu0 %v2861
        %3556 = vmatpush.bf16.msra.mxu0 %v2854
        %3557 = vmatpush.bf16.msra.mxu0 %v2847
        %3558 = vmatpush.bf16.msra.mxu0 %v2840
        %3559 = vmatpush.bf16.msra.mxu0 %v2833
        %3560 = vmatmul.bf16.gmra.mxu0 %v1325
        %v3561 = vpop.f32.mrf.mxu0
        %v3562 = vadd.f32 %v3534, %v3561
        %v3563 = vpop.f32.mrf.mxu0
        %3564 = vdwg.mxu0
        %3565 = vmatpush.bf16.msra.mxu0 %v2938
        %3566 = vmatpush.bf16.msra.mxu0 %v2931
        %3567 = vmatpush.bf16.msra.mxu0 %v2924
        %3568 = vmatpush.bf16.msra.mxu0 %v2917
        %3569 = vmatpush.bf16.msra.mxu0 %v2910
        %3570 = vmatpush.bf16.msra.mxu0 %v2903
        %3571 = vmatpush.bf16.msra.mxu0 %v2896
        %3572 = vmatpush.bf16.msra.mxu0 %v2889
        %3573 = vmatmul.bf16.gmra.mxu0 %v1326
        %v3574 = vpop.f32.mrf.mxu0
        %v3575 = vadd.f32 %v3562, %v3574
        %v3576 = vpop.f32.mrf.mxu0
        %3577 = vdwg.mxu0
        %3578 = vmatpush.bf16.msra.mxu0 %v2994
        %3579 = vmatpush.bf16.msra.mxu0 %v2987
        %3580 = vmatpush.bf16.msra.mxu0 %v2980
        %3581 = vmatpush.bf16.msra.mxu0 %v2973
        %3582 = vmatpush.bf16.msra.mxu0 %v2966
        %3583 = vmatpush.bf16.msra.mxu0 %v2959
        %3584 = vmatpush.bf16.msra.mxu0 %v2952
        %3585 = vmatpush.bf16.msra.mxu0 %v2945
        %3586 = vmatmul.bf16.gmra.mxu0 %v1327
        %v3587 = vpop.f32.mrf.mxu0
        %v3588 = vadd.f32 %v3575, %v3587
        %v3589 = vpop.f32.mrf.mxu0
        %3590 = vdwg.mxu0
        %3591 = vmatpush.bf16.msra.mxu0 %v3050
        %3592 = vmatpush.bf16.msra.mxu0 %v3043
        %3593 = vmatpush.bf16.msra.mxu0 %v3036
        %3594 = vmatpush.bf16.msra.mxu0 %v3029
        %3595 = vmatpush.bf16.msra.mxu0 %v3022
        %3596 = vmatpush.bf16.msra.mxu0 %v3015
        %3597 = vmatpush.bf16.msra.mxu0 %v3008
        %3598 = vmatpush.bf16.msra.mxu0 %v3001
        %3599 = vmatmul.bf16.gmra.mxu0 %v1328
        %v3600 = vpop.f32.mrf.mxu0
        %v3601 = vadd.f32 %v3588, %v3600
        %v3602 = vpop.f32.mrf.mxu0
        %3603 = vdwg.mxu0
        %3604 = vmatpush.bf16.msra.mxu0 %v3106
        %3605 = vmatpush.bf16.msra.mxu0 %v3099
        %3606 = vmatpush.bf16.msra.mxu0 %v3092
        %3607 = vmatpush.bf16.msra.mxu0 %v3085
        %3608 = vmatpush.bf16.msra.mxu0 %v3078
        %3609 = vmatpush.bf16.msra.mxu0 %v3071
        %3610 = vmatpush.bf16.msra.mxu0 %v3064
        %3611 = vmatpush.bf16.msra.mxu0 %v3057
        %3612 = vmatmul.bf16.gmra.mxu0 %v1329
        %v3613 = vpop.f32.mrf.mxu0
        %v3614 = vadd.f32 %v3601, %v3613
        %v3615 = vpop.f32.mrf.mxu0
        %3616 = vdwg.mxu0
        %3617 = vmatpush.bf16.msra.mxu0 %v3162
        %3618 = vmatpush.bf16.msra.mxu0 %v3155
        %3619 = vmatpush.bf16.msra.mxu0 %v3148
        %3620 = vmatpush.bf16.msra.mxu0 %v3141
        %3621 = vmatpush.bf16.msra.mxu0 %v3134
        %3622 = vmatpush.bf16.msra.mxu0 %v3127
        %3623 = vmatpush.bf16.msra.mxu0 %v3120
        %3624 = vmatpush.bf16.msra.mxu0 %v3113
        %3625 = vmatmul.bf16.gmra.mxu0 %v1330
        %v3626 = vpop.f32.mrf.mxu0
        %v3627 = vadd.f32 %v3614, %v3626
        %v3628 = vpop.f32.mrf.mxu0
        %3629 = vdwg.mxu0
        %3630 = vmatpush.bf16.msra.mxu0 0
        %3631 = vmatpush.bf16.msra.mxu0 0
        %3632 = vmatpush.bf16.msra.mxu0 0
        %3633 = vmatpush.bf16.msra.mxu0 0
        %3634 = vmatpush.bf16.msra.mxu0 0
        %3635 = vmatpush.bf16.msra.mxu0 0
        %3636 = vmatpush.bf16.msra.mxu0 %v3176
        %3637 = vmatpush.bf16.msra.mxu0 %v3169
        %3638 = vmatmul.bf16.gmra.mxu0 %v3550
        %v3639 = vpop.f32.mrf.mxu0
        %v3640 = vadd.f32 %v3627, %v3639
        %v3641 = vpop.f32.mrf.mxu0
        %3642 = vdwg.mxu0
        %3643 = vmatpush.bf16.msra.mxu0 %v2883
        %3644 = vmatpush.bf16.msra.mxu0 %v2876
        %3645 = vmatpush.bf16.msra.mxu0 %v2869
        %3646 = vmatpush.bf16.msra.mxu0 %v2862
        %3647 = vmatpush.bf16.msra.mxu0 %v2855
        %3648 = vmatpush.bf16.msra.mxu0 %v2848
        %3649 = vmatpush.bf16.msra.mxu0 %v2841
        %3650 = vmatpush.bf16.msra.mxu0 %v2834
        %3651 = vmatmul.bf16.gmra.mxu0 %v1325
        %v3652 = vpop.f32.mrf.mxu0
        %v3653 = vadd.f32 %v3535, %v3652
        %v3654 = vpop.f32.mrf.mxu0
        %3655 = vdwg.mxu0
        %3656 = vmatpush.bf16.msra.mxu0 %v2939
        %3657 = vmatpush.bf16.msra.mxu0 %v2932
        %3658 = vmatpush.bf16.msra.mxu0 %v2925
        %3659 = vmatpush.bf16.msra.mxu0 %v2918
        %3660 = vmatpush.bf16.msra.mxu0 %v2911
        %3661 = vmatpush.bf16.msra.mxu0 %v2904
        %3662 = vmatpush.bf16.msra.mxu0 %v2897
        %3663 = vmatpush.bf16.msra.mxu0 %v2890
        %3664 = vmatmul.bf16.gmra.mxu0 %v1326
        %v3665 = vpop.f32.mrf.mxu0
        %v3666 = vadd.f32 %v3653, %v3665
        %v3667 = vpop.f32.mrf.mxu0
        %3668 = vdwg.mxu0
        %3669 = vmatpush.bf16.msra.mxu0 %v2995
        %3670 = vmatpush.bf16.msra.mxu0 %v2988
        %3671 = vmatpush.bf16.msra.mxu0 %v2981
        %3672 = vmatpush.bf16.msra.mxu0 %v2974
        %3673 = vmatpush.bf16.msra.mxu0 %v2967
        %3674 = vmatpush.bf16.msra.mxu0 %v2960
        %3675 = vmatpush.bf16.msra.mxu0 %v2953
        %3676 = vmatpush.bf16.msra.mxu0 %v2946
        %3677 = vmatmul.bf16.gmra.mxu0 %v1327
        %v3678 = vpop.f32.mrf.mxu0
        %v3679 = vadd.f32 %v3666, %v3678
        %v3680 = vpop.f32.mrf.mxu0
        %3681 = vdwg.mxu0
        %3682 = vmatpush.bf16.msra.mxu0 %v3051
        %3683 = vmatpush.bf16.msra.mxu0 %v3044
        %3684 = vmatpush.bf16.msra.mxu0 %v3037
        %3685 = vmatpush.bf16.msra.mxu0 %v3030
        %3686 = vmatpush.bf16.msra.mxu0 %v3023
        %3687 = vmatpush.bf16.msra.mxu0 %v3016
        %3688 = vmatpush.bf16.msra.mxu0 %v3009
        %3689 = vmatpush.bf16.msra.mxu0 %v3002
        %3690 = vmatmul.bf16.gmra.mxu0 %v1328
        %v3691 = vpop.f32.mrf.mxu0
        %v3692 = vadd.f32 %v3679, %v3691
        %v3693 = vpop.f32.mrf.mxu0
        %3694 = vdwg.mxu0
        %3695 = vmatpush.bf16.msra.mxu0 %v3107
        %3696 = vmatpush.bf16.msra.mxu0 %v3100
        %3697 = vmatpush.bf16.msra.mxu0 %v3093
        %3698 = vmatpush.bf16.msra.mxu0 %v3086
        %3699 = vmatpush.bf16.msra.mxu0 %v3079
        %3700 = vmatpush.bf16.msra.mxu0 %v3072
        %3701 = vmatpush.bf16.msra.mxu0 %v3065
        %3702 = vmatpush.bf16.msra.mxu0 %v3058
        %3703 = vmatmul.bf16.gmra.mxu0 %v1329
        %v3704 = vpop.f32.mrf.mxu0
        %v3705 = vadd.f32 %v3692, %v3704
        %v3706 = vpop.f32.mrf.mxu0
        %3707 = vdwg.mxu0
        %3708 = vmatpush.bf16.msra.mxu0 %v3163
        %3709 = vmatpush.bf16.msra.mxu0 %v3156
        %3710 = vmatpush.bf16.msra.mxu0 %v3149
        %3711 = vmatpush.bf16.msra.mxu0 %v3142
        %3712 = vmatpush.bf16.msra.mxu0 %v3135
        %3713 = vmatpush.bf16.msra.mxu0 %v3128
        %3714 = vmatpush.bf16.msra.mxu0 %v3121
        %3715 = vmatpush.bf16.msra.mxu0 %v3114
        %3716 = vmatmul.bf16.gmra.mxu0 %v1330
        %v3717 = vpop.f32.mrf.mxu0
        %v3718 = vadd.f32 %v3705, %v3717
        %v3719 = vpop.f32.mrf.mxu0
        %3720 = vdwg.mxu0
        %3721 = vmatpush.bf16.msra.mxu0 0
        %3722 = vmatpush.bf16.msra.mxu0 0
        %3723 = vmatpush.bf16.msra.mxu0 0
        %3724 = vmatpush.bf16.msra.mxu0 0
        %3725 = vmatpush.bf16.msra.mxu0 0
        %3726 = vmatpush.bf16.msra.mxu0 0
        %3727 = vmatpush.bf16.msra.mxu0 %v3177
        %3728 = vmatpush.bf16.msra.mxu0 %v3170
        %3729 = vmatmul.bf16.gmra.mxu0 %v3550
        %v3730 = vpop.f32.mrf.mxu0
        %v3731 = vadd.f32 %v3718, %v3730
        %v3732 = vpop.f32.mrf.mxu0
        %3733 = vdwg.mxu0
        %3734 = vmatpush.bf16.msra.mxu0 %v2884
        %3735 = vmatpush.bf16.msra.mxu0 %v2877
        %3736 = vmatpush.bf16.msra.mxu0 %v2870
        %3737 = vmatpush.bf16.msra.mxu0 %v2863
        %3738 = vmatpush.bf16.msra.mxu0 %v2856
        %3739 = vmatpush.bf16.msra.mxu0 %v2849
        %3740 = vmatpush.bf16.msra.mxu0 %v2842
        %3741 = vmatpush.bf16.msra.mxu0 %v2835
        %3742 = vmatmul.bf16.gmra.mxu0 %v1325
        %v3743 = vpop.f32.mrf.mxu0
        %v3744 = vadd.f32 %v3536, %v3743
        %v3745 = vpop.f32.mrf.mxu0
        %3746 = vdwg.mxu0
        %3747 = vmatpush.bf16.msra.mxu0 %v2940
        %3748 = vmatpush.bf16.msra.mxu0 %v2933
        %3749 = vmatpush.bf16.msra.mxu0 %v2926
        %3750 = vmatpush.bf16.msra.mxu0 %v2919
        %3751 = vmatpush.bf16.msra.mxu0 %v2912
        %3752 = vmatpush.bf16.msra.mxu0 %v2905
        %3753 = vmatpush.bf16.msra.mxu0 %v2898
        %3754 = vmatpush.bf16.msra.mxu0 %v2891
        %3755 = vmatmul.bf16.gmra.mxu0 %v1326
        %v3756 = vpop.f32.mrf.mxu0
        %v3757 = vadd.f32 %v3744, %v3756
        %v3758 = vpop.f32.mrf.mxu0
        %3759 = vdwg.mxu0
        %3760 = vmatpush.bf16.msra.mxu0 %v2996
        %3761 = vmatpush.bf16.msra.mxu0 %v2989
        %3762 = vmatpush.bf16.msra.mxu0 %v2982
        %3763 = vmatpush.bf16.msra.mxu0 %v2975
        %3764 = vmatpush.bf16.msra.mxu0 %v2968
        %3765 = vmatpush.bf16.msra.mxu0 %v2961
        %3766 = vmatpush.bf16.msra.mxu0 %v2954
        %3767 = vmatpush.bf16.msra.mxu0 %v2947
        %3768 = vmatmul.bf16.gmra.mxu0 %v1327
        %v3769 = vpop.f32.mrf.mxu0
        %v3770 = vadd.f32 %v3757, %v3769
        %v3771 = vpop.f32.mrf.mxu0
        %3772 = vdwg.mxu0
        %3773 = vmatpush.bf16.msra.mxu0 %v3052
        %3774 = vmatpush.bf16.msra.mxu0 %v3045
        %3775 = vmatpush.bf16.msra.mxu0 %v3038
        %3776 = vmatpush.bf16.msra.mxu0 %v3031
        %3777 = vmatpush.bf16.msra.mxu0 %v3024
        %3778 = vmatpush.bf16.msra.mxu0 %v3017
        %3779 = vmatpush.bf16.msra.mxu0 %v3010
        %3780 = vmatpush.bf16.msra.mxu0 %v3003
        %3781 = vmatmul.bf16.gmra.mxu0 %v1328
        %v3782 = vpop.f32.mrf.mxu0
        %v3783 = vadd.f32 %v3770, %v3782
        %v3784 = vpop.f32.mrf.mxu0
        %3785 = vdwg.mxu0
        %3786 = vmatpush.bf16.msra.mxu0 %v3108
        %3787 = vmatpush.bf16.msra.mxu0 %v3101
        %3788 = vmatpush.bf16.msra.mxu0 %v3094
        %3789 = vmatpush.bf16.msra.mxu0 %v3087
        %3790 = vmatpush.bf16.msra.mxu0 %v3080
        %3791 = vmatpush.bf16.msra.mxu0 %v3073
        %3792 = vmatpush.bf16.msra.mxu0 %v3066
        %3793 = vmatpush.bf16.msra.mxu0 %v3059
        %3794 = vmatmul.bf16.gmra.mxu0 %v1329
        %v3795 = vpop.f32.mrf.mxu0
        %v3796 = vadd.f32 %v3783, %v3795
        %v3797 = vpop.f32.mrf.mxu0
        %3798 = vdwg.mxu0
        %3799 = vmatpush.bf16.msra.mxu0 %v3164
        %3800 = vmatpush.bf16.msra.mxu0 %v3157
        %3801 = vmatpush.bf16.msra.mxu0 %v3150
        %3802 = vmatpush.bf16.msra.mxu0 %v3143
        %3803 = vmatpush.bf16.msra.mxu0 %v3136
        %3804 = vmatpush.bf16.msra.mxu0 %v3129
        %3805 = vmatpush.bf16.msra.mxu0 %v3122
        %3806 = vmatpush.bf16.msra.mxu0 %v3115
        %3807 = vmatmul.bf16.gmra.mxu0 %v1330
        %v3808 = vpop.f32.mrf.mxu0
        %v3809 = vadd.f32 %v3796, %v3808
        %v3810 = vpop.f32.mrf.mxu0
        %3811 = vdwg.mxu0
        %3812 = vmatpush.bf16.msra.mxu0 0
        %3813 = vmatpush.bf16.msra.mxu0 0
        %3814 = vmatpush.bf16.msra.mxu0 0
        %3815 = vmatpush.bf16.msra.mxu0 0
        %3816 = vmatpush.bf16.msra.mxu0 0
        %3817 = vmatpush.bf16.msra.mxu0 0
        %3818 = vmatpush.bf16.msra.mxu0 %v3178
        %3819 = vmatpush.bf16.msra.mxu0 %v3171
        %3820 = vmatmul.bf16.gmra.mxu0 %v3550
        %v3821 = vpop.f32.mrf.mxu0
        %v3822 = vadd.f32 %v3809, %v3821
        %v3823 = vpop.f32.mrf.mxu0
        %3824 = vdwg.mxu0
        %3825 = vmatpush.bf16.msra.mxu0 %v2885
        %3826 = vmatpush.bf16.msra.mxu0 %v2878
        %3827 = vmatpush.bf16.msra.mxu0 %v2871
        %3828 = vmatpush.bf16.msra.mxu0 %v2864
        %3829 = vmatpush.bf16.msra.mxu0 %v2857
        %3830 = vmatpush.bf16.msra.mxu0 %v2850
        %3831 = vmatpush.bf16.msra.mxu0 %v2843
        %3832 = vmatpush.bf16.msra.mxu0 %v2836
        %3833 = vmatmul.bf16.gmra.mxu0 %v1325
        %v3834 = vpop.f32.mrf.mxu0
        %v3835 = vadd.f32 %v3537, %v3834
        %v3836 = vpop.f32.mrf.mxu0
        %3837 = vdwg.mxu0
        %3838 = vmatpush.bf16.msra.mxu0 %v2941
        %3839 = vmatpush.bf16.msra.mxu0 %v2934
        %3840 = vmatpush.bf16.msra.mxu0 %v2927
        %3841 = vmatpush.bf16.msra.mxu0 %v2920
        %3842 = vmatpush.bf16.msra.mxu0 %v2913
        %3843 = vmatpush.bf16.msra.mxu0 %v2906
        %3844 = vmatpush.bf16.msra.mxu0 %v2899
        %3845 = vmatpush.bf16.msra.mxu0 %v2892
        %3846 = vmatmul.bf16.gmra.mxu0 %v1326
        %v3847 = vpop.f32.mrf.mxu0
        %v3848 = vadd.f32 %v3835, %v3847
        %v3849 = vpop.f32.mrf.mxu0
        %3850 = vdwg.mxu0
        %3851 = vmatpush.bf16.msra.mxu0 %v2997
        %3852 = vmatpush.bf16.msra.mxu0 %v2990
        %3853 = vmatpush.bf16.msra.mxu0 %v2983
        %3854 = vmatpush.bf16.msra.mxu0 %v2976
        %3855 = vmatpush.bf16.msra.mxu0 %v2969
        %3856 = vmatpush.bf16.msra.mxu0 %v2962
        %3857 = vmatpush.bf16.msra.mxu0 %v2955
        %3858 = vmatpush.bf16.msra.mxu0 %v2948
        %3859 = vmatmul.bf16.gmra.mxu0 %v1327
        %v3860 = vpop.f32.mrf.mxu0
        %v3861 = vadd.f32 %v3848, %v3860
        %v3862 = vpop.f32.mrf.mxu0
        %3863 = vdwg.mxu0
        %3864 = vmatpush.bf16.msra.mxu0 %v3053
        %3865 = vmatpush.bf16.msra.mxu0 %v3046
        %3866 = vmatpush.bf16.msra.mxu0 %v3039
        %3867 = vmatpush.bf16.msra.mxu0 %v3032
        %3868 = vmatpush.bf16.msra.mxu0 %v3025
        %3869 = vmatpush.bf16.msra.mxu0 %v3018
        %3870 = vmatpush.bf16.msra.mxu0 %v3011
        %3871 = vmatpush.bf16.msra.mxu0 %v3004
        %3872 = vmatmul.bf16.gmra.mxu0 %v1328
        %v3873 = vpop.f32.mrf.mxu0
        %v3874 = vadd.f32 %v3861, %v3873
        %v3875 = vpop.f32.mrf.mxu0
        %3876 = vdwg.mxu0
        %3877 = vmatpush.bf16.msra.mxu0 %v3109
        %3878 = vmatpush.bf16.msra.mxu0 %v3102
        %3879 = vmatpush.bf16.msra.mxu0 %v3095
        %3880 = vmatpush.bf16.msra.mxu0 %v3088
        %3881 = vmatpush.bf16.msra.mxu0 %v3081
        %3882 = vmatpush.bf16.msra.mxu0 %v3074
        %3883 = vmatpush.bf16.msra.mxu0 %v3067
        %3884 = vmatpush.bf16.msra.mxu0 %v3060
        %3885 = vmatmul.bf16.gmra.mxu0 %v1329
        %v3886 = vpop.f32.mrf.mxu0
        %v3887 = vadd.f32 %v3874, %v3886
        %v3888 = vpop.f32.mrf.mxu0
        %3889 = vdwg.mxu0
        %3890 = vmatpush.bf16.msra.mxu0 %v3165
        %3891 = vmatpush.bf16.msra.mxu0 %v3158
        %3892 = vmatpush.bf16.msra.mxu0 %v3151
        %3893 = vmatpush.bf16.msra.mxu0 %v3144
        %3894 = vmatpush.bf16.msra.mxu0 %v3137
        %3895 = vmatpush.bf16.msra.mxu0 %v3130
        %3896 = vmatpush.bf16.msra.mxu0 %v3123
        %3897 = vmatpush.bf16.msra.mxu0 %v3116
        %3898 = vmatmul.bf16.gmra.mxu0 %v1330
        %v3899 = vpop.f32.mrf.mxu0
        %v3900 = vadd.f32 %v3887, %v3899
        %v3901 = vpop.f32.mrf.mxu0
        %3902 = vdwg.mxu0
        %3903 = vmatpush.bf16.msra.mxu0 0
        %3904 = vmatpush.bf16.msra.mxu0 0
        %3905 = vmatpush.bf16.msra.mxu0 0
        %3906 = vmatpush.bf16.msra.mxu0 0
        %3907 = vmatpush.bf16.msra.mxu0 0
        %3908 = vmatpush.bf16.msra.mxu0 0
        %3909 = vmatpush.bf16.msra.mxu0 %v3179
        %3910 = vmatpush.bf16.msra.mxu0 %v3172
        %3911 = vmatmul.bf16.gmra.mxu0 %v3550
        %v3912 = vpop.f32.mrf.mxu0
        %v3913 = vadd.f32 %v3900, %v3912
        %v3914 = vpop.f32.mrf.mxu0
        %3915 = vdwg.mxu0
        %3916 = vmatpush.bf16.msra.mxu0 %v2886
        %3917 = vmatpush.bf16.msra.mxu0 %v2879
        %3918 = vmatpush.bf16.msra.mxu0 %v2872
        %3919 = vmatpush.bf16.msra.mxu0 %v2865
        %3920 = vmatpush.bf16.msra.mxu0 %v2858
        %3921 = vmatpush.bf16.msra.mxu0 %v2851
        %3922 = vmatpush.bf16.msra.mxu0 %v2844
        %3923 = vmatpush.bf16.msra.mxu0 %v2837
        %3924 = vmatmul.bf16.gmra.mxu0 %v1325
        %v3925 = vpop.f32.mrf.mxu0
        %v3926 = vadd.f32 %v3538, %v3925
        %v3927 = vpop.f32.mrf.mxu0
        %3928 = vdwg.mxu0
        %3929 = vmatpush.bf16.msra.mxu0 %v2942
        %3930 = vmatpush.bf16.msra.mxu0 %v2935
        %3931 = vmatpush.bf16.msra.mxu0 %v2928
        %3932 = vmatpush.bf16.msra.mxu0 %v2921
        %3933 = vmatpush.bf16.msra.mxu0 %v2914
        %3934 = vmatpush.bf16.msra.mxu0 %v2907
        %3935 = vmatpush.bf16.msra.mxu0 %v2900
        %3936 = vmatpush.bf16.msra.mxu0 %v2893
        %3937 = vmatmul.bf16.gmra.mxu0 %v1326
        %v3938 = vpop.f32.mrf.mxu0
        %v3939 = vadd.f32 %v3926, %v3938
        %v3940 = vpop.f32.mrf.mxu0
        %3941 = vdwg.mxu0
        %3942 = vmatpush.bf16.msra.mxu0 %v2998
        %3943 = vmatpush.bf16.msra.mxu0 %v2991
        %3944 = vmatpush.bf16.msra.mxu0 %v2984
        %3945 = vmatpush.bf16.msra.mxu0 %v2977
        %3946 = vmatpush.bf16.msra.mxu0 %v2970
        %3947 = vmatpush.bf16.msra.mxu0 %v2963
        %3948 = vmatpush.bf16.msra.mxu0 %v2956
        %3949 = vmatpush.bf16.msra.mxu0 %v2949
        %3950 = vmatmul.bf16.gmra.mxu0 %v1327
        %v3951 = vpop.f32.mrf.mxu0
        %v3952 = vadd.f32 %v3939, %v3951
        %v3953 = vpop.f32.mrf.mxu0
        %3954 = vdwg.mxu0
        %3955 = vmatpush.bf16.msra.mxu0 %v3054
        %3956 = vmatpush.bf16.msra.mxu0 %v3047
        %3957 = vmatpush.bf16.msra.mxu0 %v3040
        %3958 = vmatpush.bf16.msra.mxu0 %v3033
        %3959 = vmatpush.bf16.msra.mxu0 %v3026
        %3960 = vmatpush.bf16.msra.mxu0 %v3019
        %3961 = vmatpush.bf16.msra.mxu0 %v3012
        %3962 = vmatpush.bf16.msra.mxu0 %v3005
        %3963 = vmatmul.bf16.gmra.mxu0 %v1328
        %v3964 = vpop.f32.mrf.mxu0
        %v3965 = vadd.f32 %v3952, %v3964
        %v3966 = vpop.f32.mrf.mxu0
        %3967 = vdwg.mxu0
        %3968 = vmatpush.bf16.msra.mxu0 %v3110
        %3969 = vmatpush.bf16.msra.mxu0 %v3103
        %3970 = vmatpush.bf16.msra.mxu0 %v3096
        %3971 = vmatpush.bf16.msra.mxu0 %v3089
        %3972 = vmatpush.bf16.msra.mxu0 %v3082
        %3973 = vmatpush.bf16.msra.mxu0 %v3075
        %3974 = vmatpush.bf16.msra.mxu0 %v3068
        %3975 = vmatpush.bf16.msra.mxu0 %v3061
        %3976 = vmatmul.bf16.gmra.mxu0 %v1329
        %v3977 = vpop.f32.mrf.mxu0
        %v3978 = vadd.f32 %v3965, %v3977
        %v3979 = vpop.f32.mrf.mxu0
        %3980 = vdwg.mxu0
        %3981 = vmatpush.bf16.msra.mxu0 %v3166
        %3982 = vmatpush.bf16.msra.mxu0 %v3159
        %3983 = vmatpush.bf16.msra.mxu0 %v3152
        %3984 = vmatpush.bf16.msra.mxu0 %v3145
        %3985 = vmatpush.bf16.msra.mxu0 %v3138
        %3986 = vmatpush.bf16.msra.mxu0 %v3131
        %3987 = vmatpush.bf16.msra.mxu0 %v3124
        %3988 = vmatpush.bf16.msra.mxu0 %v3117
        %3989 = vmatmul.bf16.gmra.mxu0 %v1330
        %v3990 = vpop.f32.mrf.mxu0
        %v3991 = vadd.f32 %v3978, %v3990
        %v3992 = vpop.f32.mrf.mxu0
        %3993 = vdwg.mxu0
        %3994 = vmatpush.bf16.msra.mxu0 0
        %3995 = vmatpush.bf16.msra.mxu0 0
        %3996 = vmatpush.bf16.msra.mxu0 0
        %3997 = vmatpush.bf16.msra.mxu0 0
        %3998 = vmatpush.bf16.msra.mxu0 0
        %3999 = vmatpush.bf16.msra.mxu0 0
        %4000 = vmatpush.bf16.msra.mxu0 %v3180
        %4001 = vmatpush.bf16.msra.mxu0 %v3173
        %4002 = vmatmul.bf16.gmra.mxu0 %v3550
        %v4003 = vpop.f32.mrf.mxu0
        %v4004 = vadd.f32 %v3991, %v4003
        %v4005 = vpop.f32.mrf.mxu0
        %4006 = vdwg.mxu0
        %4007 = vmatpush.bf16.msra.mxu0 %v2887
        %4008 = vmatpush.bf16.msra.mxu0 %v2880
        %4009 = vmatpush.bf16.msra.mxu0 %v2873
        %4010 = vmatpush.bf16.msra.mxu0 %v2866
        %4011 = vmatpush.bf16.msra.mxu0 %v2859
        %4012 = vmatpush.bf16.msra.mxu0 %v2852
        %4013 = vmatpush.bf16.msra.mxu0 %v2845
        %4014 = vmatpush.bf16.msra.mxu0 %v2838
        %4015 = vmatmul.bf16.gmra.mxu0 %v1325
        %v4016 = vpop.f32.mrf.mxu0
        %v4017 = vadd.f32 %v3539, %v4016
        %v4018 = vpop.f32.mrf.mxu0
        %4019 = vdwg.mxu0
        %4020 = vmatpush.bf16.msra.mxu0 %v2943
        %4021 = vmatpush.bf16.msra.mxu0 %v2936
        %4022 = vmatpush.bf16.msra.mxu0 %v2929
        %4023 = vmatpush.bf16.msra.mxu0 %v2922
        %4024 = vmatpush.bf16.msra.mxu0 %v2915
        %4025 = vmatpush.bf16.msra.mxu0 %v2908
        %4026 = vmatpush.bf16.msra.mxu0 %v2901
        %4027 = vmatpush.bf16.msra.mxu0 %v2894
        %4028 = vmatmul.bf16.gmra.mxu0 %v1326
        %v4029 = vpop.f32.mrf.mxu0
        %v4030 = vadd.f32 %v4017, %v4029
        %v4031 = vpop.f32.mrf.mxu0
        %4032 = vdwg.mxu0
        %4033 = vmatpush.bf16.msra.mxu0 %v2999
        %4034 = vmatpush.bf16.msra.mxu0 %v2992
        %4035 = vmatpush.bf16.msra.mxu0 %v2985
        %4036 = vmatpush.bf16.msra.mxu0 %v2978
        %4037 = vmatpush.bf16.msra.mxu0 %v2971
        %4038 = vmatpush.bf16.msra.mxu0 %v2964
        %4039 = vmatpush.bf16.msra.mxu0 %v2957
        %4040 = vmatpush.bf16.msra.mxu0 %v2950
        %4041 = vmatmul.bf16.gmra.mxu0 %v1327
        %v4042 = vpop.f32.mrf.mxu0
        %v4043 = vadd.f32 %v4030, %v4042
        %v4044 = vpop.f32.mrf.mxu0
        %4045 = vdwg.mxu0
        %4046 = vmatpush.bf16.msra.mxu0 %v3055
        %4047 = vmatpush.bf16.msra.mxu0 %v3048
        %4048 = vmatpush.bf16.msra.mxu0 %v3041
        %4049 = vmatpush.bf16.msra.mxu0 %v3034
        %4050 = vmatpush.bf16.msra.mxu0 %v3027
        %4051 = vmatpush.bf16.msra.mxu0 %v3020
        %4052 = vmatpush.bf16.msra.mxu0 %v3013
        %4053 = vmatpush.bf16.msra.mxu0 %v3006
        %4054 = vmatmul.bf16.gmra.mxu0 %v1328
        %v4055 = vpop.f32.mrf.mxu0
        %v4056 = vadd.f32 %v4043, %v4055
        %v4057 = vpop.f32.mrf.mxu0
        %4058 = vdwg.mxu0
        %4059 = vmatpush.bf16.msra.mxu0 %v3111
        %4060 = vmatpush.bf16.msra.mxu0 %v3104
        %4061 = vmatpush.bf16.msra.mxu0 %v3097
        %4062 = vmatpush.bf16.msra.mxu0 %v3090
        %4063 = vmatpush.bf16.msra.mxu0 %v3083
        %4064 = vmatpush.bf16.msra.mxu0 %v3076
        %4065 = vmatpush.bf16.msra.mxu0 %v3069
        %4066 = vmatpush.bf16.msra.mxu0 %v3062
        %4067 = vmatmul.bf16.gmra.mxu0 %v1329
        %v4068 = vpop.f32.mrf.mxu0
        %v4069 = vadd.f32 %v4056, %v4068
        %v4070 = vpop.f32.mrf.mxu0
        %4071 = vdwg.mxu0
        %4072 = vmatpush.bf16.msra.mxu0 %v3167
        %4073 = vmatpush.bf16.msra.mxu0 %v3160
        %4074 = vmatpush.bf16.msra.mxu0 %v3153
        %4075 = vmatpush.bf16.msra.mxu0 %v3146
        %4076 = vmatpush.bf16.msra.mxu0 %v3139
        %4077 = vmatpush.bf16.msra.mxu0 %v3132
        %4078 = vmatpush.bf16.msra.mxu0 %v3125
        %4079 = vmatpush.bf16.msra.mxu0 %v3118
        %4080 = vmatmul.bf16.gmra.mxu0 %v1330
        %v4081 = vpop.f32.mrf.mxu0
        %v4082 = vadd.f32 %v4069, %v4081
        %v4083 = vpop.f32.mrf.mxu0
        %4084 = vdwg.mxu0
        %4085 = vmatpush.bf16.msra.mxu0 0
        %4086 = vmatpush.bf16.msra.mxu0 0
        %4087 = vmatpush.bf16.msra.mxu0 0
        %4088 = vmatpush.bf16.msra.mxu0 0
        %4089 = vmatpush.bf16.msra.mxu0 0
        %4090 = vmatpush.bf16.msra.mxu0 0
        %4091 = vmatpush.bf16.msra.mxu0 %v3181
        %4092 = vmatpush.bf16.msra.mxu0 %v3174
        %4093 = vmatmul.bf16.gmra.mxu0 %v3550
        %v4094 = vpop.f32.mrf.mxu0
        %v4095 = vadd.f32 %v4082, %v4094
        %v4096 = vpop.f32.mrf.mxu0
        %4097 = vdwg.mxu0
        %4098 = vmatpush.bf16.msra.mxu0 %v2888
        %4099 = vmatpush.bf16.msra.mxu0 %v2881
        %4100 = vmatpush.bf16.msra.mxu0 %v2874
        %4101 = vmatpush.bf16.msra.mxu0 %v2867
        %4102 = vmatpush.bf16.msra.mxu0 %v2860
        %4103 = vmatpush.bf16.msra.mxu0 %v2853
        %4104 = vmatpush.bf16.msra.mxu0 %v2846
        %4105 = vmatpush.bf16.msra.mxu0 %v2839
        %4106 = vmatmul.bf16.gmra.mxu0 %v1325
        %v4107 = vpop.f32.mrf.mxu0
        %v4108 = vadd.f32 %v3540, %v4107
        %v4109 = vpop.f32.mrf.mxu0
        %4110 = vdwg.mxu0
        %4111 = vmatpush.bf16.msra.mxu0 %v2944
        %4112 = vmatpush.bf16.msra.mxu0 %v2937
        %4113 = vmatpush.bf16.msra.mxu0 %v2930
        %4114 = vmatpush.bf16.msra.mxu0 %v2923
        %4115 = vmatpush.bf16.msra.mxu0 %v2916
        %4116 = vmatpush.bf16.msra.mxu0 %v2909
        %4117 = vmatpush.bf16.msra.mxu0 %v2902
        %4118 = vmatpush.bf16.msra.mxu0 %v2895
        %4119 = vmatmul.bf16.gmra.mxu0 %v1326
        %v4120 = vpop.f32.mrf.mxu0
        %v4121 = vadd.f32 %v4108, %v4120
        %v4122 = vpop.f32.mrf.mxu0
        %4123 = vdwg.mxu0
        %4124 = vmatpush.bf16.msra.mxu0 %v3000
        %4125 = vmatpush.bf16.msra.mxu0 %v2993
        %4126 = vmatpush.bf16.msra.mxu0 %v2986
        %4127 = vmatpush.bf16.msra.mxu0 %v2979
        %4128 = vmatpush.bf16.msra.mxu0 %v2972
        %4129 = vmatpush.bf16.msra.mxu0 %v2965
        %4130 = vmatpush.bf16.msra.mxu0 %v2958
        %4131 = vmatpush.bf16.msra.mxu0 %v2951
        %4132 = vmatmul.bf16.gmra.mxu0 %v1327
        %v4133 = vpop.f32.mrf.mxu0
        %v4134 = vadd.f32 %v4121, %v4133
        %v4135 = vpop.f32.mrf.mxu0
        %4136 = vdwg.mxu0
        %4137 = vmatpush.bf16.msra.mxu0 %v3056
        %4138 = vmatpush.bf16.msra.mxu0 %v3049
        %4139 = vmatpush.bf16.msra.mxu0 %v3042
        %4140 = vmatpush.bf16.msra.mxu0 %v3035
        %4141 = vmatpush.bf16.msra.mxu0 %v3028
        %4142 = vmatpush.bf16.msra.mxu0 %v3021
        %4143 = vmatpush.bf16.msra.mxu0 %v3014
        %4144 = vmatpush.bf16.msra.mxu0 %v3007
        %4145 = vmatmul.bf16.gmra.mxu0 %v1328
        %v4146 = vpop.f32.mrf.mxu0
        %v4147 = vadd.f32 %v4134, %v4146
        %v4148 = vpop.f32.mrf.mxu0
        %4149 = vdwg.mxu0
        %4150 = vmatpush.bf16.msra.mxu0 %v3112
        %4151 = vmatpush.bf16.msra.mxu0 %v3105
        %4152 = vmatpush.bf16.msra.mxu0 %v3098
        %4153 = vmatpush.bf16.msra.mxu0 %v3091
        %4154 = vmatpush.bf16.msra.mxu0 %v3084
        %4155 = vmatpush.bf16.msra.mxu0 %v3077
        %4156 = vmatpush.bf16.msra.mxu0 %v3070
        %4157 = vmatpush.bf16.msra.mxu0 %v3063
        %4158 = vmatmul.bf16.gmra.mxu0 %v1329
        %v4159 = vpop.f32.mrf.mxu0
        %v4160 = vadd.f32 %v4147, %v4159
        %v4161 = vpop.f32.mrf.mxu0
        %4162 = vdwg.mxu0
        %4163 = vmatpush.bf16.msra.mxu0 %v3168
        %4164 = vmatpush.bf16.msra.mxu0 %v3161
        %4165 = vmatpush.bf16.msra.mxu0 %v3154
        %4166 = vmatpush.bf16.msra.mxu0 %v3147
        %4167 = vmatpush.bf16.msra.mxu0 %v3140
        %4168 = vmatpush.bf16.msra.mxu0 %v3133
        %4169 = vmatpush.bf16.msra.mxu0 %v3126
        %4170 = vmatpush.bf16.msra.mxu0 %v3119
        %4171 = vmatmul.bf16.gmra.mxu0 %v1330
        %v4172 = vpop.f32.mrf.mxu0
        %v4173 = vadd.f32 %v4160, %v4172
        %v4174 = vpop.f32.mrf.mxu0
        %4175 = vdwg.mxu0
        %4176 = vmatpush.bf16.msra.mxu0 0
        %4177 = vmatpush.bf16.msra.mxu0 0
        %4178 = vmatpush.bf16.msra.mxu0 0
        %4179 = vmatpush.bf16.msra.mxu0 0
        %4180 = vmatpush.bf16.msra.mxu0 0
        %4181 = vmatpush.bf16.msra.mxu0 0
        %4182 = vmatpush.bf16.msra.mxu0 %v3182
        %4183 = vmatpush.bf16.msra.mxu0 %v3175
        %4184 = vmatmul.bf16.gmra.mxu0 %v3550
        %v4185 = vpop.f32.mrf.mxu0
        %v4186 = vadd.f32 %v4173, %v4185
        %v4187 = vpop.f32.mrf.mxu0
        %4188 = vdwg.mxu0
        %v4189 = vmax.f32 %v3640, 0.0
        %v4190 = vmax.f32 %v3731, 0.0
        %v4191 = vmax.f32 %v3822, 0.0
        %v4192 = vmax.f32 %v3913, 0.0
        %v4193 = vmax.f32 %v4004, 0.0
        %v4194 = vmax.f32 %v4095, 0.0
        %v4195 = vmax.f32 %v4186, 0.0
        %v4196 = vpack.c.bf16 %v4189, %v4189
        %v4197 = vpack.c.bf16 %v4190, %v4190
        %v4198 = vpack.c.bf16 %v4191, %v4191
        %v4199 = vpack.c.bf16 %v4192, %v4192
        %v4200 = vpack.c.bf16 %v4193, %v4193
        %v4201 = vpack.c.bf16 %v4194, %v4194
        %v4202 = vpack.c.bf16 %v4195, %v4195
        %v4203 = vld [vmem:[%s7] sm:$0xf]
        %v4204 = vld [vmem:[%s7 + $0x4] sm:$0xf]
        %v4205 = vld [vmem:[%s7 + $0x8] sm:$0xf]
        %v4206 = vld [vmem:[%s7 + $0xc] sm:$0xf]
        %v4207 = vld [vmem:[%s7 + $0x10] sm:$0xf]
        %v4208 = vld [vmem:[%s7 + $0x14] sm:$0xf]
        %v4209 = vld [vmem:[%s7 + $0x18] sm:$0xf]
        %v4210 = vld [vmem:[%s7 + $0x1c] sm:$0xf]
        %v4211 = vld [vmem:[%s7 + $0x20] sm:$0xf]
        %v4212 = vld [vmem:[%s7 + $0x24] sm:$0xf]
        %v4213 = vld [vmem:[%s7 + $0x28] sm:$0xf]
        %v4214 = vld [vmem:[%s7 + $0x2c] sm:$0xf]
        %v4215 = vld [vmem:[%s7 + $0x30] sm:$0xf]
        %v4216 = vld [vmem:[%s7 + $0x34] sm:$0xf]
        %v4217 = vld [vmem:[%s7 + $0x38] sm:$0xf]
        %v4218 = vld [vmem:[%s7 + $0x3c] sm:$0xf]
        %v4219 = vld [vmem:[%s7 + $0x40] sm:$0xf]
        %v4220 = vld [vmem:[%s7 + $0x44] sm:$0xf]
        %v4221 = vld [vmem:[%s7 + $0x48] sm:$0xf]
        %v4222 = vld [vmem:[%s7 + $0x4c] sm:$0xf]
        %v4223 = vld [vmem:[%s7 + $0x50] sm:$0xf]
        %v4224 = vld [vmem:[%s7 + $0x54] sm:$0xf]
        %v4225 = vld [vmem:[%s7 + $0x58] sm:$0xf]
        %v4226 = vld [vmem:[%s7 + $0x5c] sm:$0xf]
        %v4227 = vld [vmem:[%s7 + $0x60] sm:$0xf]
        %v4228 = vld [vmem:[%s7 + $0x64] sm:$0xf]
        %v4229 = vld [vmem:[%s7 + $0x68] sm:$0xf]
        %v4230 = vld [vmem:[%s7 + $0x6c] sm:$0xf]
        %v4231 = vld [vmem:[%s7 + $0x70] sm:$0xf]
        %v4232 = vld [vmem:[%s7 + $0x74] sm:$0xf]
        %v4233 = vld [vmem:[%s7 + $0x78] sm:$0xf]
        %v4234 = vld [vmem:[%s7 + $0x7c] sm:$0xf]
        %v4235 = vld [vmem:[%s7 + $0x80] sm:$0xf]
        %v4236 = vld [vmem:[%s7 + $0x84] sm:$0xf]
        %v4237 = vld [vmem:[%s7 + $0x88] sm:$0xf]
        %v4238 = vld [vmem:[%s7 + $0x8c] sm:$0xf]
        %v4239 = vld [vmem:[%s7 + $0x90] sm:$0xf]
        %v4240 = vld [vmem:[%s7 + $0x94] sm:$0xf]
        %v4241 = vld [vmem:[%s7 + $0x98] sm:$0xf]
        %v4242 = vld [vmem:[%s7 + $0x9c] sm:$0xf]
        %v4243 = vld [vmem:[%s7 + $0xa0] sm:$0xf]
        %v4244 = vld [vmem:[%s7 + $0xa4] sm:$0xf]
        %v4245 = vld [vmem:[%s7 + $0xa8] sm:$0xf]
        %v4246 = vld [vmem:[%s7 + $0xac] sm:$0xf]
        %v4247 = vld [vmem:[%s7 + $0xb0] sm:$0xf]
        %v4248 = vld [vmem:[%s7 + $0xb4] sm:$0xf]
        %v4249 = vld [vmem:[%s7 + $0xb8] sm:$0xf]
        %v4250 = vld [vmem:[%s7 + $0xbc] sm:$0xf]
        %v4251 = vld [vmem:[%s7 + $0xc0] sm:$0xf]
        %v4252 = vld [vmem:[%s7 + $0xc4] sm:$0xf]
        %v4253 = vld [vmem:[%s7 + $0xc8] sm:$0xf]
        %v4254 = vld [vmem:[%s7 + $0xcc] sm:$0xf]
        %v4255 = vld [vmem:[%s7 + $0xd0] sm:$0xf]
        %v4256 = vld [vmem:[%s7 + $0xd4] sm:$0xf]
        %v4257 = vld [vmem:[%s7 + $0xd8] sm:$0xf]
        %v4258 = vld [vmem:[%s7 + $0xdc] sm:$0xf]
        %v4259 = vld [vmem:[%s7 + $0xe0] sm:$0xf]
        %v4260 = vld [vmem:[%s7 + $0xe4] sm:$0xf]
        %v4261 = vld [vmem:[%s7 + $0xe8] sm:$0xf]
        %v4262 = vld [vmem:[%s7 + $0xec] sm:$0xf]
        %v4263 = vld [vmem:[%s7 + $0xf0] sm:$0xf]
        %v4264 = vld [vmem:[%s7 + $0xf4] sm:$0xf]
        %v4265 = vld [vmem:[%s7 + $0xf8] sm:$0xf]
        %v4266 = vld [vmem:[%s7 + $0xfc] sm:$0xf]
        %v4267 = vld [vmem:[%s7 + $0x100] sm:$0xf]
        %v4268 = vld [vmem:[%s7 + $0x104] sm:$0xf]
        %v4269 = vld [vmem:[%s7 + $0x108] sm:$0xf]
        %v4270 = vld [vmem:[%s7 + $0x10c] sm:$0xf]
        %v4271 = vld [vmem:[%s7 + $0x110] sm:$0xf]
        %v4272 = vld [vmem:[%s7 + $0x114] sm:$0xf]
        %v4273 = vld [vmem:[%s7 + $0x118] sm:$0xf]
        %v4274 = vld [vmem:[%s7 + $0x11c] sm:$0xf]
        %v4275 = vld [vmem:[%s7 + $0x120] sm:$0xf]
        %v4276 = vld [vmem:[%s7 + $0x124] sm:$0xf]
        %v4277 = vld [vmem:[%s7 + $0x128] sm:$0xf]
        %v4278 = vld [vmem:[%s7 + $0x12c] sm:$0xf]
        %v4279 = vld [vmem:[%s7 + $0x130] sm:$0xf]
        %v4280 = vld [vmem:[%s7 + $0x134] sm:$0xf]
        %v4281 = vld [vmem:[%s7 + $0x138] sm:$0xf]
        %v4282 = vld [vmem:[%s7 + $0x13c] sm:$0xf]
        %v4283 = vld [vmem:[%s7 + $0x140] sm:$0xf]
        %v4284 = vld [vmem:[%s7 + $0x144] sm:$0xf]
        %v4285 = vld [vmem:[%s7 + $0x148] sm:$0xf]
        %v4286 = vld [vmem:[%s7 + $0x14c] sm:$0xf]
        %v4287 = vld [vmem:[%s7 + $0x150] sm:$0xf]
        %v4288 = vld [vmem:[%s7 + $0x154] sm:$0xf]
        %v4289 = vld [vmem:[%s7 + $0x158] sm:$0xf]
        %v4290 = vld [vmem:[%s7 + $0x15c] sm:$0xf]
        %v4291 = vld [vmem:[%s7 + $0x160] sm:$0xf]
        %v4292 = vld [vmem:[%s7 + $0x164] sm:$0xf]
        %v4293 = vld [vmem:[%s7 + $0x168] sm:$0xf]
        %v4294 = vld [vmem:[%s7 + $0x16c] sm:$0xf]
        %v4295 = vld [vmem:[%s7 + $0x170] sm:$0xf]
        %v4296 = vld [vmem:[%s7 + $0x174] sm:$0xf]
        %v4297 = vld [vmem:[%s7 + $0x178] sm:$0xf]
        %v4298 = vld [vmem:[%s7 + $0x17c] sm:$0xf]
        %v4299 = vld [vmem:[%s7 + $0x180] sm:$0xf]
        %v4300 = vld [vmem:[%s7 + $0x184] sm:$0xf]
        %v4301 = vld [vmem:[%s7 + $0x188] sm:$0xf]
        %v4302 = vld [vmem:[%s7 + $0x18c] sm:$0xf]
        %v4303 = vld [vmem:[%s8] sm:$0x1]
        %v4404 = vunpack.c.l.b16 %v4203
        %v4405 = vunpack.c.l.b16 %v4204
        %v4406 = vunpack.c.l.b16 %v4205
        %v4407 = vunpack.c.l.b16 %v4206
        %v4408 = vunpack.c.l.b16 %v4207
        %v4409 = vunpack.c.l.b16 %v4208
        %v4410 = vunpack.c.l.b16 %v4209
        %v4411 = vunpack.c.l.b16 %v4210
        %v4412 = vunpack.c.l.b16 %v4211
        %v4413 = vunpack.c.l.b16 %v4212
        %v4414 = vunpack.c.l.b16 %v4213
        %v4415 = vunpack.c.l.b16 %v4214
        %v4416 = vunpack.c.l.b16 %v4215
        %v4417 = vunpack.c.l.b16 %v4216
        %v4418 = vunpack.c.l.b16 %v4217
        %v4419 = vunpack.c.l.b16 %v4218
        %v4420 = vunpack.c.l.b16 %v4219
        %v4421 = vunpack.c.l.b16 %v4220
        %v4422 = vunpack.c.l.b16 %v4221
        %v4423 = vunpack.c.l.b16 %v4222
        %v4424 = vunpack.c.l.b16 %v4223
        %v4425 = vunpack.c.l.b16 %v4224
        %v4426 = vunpack.c.l.b16 %v4225
        %v4427 = vunpack.c.l.b16 %v4226
        %v4428 = vunpack.c.l.b16 %v4227
        %v4429 = vunpack.c.l.b16 %v4228
        %v4430 = vunpack.c.l.b16 %v4229
        %v4431 = vunpack.c.l.b16 %v4230
        %v4432 = vunpack.c.l.b16 %v4231
        %v4433 = vunpack.c.l.b16 %v4232
        %v4434 = vunpack.c.l.b16 %v4233
        %v4435 = vunpack.c.l.b16 %v4234
        %v4436 = vunpack.c.l.b16 %v4235
        %v4437 = vunpack.c.l.b16 %v4236
        %v4438 = vunpack.c.l.b16 %v4237
        %v4439 = vunpack.c.l.b16 %v4238
        %v4440 = vunpack.c.l.b16 %v4239
        %v4441 = vunpack.c.l.b16 %v4240
        %v4442 = vunpack.c.l.b16 %v4241
        %v4443 = vunpack.c.l.b16 %v4242
        %v4444 = vunpack.c.l.b16 %v4243
        %v4445 = vunpack.c.l.b16 %v4244
        %v4446 = vunpack.c.l.b16 %v4245
        %v4447 = vunpack.c.l.b16 %v4246
        %v4448 = vunpack.c.l.b16 %v4247
        %v4449 = vunpack.c.l.b16 %v4248
        %v4450 = vunpack.c.l.b16 %v4249
        %v4451 = vunpack.c.l.b16 %v4250
        %v4452 = vunpack.c.l.b16 %v4251
        %v4453 = vunpack.c.l.b16 %v4252
        %v4454 = vunpack.c.l.b16 %v4253
        %v4455 = vunpack.c.l.b16 %v4254
        %v4456 = vunpack.c.l.b16 %v4255
        %v4457 = vunpack.c.l.b16 %v4256
        %v4458 = vunpack.c.l.b16 %v4257
        %v4459 = vunpack.c.l.b16 %v4258
        %v4460 = vunpack.c.l.b16 %v4259
        %v4461 = vunpack.c.l.b16 %v4260
        %v4462 = vunpack.c.l.b16 %v4261
        %v4463 = vunpack.c.l.b16 %v4262
        %v4464 = vunpack.c.l.b16 %v4263
        %v4465 = vunpack.c.l.b16 %v4264
        %v4466 = vunpack.c.l.b16 %v4265
        %v4467 = vunpack.c.l.b16 %v4266
        %v4468 = vunpack.c.l.b16 %v4267
        %v4469 = vunpack.c.l.b16 %v4268
        %v4470 = vunpack.c.l.b16 %v4269
        %v4471 = vunpack.c.l.b16 %v4270
        %v4472 = vunpack.c.l.b16 %v4271
        %v4473 = vunpack.c.l.b16 %v4272
        %v4474 = vunpack.c.l.b16 %v4273
        %v4475 = vunpack.c.l.b16 %v4274
        %v4476 = vunpack.c.l.b16 %v4275
        %v4477 = vunpack.c.l.b16 %v4276
        %v4478 = vunpack.c.l.b16 %v4277
        %v4479 = vunpack.c.l.b16 %v4278
        %v4480 = vunpack.c.l.b16 %v4279
        %v4481 = vunpack.c.l.b16 %v4280
        %v4482 = vunpack.c.l.b16 %v4281
        %v4483 = vunpack.c.l.b16 %v4282
        %v4484 = vunpack.c.l.b16 %v4283
        %v4485 = vunpack.c.l.b16 %v4284
        %v4486 = vunpack.c.l.b16 %v4285
        %v4487 = vunpack.c.l.b16 %v4286
        %v4488 = vunpack.c.l.b16 %v4287
        %v4489 = vunpack.c.l.b16 %v4288
        %v4490 = vunpack.c.l.b16 %v4289
        %v4491 = vunpack.c.l.b16 %v4290
        %v4492 = vunpack.c.l.b16 %v4291
        %v4493 = vunpack.c.l.b16 %v4292
        %v4494 = vunpack.c.l.b16 %v4293
        %v4495 = vunpack.c.l.b16 %v4294
        %v4496 = vunpack.c.l.b16 %v4295
        %v4497 = vunpack.c.l.b16 %v4296
        %v4498 = vunpack.c.l.b16 %v4297
        %v4499 = vunpack.c.l.b16 %v4298
        %v4500 = vunpack.c.l.b16 %v4299
        %v4501 = vunpack.c.l.b16 %v4300
        %v4502 = vunpack.c.l.b16 %v4301
        %v4503 = vunpack.c.l.b16 %v4302
        %v4504 = vpack.c.b16 %v4405, %v4404
        %v4505 = vpack.c.b16 %v4407, %v4406
        %v4506 = vpack.c.b16 %v4409, %v4408
        %v4507 = vpack.c.b16 %v4411, %v4410
        %v4508 = vpack.c.b16 %v4413, %v4412
        %v4509 = vpack.c.b16 %v4415, %v4414
        %v4510 = vpack.c.b16 %v4417, %v4416
        %v4511 = vpack.c.b16 %v4419, %v4418
        %v4512 = vpack.c.b16 %v4421, %v4420
        %v4513 = vpack.c.b16 %v4423, %v4422
        %v4514 = vpack.c.b16 %v4425, %v4424
        %v4515 = vpack.c.b16 %v4427, %v4426
        %v4516 = vpack.c.b16 %v4429, %v4428
        %v4517 = vpack.c.b16 %v4431, %v4430
        %v4518 = vpack.c.b16 %v4433, %v4432
        %v4519 = vpack.c.b16 %v4435, %v4434
        %v4520 = vpack.c.b16 %v4437, %v4436
        %v4521 = vpack.c.b16 %v4439, %v4438
        %v4522 = vpack.c.b16 %v4441, %v4440
        %v4523 = vpack.c.b16 %v4443, %v4442
        %v4524 = vpack.c.b16 %v4445, %v4444
        %v4525 = vpack.c.b16 %v4447, %v4446
        %v4526 = vpack.c.b16 %v4449, %v4448
        %v4527 = vpack.c.b16 %v4451, %v4450
        %v4528 = vpack.c.b16 %v4453, %v4452
        %v4529 = vpack.c.b16 %v4455, %v4454
        %v4530 = vpack.c.b16 %v4457, %v4456
        %v4531 = vpack.c.b16 %v4459, %v4458
        %v4532 = vpack.c.b16 %v4461, %v4460
        %v4533 = vpack.c.b16 %v4463, %v4462
        %v4534 = vpack.c.b16 %v4465, %v4464
        %v4535 = vpack.c.b16 %v4467, %v4466
        %v4536 = vpack.c.b16 %v4469, %v4468
        %v4537 = vpack.c.b16 %v4471, %v4470
        %v4538 = vpack.c.b16 %v4473, %v4472
        %v4539 = vpack.c.b16 %v4475, %v4474
        %v4540 = vpack.c.b16 %v4477, %v4476
        %v4541 = vpack.c.b16 %v4479, %v4478
        %v4542 = vpack.c.b16 %v4481, %v4480
        %v4543 = vpack.c.b16 %v4483, %v4482
        %v4544 = vpack.c.b16 %v4485, %v4484
        %v4545 = vpack.c.b16 %v4487, %v4486
        %v4546 = vpack.c.b16 %v4489, %v4488
        %v4547 = vpack.c.b16 %v4491, %v4490
        %v4548 = vpack.c.b16 %v4493, %v4492
        %v4549 = vpack.c.b16 %v4495, %v4494
        %v4550 = vpack.c.b16 %v4497, %v4496
        %v4551 = vpack.c.b16 %v4499, %v4498
        %v4552 = vpack.c.b16 %v4501, %v4500
        %v4553 = vpack.c.b16 %v4503, %v4502
        %v4605 = vsel %vm3548, %v4202, 0
        %4607 = vmatpush.bf16.msra.mxu0 %v4511
        %4608 = vmatpush.bf16.msra.mxu0 %v4510
        %4609 = vmatpush.bf16.msra.mxu0 %v4509
        %4610 = vmatpush.bf16.msra.mxu0 %v4508
        %4611 = vmatpush.bf16.msra.mxu0 %v4507
        %4612 = vmatpush.bf16.msra.mxu0 %v4506
        %4613 = vmatpush.bf16.msra.mxu0 %v4505
        %4614 = vmatpush.bf16.msra.mxu0 %v4504
        %4615 = vmatmul.bf16.gmra.mxu0 %v4196
        %v4616 = vpop.f32.mrf.mxu0
        %v4617 = vadd.f32 %v4303, %v4616
        %v4618 = vpop.f32.mrf.mxu0
        %4619 = vdwg.mxu0
        %4620 = vmatpush.bf16.msra.mxu0 %v4519
        %4621 = vmatpush.bf16.msra.mxu0 %v4518
        %4622 = vmatpush.bf16.msra.mxu0 %v4517
        %4623 = vmatpush.bf16.msra.mxu0 %v4516
        %4624 = vmatpush.bf16.msra.mxu0 %v4515
        %4625 = vmatpush.bf16.msra.mxu0 %v4514
        %4626 = vmatpush.bf16.msra.mxu0 %v4513
        %4627 = vmatpush.bf16.msra.mxu0 %v4512
        %4628 = vmatmul.bf16.gmra.mxu0 %v4197
        %v4629 = vpop.f32.mrf.mxu0
        %v4630 = vadd.f32 %v4617, %v4629
        %v4631 = vpop.f32.mrf.mxu0
        %4632 = vdwg.mxu0
        %4633 = vmatpush.bf16.msra.mxu0 %v4527
        %4634 = vmatpush.bf16.msra.mxu0 %v4526
        %4635 = vmatpush.bf16.msra.mxu0 %v4525
        %4636 = vmatpush.bf16.msra.mxu0 %v4524
        %4637 = vmatpush.bf16.msra.mxu0 %v4523
        %4638 = vmatpush.bf16.msra.mxu0 %v4522
        %4639 = vmatpush.bf16.msra.mxu0 %v4521
        %4640 = vmatpush.bf16.msra.mxu0 %v4520
        %4641 = vmatmul.bf16.gmra.mxu0 %v4198
        %v4642 = vpop.f32.mrf.mxu0
        %v4643 = vadd.f32 %v4630, %v4642
        %v4644 = vpop.f32.mrf.mxu0
        %4645 = vdwg.mxu0
        %4646 = vmatpush.bf16.msra.mxu0 %v4535
        %4647 = vmatpush.bf16.msra.mxu0 %v4534
        %4648 = vmatpush.bf16.msra.mxu0 %v4533
        %4649 = vmatpush.bf16.msra.mxu0 %v4532
        %4650 = vmatpush.bf16.msra.mxu0 %v4531
        %4651 = vmatpush.bf16.msra.mxu0 %v4530
        %4652 = vmatpush.bf16.msra.mxu0 %v4529
        %4653 = vmatpush.bf16.msra.mxu0 %v4528
        %4654 = vmatmul.bf16.gmra.mxu0 %v4199
        %v4655 = vpop.f32.mrf.mxu0
        %v4656 = vadd.f32 %v4643, %v4655
        %v4657 = vpop.f32.mrf.mxu0
        %4658 = vdwg.mxu0
        %4659 = vmatpush.bf16.msra.mxu0 %v4543
        %4660 = vmatpush.bf16.msra.mxu0 %v4542
        %4661 = vmatpush.bf16.msra.mxu0 %v4541
        %4662 = vmatpush.bf16.msra.mxu0 %v4540
        %4663 = vmatpush.bf16.msra.mxu0 %v4539
        %4664 = vmatpush.bf16.msra.mxu0 %v4538
        %4665 = vmatpush.bf16.msra.mxu0 %v4537
        %4666 = vmatpush.bf16.msra.mxu0 %v4536
        %4667 = vmatmul.bf16.gmra.mxu0 %v4200
        %v4668 = vpop.f32.mrf.mxu0
        %v4669 = vadd.f32 %v4656, %v4668
        %v4670 = vpop.f32.mrf.mxu0
        %4671 = vdwg.mxu0
        %4672 = vmatpush.bf16.msra.mxu0 %v4551
        %4673 = vmatpush.bf16.msra.mxu0 %v4550
        %4674 = vmatpush.bf16.msra.mxu0 %v4549
        %4675 = vmatpush.bf16.msra.mxu0 %v4548
        %4676 = vmatpush.bf16.msra.mxu0 %v4547
        %4677 = vmatpush.bf16.msra.mxu0 %v4546
        %4678 = vmatpush.bf16.msra.mxu0 %v4545
        %4679 = vmatpush.bf16.msra.mxu0 %v4544
        %4680 = vmatmul.bf16.gmra.mxu0 %v4201
        %v4681 = vpop.f32.mrf.mxu0
        %v4682 = vadd.f32 %v4669, %v4681
        %v4683 = vpop.f32.mrf.mxu0
        %4684 = vdwg.mxu0
        %4685 = vmatpush.bf16.msra.mxu0 0
        %4686 = vmatpush.bf16.msra.mxu0 0
        %4687 = vmatpush.bf16.msra.mxu0 0
        %4688 = vmatpush.bf16.msra.mxu0 0
        %4689 = vmatpush.bf16.msra.mxu0 0
        %4690 = vmatpush.bf16.msra.mxu0 0
        %4691 = vmatpush.bf16.msra.mxu0 %v4553
        %4692 = vmatpush.bf16.msra.mxu0 %v4552
        %4693 = vmatmul.bf16.gmra.mxu0 %v4605
        %v4694 = vpop.f32.mrf.mxu0
        %v4695 = vadd.f32 %v4682, %v4694
        %v4696 = vpop.f32.mrf.mxu0
        %4697 = vdwg.mxu0
        %4698 = vst [vmem:[%s356] sm:$0x1] %v4695
      $region64: #{cnniqanet_forward.1} parent=55 // pred_fallthru
        _
      %p4699 = scmp.lt.s32.totalorder %s24, 1
      %s4700 = scalar_select %p4699, %s24, 1
      %s4701 = scalar_lea.vmem %s9, %s4700
      // Predicated region
      $region65: #{cnniqanet_forward.1} parent=55 // pred_check
        %p4702 = pneg %p246
      $region66: #{cnniqanet_forward.1} parent=55 // pred_check_branch
        %4704 = sbr.rel (%p4702) target = $region68
      $region67: #{cnniqanet_forward.1} parent=55 // pred_region
        _
      $region68: #{cnniqanet_forward.1} parent=55 // pred_fallthru
        _
    $region56: #{cnniqanet_forward.1} parent=5 // pred_fallthru
      _
    %p4705 = scmp.le.s32.totalorder 2, %s15
    // Predicated region
    $region69: #{cnniqanet_forward.1} parent=5 // pred_check
      %p4706 = pneg %p4705
    $region70: #{cnniqanet_forward.1} parent=5 // pred_check_branch
      %4708 = sbr.rel (%p4706) target = $region72
    $region71: #{cnniqanet_forward.1} parent=5 // pred_region
      %s4709 = ssub.s32 %s15, 2
      // Predicated region
      $region73: #{cnniqanet_forward.1} parent=71 // pred_check
        %p4710 = pneg %p252
      $region74: #{cnniqanet_forward.1} parent=71 // pred_check_branch
        %4712 = sbr.rel (%p4710) target = $region76
      $region75: #{cnniqanet_forward.1} parent=71 // pred_region
        %p4713 = scmp.lt.s32.totalorder %s26, 1
        %s4714 = scalar_select %p4713, %s26, 1
        %s4715 = scalar_lea.vmem %s9, %s4714
      $region76: #{cnniqanet_forward.1} parent=71 // pred_fallthru
        _
    $region72: #{cnniqanet_forward.1} parent=5 // pred_fallthru
      _
  $region6: #{cnniqanet_forward.1} parent=0 // loop_footer
    %s19 = sadd.s32 1, %s15
  $region7: #{cnniqanet_forward.1} parent=0 // loop_footer_branch
    %14 = sbr.rel target = $region3
  $region8: #{cnniqanet_forward.1} parent=0 // loop_exit
    _

</llo_original>
